<compile_context>
chip_gen: v6e
topology: v6e:2x2x1
jax: 0.10.0
libtpu: 0.0.40
codegen_flags: <defaults>
</compile_context>

<pallas_src>
import jax
import jax.numpy as jnp
from jax.experimental import pallas as pl
from jax.experimental.pallas import tpu as pltpu

EPS = 1e-5  # nn.LayerNorm default


# ----------------------------------------------------------------------------
# small helpers
# ----------------------------------------------------------------------------
def _cdiv(a, b):
    return -(-a // b)


def _round_up(a, m):
    return _cdiv(a, m) * m


def _device_info():
    kind = ""
    try:
        kind = jax.devices()[0].device_kind.lower()
    except Exception:
        pass
    is_v7 = "v7" in kind
    bf16_elem = is_v7 or ("v6" in kind)      # bf16 VPU/EUP only on v6e / v7x
    if is_v7:
        vmem_cap = 56 << 20                  # 64 MiB physical per TensorCore
    elif ("v5" in kind) or ("v6" in kind):
        vmem_cap = 100 << 20                 # 128 MiB physical
    else:
        vmem_cap = 64 << 20                  # conservative default
    return is_v7, bf16_elem, vmem_cap


# ----------------------------------------------------------------------------
# parameter folding (call once at load time, NOT per step)
# ----------------------------------------------------------------------------
def fold_params(gamma, beta, w1, b1, w2, b2, *, matmul_dtype=jnp.bfloat16):
    """Fold the LayerNorm affine into the first linear and pre-cast weights.

    w1' = gamma[:,None] * w1 (folded in f32, then cast to bf16)
    b1' = beta @ w1 + b1
    Call once outside the hot path so the kernel never re-reads f32 weights.
    """
    gamma_f = gamma.astype(jnp.float32)
    beta_f = beta.astype(jnp.float32)
    w1_f = w1.astype(jnp.float32)
    w1c = (gamma_f[:, None] * w1_f).astype(matmul_dtype)
    b1f = (beta_f @ w1_f + b1.astype(jnp.float32)).reshape(1, -1)
    w2c = w2.astype(matmul_dtype)
    b2f = b2.astype(jnp.float32).reshape(1, -1)
    return w1c, b1f, w2c, b2f


# ----------------------------------------------------------------------------
# kernel
# ----------------------------------------------------------------------------
def _make_kernel(d, eps, elem_dtype, gelu_approximate):
    inv_d = 1.0 / d

    def kernel(x_ref, w1_ref, b1_ref, w2_ref, b2_ref, o_ref, xn_scr, acc_scr):
        j = pl.program_id(1)   # hidden-dimension block index

        @pl.when(j == 0)
        def _():
            # One-pass LayerNorm statistics (biased variance, like torch).
            x = x_ref[...].astype(jnp.float32)
            s1 = jnp.sum(x, axis=-1, keepdims=True)
            s2 = jnp.sum(x * x, axis=-1, keepdims=True)
            mean = s1 * inv_d
            var = jnp.maximum(s2 * inv_d - mean * mean, 0.0)
            xn = (x - mean) * jax.lax.rsqrt(var + eps)
            # gamma/beta already folded into w1/b1 (see fold_params).
            xn_scr[...] = xn.astype(xn_scr.dtype)
            acc_scr[...] = jnp.zeros_like(acc_scr)

        # Linear(D,Hb) -> GELU -> Linear(Hb,D), accumulated over H blocks.
        # bf16 MXU inputs, f32 accumulation; hidden elementwise math in
        # elem_dtype (bf16 on v6e/v7x, f32 on v5-class chips).
        h = jnp.dot(xn_scr[...], w1_ref[...], preferred_element_type=jnp.float32)
        h = h.astype(elem_dtype) + b1_ref[...].astype(elem_dtype)
        h = jax.nn.gelu(h, approximate=gelu_approximate)
        acc_scr[...] += jnp.dot(h.astype(w2_ref.dtype), w2_ref[...],
                                preferred_element_type=jnp.float32)

        @pl.when(j == pl.num_programs(1) - 1)
        def _():
            y = acc_scr[...] + b2_ref[...].astype(jnp.float32) \
                + x_ref[...].astype(jnp.float32)      # residual uses pre-norm x
            o_ref[...] = y.astype(o_ref.dtype)

    return kernel


# ----------------------------------------------------------------------------
# tiling
# ----------------------------------------------------------------------------
def _pick_h_block(d, h, mm_itemsize, weight_budget):
    # Whole-weight residency (single copy in VMEM) if it fits.
    if 2 * d * h * mm_itemsize <= weight_budget or h % 128 != 0:
        # TODO(synk): if weights do not fit AND H is not a multiple of 128,
        # pad H in fold_params so the streaming split path can be used.
        return h
    # Otherwise stream (D,th)+(th,D) slices (double-buffered): largest
    # multiple-of-128 divisor of H that fits the budget.
    for th in range(h - 128, 127, -128):
        if h % th == 0 and 4 * d * th * mm_itemsize <= weight_budget:
            return th
    return 128


def _pick_row_tile(n, d, th, itemsize, weight_bytes, vmem_cap, is_v7x):
    ROW = 32  # bf16 MXU operands pack 16 rows/sublane; 32 keeps M fully packed.
    tm = min(1024, _round_up(n, ROW))
    if is_v7x and n > 2 * ROW:
        # >=4 grid steps with an even count: both TensorCores stay busy and the
        # x/out tile DMAs can double-buffer behind compute.
        steps = max(4, _cdiv(n, tm))
        if steps % 2:
            steps += 1
        tm = min(tm, _round_up(_cdiv(n, steps), ROW))

    def footprint(t):
        io = 2 * 2 * t * d * itemsize          # x & out tiles, double-buffered
        scratch = t * d * (2 + 4)              # xn (bf16) + acc (f32) scratch
        interm = t * (16 * d + 18 * th)        # hidden activation / GELU temps
        return weight_bytes + io + scratch + interm

    while tm > ROW and footprint(tm) > vmem_cap:
        tm -= ROW
    tm = max(ROW, tm)
    return tm, footprint(tm)


# ----------------------------------------------------------------------------
# wrapper
# ----------------------------------------------------------------------------
def prenorm_residual(x, w1c, b1f, w2c, b2f, *, eps=EPS, gelu_approximate=True):
    """x: (B, S, D) -> (B, S, D).  Parameters come from fold_params()."""
    B, S, D = x.shape
    H = w1c.shape[1]
    assert w1c.shape == (D, H) and w2c.shape == (H, D)
    assert b1f.shape == (1, H) and b2f.shape == (1, D)
    N = B * S

    is_v7x, bf16_elem, vmem_cap = _device_info()
    elem_dtype = jnp.bfloat16 if bf16_elem else jnp.float32
    itemsize = jnp.dtype(x.dtype).itemsize
    mm_itemsize = jnp.dtype(w1c.dtype).itemsize

    # Hidden-dimension blocking: resident whole weights if they fit ~40% of the
    # budget, else stream slices over a second ("arbitrary") grid axis.
    th = _pick_h_block(D, H, mm_itemsize, (vmem_cap * 2) // 5)
    split = th < H
    if split:
        weight_bytes = 2 * (2 * D * th) * mm_itemsize + 2 * th * 4 + D * 4
    else:
        weight_bytes = (2 * D * H) * mm_itemsize + H * 4 + D * 4

    tm, footprint = _pick_row_tile(N, D, th, itemsize, weight_bytes,
                                   vmem_cap, is_v7x)
    n_pad = _round_up(N, tm)

    x2 = x.reshape(N, D)
    if n_pad != N:
        # Padded zero rows go through LN/MLP harmlessly (var=0 -> rsqrt(eps)
        # stays finite) and are sliced off below.
        x2 = jnp.pad(x2, ((0, n_pad - N), (0, 0)))

    resident = pl.BlockSpec(memory_space=pltpu.MemorySpace.VMEM)
    if split:
        w1_spec = pl.BlockSpec((D, th), lambda i, j: (0, j))
        b1_spec = pl.BlockSpec((1, th), lambda i, j: (0, j))
        w2_spec = pl.BlockSpec((th, D), lambda i, j: (j, 0))
    else:
        w1_spec = b1_spec = w2_spec = resident

    kernel = _make_kernel(D, eps, elem_dtype, gelu_approximate)
    vmem_limit = int(min(vmem_cap, max(footprint + (4 << 20), 16 << 20)))

    # TODO(synk): optionally accept/emit bf16 activations (upcast for LN stats
    # and the residual in-kernel) to halve the recurring x/out HBM traffic.
    out = pl.pallas_call(
        kernel,
        out_shape=jax.ShapeDtypeStruct((n_pad, D), x.dtype),
        grid_spec=pltpu.PrefetchScalarGridSpec(
            num_scalar_prefetch=0,
            grid=(n_pad // tm, H // th),
            in_specs=[
                pl.BlockSpec((tm, D), lambda i, j: (i, 0)),   # x tile (pipelined)
                w1_spec,                                      # w1 (gamma folded)
                b1_spec,                                      # b1 (+ beta @ w1)
                w2_spec,                                      # w2
                resident,                                     # b2
            ],
            out_specs=pl.BlockSpec((tm, D), lambda i, j: (i, 0)),
            scratch_shapes=[
                pltpu.VMEM((tm, D), w1c.dtype),    # normalized activations
                pltpu.VMEM((tm, D), jnp.float32),  # MLP accumulator
            ],
        ),
        compiler_params=pltpu.CompilerParams(
            dimension_semantics=("parallel", "arbitrary"),
            vmem_limit_bytes=vmem_limit,
        ),
    )(x2, w1c, b1f, w2c, b2f)

    if n_pad != N:
        out = out[:N]
    return out.reshape(B, S, D)


# ----------------------------------------------------------------------------
# pure-f32 reference (true module semantics; GELU flavour selectable)
# ----------------------------------------------------------------------------
def _reference_f32(x, gamma, beta, w1, b1, w2, b2, *, gelu_approximate, eps=EPS):
    xf = x.astype(jnp.float32)
    mean = jnp.mean(xf, axis=-1, keepdims=True)
    var = jnp.mean((xf - mean) ** 2, axis=-1, keepdims=True)
    xn = (xf - mean) * jax.lax.rsqrt(var + eps) * gamma + beta
    h = xn @ w1.astype(jnp.float32) + b1
    h = jax.nn.gelu(h, approximate=gelu_approximate)
    y = h @ w2.astype(jnp.float32) + b2
    return y + xf


if __name__ == "__main__":
    # Small but lane-/MXU-aligned shapes: batch=2, seq=256, dim=128, hidden=256.
    B, S, D, H = 2, 256, 128, 256

    key = jax.random.PRNGKey(0)
    kx, kg, kb, kw1, kb1, kw2, kb2 = jax.random.split(key, 7)

    x = jax.random.normal(kx, (B, S, D), dtype=jnp.float32)
    gamma = 1.0 + 0.1 * jax.random.normal(kg, (D,), dtype=jnp.float32)
    beta = 0.1 * jax.random.normal(kb, (D,), dtype=jnp.float32)
    w1 = jax.random.normal(kw1, (D, H), dtype=jnp.float32) * (1.0 / D ** 0.5)
    b1 = 0.01 * jax.random.normal(kb1, (H,), dtype=jnp.float32)
    w2 = jax.random.normal(kw2, (H, D), dtype=jnp.float32) * (1.0 / H ** 0.5)
    b2 = 0.01 * jax.random.normal(kb2, (D,), dtype=jnp.float32)

    # One-time parameter fold / cast (outside the per-step hot path).
    params = fold_params(gamma, beta, w1, b1, w2, b2)

    # tanh-approx GELU by default (perf); set gelu_approximate=False for the
    # exact-erf semantics of PyTorch's default nn.GELU.
    y = prenorm_residual(x, *params, gelu_approximate=True)
    y = jax.block_until_ready(y)

    # Validate against a pure-f32 reference with the same GELU flavour, so the
    # comparison isolates the kernel's bf16/folding numerics.
    y_ref = _reference_f32(x, gamma, beta, w1, b1, w2, b2, gelu_approximate=True)
    assert y.shape == (B, S, D)
    max_err = float(jnp.max(jnp.abs(y - y_ref)))
    assert jnp.allclose(y, y_ref, atol=2e-2, rtol=2e-2), \
        f"mismatch vs f32 reference (max abs err {max_err:.4e})"

    print("KERNEL_OK")
</pallas_src>

<mosaic_0001>
module attributes {stable_mosaic.version = 11 : i64} {
  func.func @kernel(%arg0: i32, %arg1: i32, %arg2: memref<512x128xf32, #tpu.memory_space<vmem>>, %arg3: memref<128x256xbf16, #tpu.memory_space<vmem>>, %arg4: memref<1x256xf32, #tpu.memory_space<vmem>>, %arg5: memref<256x128xbf16, #tpu.memory_space<vmem>>, %arg6: memref<1x128xf32, #tpu.memory_space<vmem>>, %arg7: memref<512x128xf32, #tpu.memory_space<vmem>>, %arg8: memref<512x128xbf16, #tpu.memory_space<vmem>>, %arg9: memref<512x128xf32, #tpu.memory_space<vmem>>) attributes {dimension_semantics = [#tpu.dimension_semantics<parallel>, #tpu.dimension_semantics<arbitrary>], iteration_bounds = array<i64: 1, 1>, scalar_prefetch = 0 : i64, scratch_operands = 2 : i64, tpu.core_type = #tpu.core_type<tc>, window_params = [{transform_indices = @transform_0, window_bounds = array<i64: 512, 128>}, {pipeline_mode = #tpu.pipeline_mode<synchronous>, transform_indices = @transform_1, window_bounds = array<i64: 128, 256>}, {pipeline_mode = #tpu.pipeline_mode<synchronous>, transform_indices = @transform_2, window_bounds = array<i64: 1, 256>}, {pipeline_mode = #tpu.pipeline_mode<synchronous>, transform_indices = @transform_3, window_bounds = array<i64: 256, 128>}, {pipeline_mode = #tpu.pipeline_mode<synchronous>, transform_indices = @transform_4, window_bounds = array<i64: 1, 128>}, {transform_indices = @transform_5, window_bounds = array<i64: 512, 128>}]} {
    %c0_i32 = arith.constant 0 : i32
    %0 = arith.cmpi eq, %arg1, %c0_i32 : i32
    %1 = arith.extui %0 : i1 to i32
    %c0_i32_0 = arith.constant 0 : i32
    %2 = arith.cmpi ne, %1, %c0_i32_0 : i32
    scf.if %2 {
      %c0_19 = arith.constant 0 : index
      %c0_20 = arith.constant 0 : index
      %31 = vector.load %arg2[%c0_19, %c0_20] : memref<512x128xf32, #tpu.memory_space<vmem>>, vector<512x128xf32>
      %cst_21 = arith.constant dense<0.000000e+00> : vector<512xf32>
      %32 = vector.multi_reduction <add>, %31, %cst_21 [1] : vector<512x128xf32> to vector<512xf32>
      %33 = vector.shape_cast %32 : vector<512xf32> to vector<512x1xf32>
      %34 = arith.mulf %31, %31 : vector<512x128xf32>
      %cst_22 = arith.constant dense<0.000000e+00> : vector<512xf32>
      %35 = vector.multi_reduction <add>, %34, %cst_22 [1] : vector<512x128xf32> to vector<512xf32>
      %36 = vector.shape_cast %35 : vector<512xf32> to vector<512x1xf32>
      %cst_23 = arith.constant 7.812500e-03 : f32
      %37 = vector.broadcast %cst_23 : f32 to vector<512x1xf32>
      %38 = arith.mulf %33, %37 : vector<512x1xf32>
      %cst_24 = arith.constant 7.812500e-03 : f32
      %39 = vector.broadcast %cst_24 : f32 to vector<512x1xf32>
      %40 = arith.mulf %36, %39 : vector<512x1xf32>
      %41 = arith.mulf %38, %38 : vector<512x1xf32>
      %42 = arith.subf %40, %41 : vector<512x1xf32>
      %cst_25 = arith.constant 0.000000e+00 : f32
      %43 = vector.broadcast %cst_25 : f32 to vector<512x1xf32>
      %44 = arith.maximumf %42, %43 : vector<512x1xf32>
      %45 = vector.broadcast %38 : vector<512x1xf32> to vector<512x128xf32>
      %46 = arith.subf %31, %45 : vector<512x128xf32>
      %cst_26 = arith.constant 9.99999974E-6 : f32
      %47 = vector.broadcast %cst_26 : f32 to vector<512x1xf32>
      %48 = arith.addf %44, %47 : vector<512x1xf32>
      %49 = math.rsqrt %48 : vector<512x1xf32>
      %50 = vector.broadcast %49 : vector<512x1xf32> to vector<512x128xf32>
      %51 = arith.mulf %46, %50 : vector<512x128xf32>
      %52 = arith.truncf %51 : vector<512x128xf32> to vector<512x128xbf16>
      %c0_27 = arith.constant 0 : index
      %c0_28 = arith.constant 0 : index
      %53 = vector.load %arg8[%c0_27, %c0_28] : memref<512x128xbf16, #tpu.memory_space<vmem>>, vector<512x128xbf16>
      tpu.vector_store %arg8[%c0_27, %c0_28], %52 {strides = array<i32>} : memref<512x128xbf16, #tpu.memory_space<vmem>>, vector<512x128xbf16>,
      %cst_29 = arith.constant 0.000000e+00 : f32
      %54 = vector.broadcast %cst_29 : f32 to vector<512x128xf32>
      %c0_30 = arith.constant 0 : index
      %c0_31 = arith.constant 0 : index
      %55 = vector.load %arg9[%c0_30, %c0_31] : memref<512x128xf32, #tpu.memory_space<vmem>>, vector<512x128xf32>
      tpu.vector_store %arg9[%c0_30, %c0_31], %54 {strides = array<i32>} : memref<512x128xf32, #tpu.memory_space<vmem>>, vector<512x128xf32>,
    } else {
    }
    %c0 = arith.constant 0 : index
    %c0_1 = arith.constant 0 : index
    %3 = vector.load %arg8[%c0, %c0_1] : memref<512x128xbf16, #tpu.memory_space<vmem>>, vector<512x128xbf16>
    %c0_2 = arith.constant 0 : index
    %c0_3 = arith.constant 0 : index
    %4 = vector.load %arg3[%c0_2, %c0_3] : memref<128x256xbf16, #tpu.memory_space<vmem>>, vector<128x256xbf16>
    %cst = arith.constant dense<0.000000e+00> : vector<512x256xf32>
    %5 = tpu.matmul %3, %4, %cst {dimension_numbers = #tpu.dot_dimension_numbers<[1], [0], [0], [1], [0, 0, 1, 1], [], []>} : vector<512x128xbf16>, vector<128x256xbf16>, vector<512x256xf32> -> vector<512x256xf32>
    %c0_4 = arith.constant 0 : index
    %c0_5 = arith.constant 0 : index
    %6 = vector.load %arg4[%c0_4, %c0_5] : memref<1x256xf32, #tpu.memory_space<vmem>>, vector<1x256xf32>
    %7 = vector.broadcast %6 : vector<1x256xf32> to vector<512x256xf32>
    %8 = arith.addf %5, %7 : vector<512x256xf32>
    %9 = arith.mulf %8, %8 : vector<512x256xf32>
    %10 = arith.mulf %8, %9 : vector<512x256xf32>
    %cst_6 = arith.constant 4.471500e-02 : f32
    %11 = vector.broadcast %cst_6 : f32 to vector<512x256xf32>
    %12 = arith.mulf %11, %10 : vector<512x256xf32>
    %13 = arith.addf %8, %12 : vector<512x256xf32>
    %cst_7 = arith.constant 0.797884583 : f32
    %14 = vector.broadcast %cst_7 : f32 to vector<512x256xf32>
    %15 = arith.mulf %14, %13 : vector<512x256xf32>
    %16 = math.tanh %15 : vector<512x256xf32>
    %cst_8 = arith.constant 1.000000e+00 : f32
    %17 = vector.broadcast %cst_8 : f32 to vector<512x256xf32>
    %18 = arith.addf %17, %16 : vector<512x256xf32>
    %cst_9 = arith.constant 5.000000e-01 : f32
    %19 = vector.broadcast %cst_9 : f32 to vector<512x256xf32>
    %20 = arith.mulf %19, %18 : vector<512x256xf32>
    %21 = arith.mulf %8, %20 : vector<512x256xf32>
    %c0_10 = arith.constant 0 : index
    %c0_11 = arith.constant 0 : index
    %22 = vector.load %arg9[%c0_10, %c0_11] : memref<512x128xf32, #tpu.memory_space<vmem>>, vector<512x128xf32>
    %23 = arith.truncf %21 : vector<512x256xf32> to vector<512x256xbf16>
    %c0_12 = arith.constant 0 : index
    %c0_13 = arith.constant 0 : index
    %24 = vector.load %arg5[%c0_12, %c0_13] : memref<256x128xbf16, #tpu.memory_space<vmem>>, vector<256x128xbf16>
    %cst_14 = arith.constant dense<0.000000e+00> : vector<512x128xf32>
    %25 = tpu.matmul %23, %24, %cst_14 {dimension_numbers = #tpu.dot_dimension_numbers<[1], [0], [0], [1], [0, 0, 1, 1], [], []>} : vector<512x256xbf16>, vector<256x128xbf16>, vector<512x128xf32> -> vector<512x128xf32>
    %26 = arith.addf %22, %25 : vector<512x128xf32>
    %c0_15 = arith.constant 0 : index
    %c0_16 = arith.constant 0 : index
    %27 = vector.load %arg9[%c0_15, %c0_16] : memref<512x128xf32, #tpu.memory_space<vmem>>, vector<512x128xf32>
    tpu.vector_store %arg9[%c0_15, %c0_16], %26 {strides = array<i32>} : memref<512x128xf32, #tpu.memory_space<vmem>>, vector<512x128xf32>,
    %c0_i32_17 = arith.constant 0 : i32
    %28 = arith.cmpi eq, %arg1, %c0_i32_17 : i32
    %29 = arith.extui %28 : i1 to i32
    %c0_i32_18 = arith.constant 0 : i32
    %30 = arith.cmpi ne, %29, %c0_i32_18 : i32
    scf.if %30 {
      %c0_19 = arith.constant 0 : index
      %c0_20 = arith.constant 0 : index
      %31 = vector.load %arg9[%c0_19, %c0_20] : memref<512x128xf32, #tpu.memory_space<vmem>>, vector<512x128xf32>
      %c0_21 = arith.constant 0 : index
      %c0_22 = arith.constant 0 : index
      %32 = vector.load %arg6[%c0_21, %c0_22] : memref<1x128xf32, #tpu.memory_space<vmem>>, vector<1x128xf32>
      %33 = vector.broadcast %32 : vector<1x128xf32> to vector<512x128xf32>
      %34 = arith.addf %31, %33 : vector<512x128xf32>
      %c0_23 = arith.constant 0 : index
      %c0_24 = arith.constant 0 : index
      %35 = vector.load %arg2[%c0_23, %c0_24] : memref<512x128xf32, #tpu.memory_space<vmem>>, vector<512x128xf32>
      %36 = arith.addf %34, %35 : vector<512x128xf32>
      %c0_25 = arith.constant 0 : index
      %c0_26 = arith.constant 0 : index
      %37 = vector.load %arg7[%c0_25, %c0_26] : memref<512x128xf32, #tpu.memory_space<vmem>>, vector<512x128xf32>
      tpu.vector_store %arg7[%c0_25, %c0_26], %36 {strides = array<i32>} : memref<512x128xf32, #tpu.memory_space<vmem>>, vector<512x128xf32>,
    } else {
    }
    return
  }
  func.func @transform_0(%arg0: i32, %arg1: i32) -> (i32, i32) {
    %c0_i32 = arith.constant 0 : i32
    %c0_i32_0 = arith.constant 0 : i32
    return %arg0, %c0_i32 : i32, i32
  }
  func.func @transform_1(%arg0: i32, %arg1: i32) -> (i32, i32) {
    %c0_i32 = arith.constant 0 : i32
    %c0_i32_0 = arith.constant 0 : i32
    %c0_i32_1 = arith.constant 0 : i32
    return %c0_i32, %c0_i32_0 : i32, i32
  }
  func.func @transform_2(%arg0: i32, %arg1: i32) -> (i32, i32) {
    %c0_i32 = arith.constant 0 : i32
    %c0_i32_0 = arith.constant 0 : i32
    %c0_i32_1 = arith.constant 0 : i32
    return %c0_i32, %c0_i32_0 : i32, i32
  }
  func.func @transform_3(%arg0: i32, %arg1: i32) -> (i32, i32) {
    %c0_i32 = arith.constant 0 : i32
    %c0_i32_0 = arith.constant 0 : i32
    %c0_i32_1 = arith.constant 0 : i32
    return %c0_i32, %c0_i32_0 : i32, i32
  }
  func.func @transform_4(%arg0: i32, %arg1: i32) -> (i32, i32) {
    %c0_i32 = arith.constant 0 : i32
    %c0_i32_0 = arith.constant 0 : i32
    %c0_i32_1 = arith.constant 0 : i32
    return %c0_i32, %c0_i32_0 : i32, i32
  }
  func.func @transform_5(%arg0: i32, %arg1: i32) -> (i32, i32) {
    %c0_i32 = arith.constant 0 : i32
    %c0_i32_0 = arith.constant 0 : i32
    return %arg0, %c0_i32 : i32, i32
  }
}

</mosaic_0001>

<llo_original>
// kernel: tpu_custom_call.1
$region0: #{tpu_custom_call.1}
  #allocation0 [shape = 'u32[]', space=smem, size = 0x4, offset = 0x4, fixed_abs, tag = 'smem constant byte address 0x4 - core index']
  #allocation1 [shape = 'u32[144,128]{1,0:T(1,128)}', space=vmem, size = 0x12000, scoped, tag = 'internal scratch']
  #allocation2 [shape = 'bf16[512,128]{1,0:T(8,128)(2,1)}', space=vmem, size = 0x20000, scoped, tag = 'scratch operand']
  #allocation3 [shape = 'f32[512,128]{1,0:T(8,128)}', space=vmem, size = 0x40000, scoped, tag = 'scratch operand']
  %s0 = inlined_call_operand.hbm [shape: f32[512,128], index: 0, kind: input, shape index: {}]
  %s1 = inlined_call_operand.hbm [shape: bf16[128,256], index: 1, kind: input, shape index: {}]
  %s2 = inlined_call_operand.vmem [shape: f32[1,256], index: 2, kind: input, shape index: {}]
  %s3 = inlined_call_operand.hbm [shape: bf16[256,128], index: 3, kind: input, shape index: {}]
  %s4 = inlined_call_operand.vmem [shape: f32[1,128], index: 4, kind: input, shape index: {}]
  %s5 = inlined_call_operand.hbm [shape: f32[512,128], index: 5, kind: output, shape index: {}]
  %s6 = sld [smem:[#allocation0]]
  $region50: #{tpu_custom_call.1} parent=0
    _
  %s8 = ssub.s32 1, %s6
  %s9 = scalar_select 0, %s8, %s6
  $region1: #{tpu_custom_call.1} parent=0
    #allocation4 [shape = 'u8[262144]{0}', space=vmem, size = 0x40000, scoped, tag = 'input window, operand 0, single buffered']
    #allocation5 [shape = 's32[1]{0}', space=sflag, size = 0x4, scoped, tag = 'scoped memory for tpu_custom_call.1']
    #allocation6 [shape = 's32[1]{0}', space=sflag, size = 0x4, scoped, tag = 'scoped memory for tpu_custom_call.1']
    #allocation7 [shape = 'u8[65536]{0}', space=vmem, size = 0x10000, scoped, tag = 'input window, operand 1, single buffered']
    #allocation8 [shape = 's32[1]{0}', space=sflag, size = 0x4, scoped, tag = 'scoped memory for tpu_custom_call.1']
    #allocation9 [shape = 'u8[65536]{0}', space=vmem, size = 0x10000, scoped, tag = 'input window, operand 3, single buffered']
    #allocation10 [shape = 'u8[262144]{0}', space=vmem, size = 0x40000, scoped, tag = 'output window, operand 0, single buffered']
    %10 = vsyncpa [#allocation5], 0
    %11 = vsyncpa [#allocation8], 0
    %12 = vsyncpa [#allocation6], 0
    // Predicated region
    $region2: #{tpu_custom_call.1} parent=1 // pred_check
      _
    $region3: #{tpu_custom_call.1} parent=1 // pred_check_branch
      %14 = sbr.rel (0) target = $region5
    $region4: #{tpu_custom_call.1} parent=1 // pred_region
      %s16 = ssub.s32 8192, 8192
      %17 = vsyncadd [#allocation5], %s16
      %s18 = sshll.u32 [#allocation4], 4
      %s19 = int_to_ptr.vmem [resolvable:$true] %s18
      %24 = dma.hbm_to_vmem [thread:$0]  %s0, 8192, %s19, [#allocation5], 128, 128, 8
    $region5: #{tpu_custom_call.1} parent=1 // pred_fallthru
      _
    // Predicated region
    $region6: #{tpu_custom_call.1} parent=1 // pred_check
      _
    $region7: #{tpu_custom_call.1} parent=1 // pred_check_branch
      %26 = sbr.rel (0) target = $region9
    $region8: #{tpu_custom_call.1} parent=1 // pred_region
      %s28 = ssub.s32 2048, 2048
      %29 = vsyncadd [#allocation8], %s28
      %s30 = sshll.u32 [#allocation7], 4
      %s31 = int_to_ptr.vmem [resolvable:$true] %s30
      %36 = dma.hbm_to_vmem [thread:$0]  %s1, 2048, %s31, [#allocation8], 128, 128, 8
    $region9: #{tpu_custom_call.1} parent=1 // pred_fallthru
      _
    // Predicated region
    $region10: #{tpu_custom_call.1} parent=1 // pred_check
      _
    $region11: #{tpu_custom_call.1} parent=1 // pred_check_branch
      %38 = sbr.rel (0) target = $region13
    $region12: #{tpu_custom_call.1} parent=1 // pred_region
      _
    $region13: #{tpu_custom_call.1} parent=1 // pred_fallthru
      _
    // Predicated region
    $region14: #{tpu_custom_call.1} parent=1 // pred_check
      _
    $region15: #{tpu_custom_call.1} parent=1 // pred_check_branch
      %40 = sbr.rel (0) target = $region17
    $region16: #{tpu_custom_call.1} parent=1 // pred_region
      %s42 = ssub.s32 2048, 2048
      %43 = vsyncadd [#allocation8], %s42
      %s44 = sshll.u32 [#allocation9], 4
      %s45 = int_to_ptr.vmem [resolvable:$true] %s44
      %50 = dma.hbm_to_vmem [thread:$0]  %s3, 2048, %s45, [#allocation8], 64, 64, 4
    $region17: #{tpu_custom_call.1} parent=1 // pred_fallthru
      _
    // Predicated region
    $region18: #{tpu_custom_call.1} parent=1 // pred_check
      _
    $region19: #{tpu_custom_call.1} parent=1 // pred_check_branch
      %52 = sbr.rel (0) target = $region21
    $region20: #{tpu_custom_call.1} parent=1 // pred_region
      _
    $region21: #{tpu_custom_call.1} parent=1 // pred_fallthru
      _
    // Predicated region
    $region22: #{tpu_custom_call.1} parent=1 // pred_check
      _
    $region23: #{tpu_custom_call.1} parent=1 // pred_check_branch
      %54 = sbr.rel (0) target = $region25
    $region24: #{tpu_custom_call.1} parent=1 // pred_region
      %55 = dma.done [#allocation5], 8192
    $region25: #{tpu_custom_call.1} parent=1 // pred_fallthru
      _
    // Predicated region
    $region26: #{tpu_custom_call.1} parent=1 // pred_check
      _
    $region27: #{tpu_custom_call.1} parent=1 // pred_check_branch
      %57 = sbr.rel (0) target = $region29
    $region28: #{tpu_custom_call.1} parent=1 // pred_region
      %58 = dma.done [#allocation8], 2048
    $region29: #{tpu_custom_call.1} parent=1 // pred_fallthru
      _
    // Predicated region
    $region30: #{tpu_custom_call.1} parent=1 // pred_check
      _
    $region31: #{tpu_custom_call.1} parent=1 // pred_check_branch
      %60 = sbr.rel (0) target = $region33
    $region32: #{tpu_custom_call.1} parent=1 // pred_region
      %61 = dma.done [#allocation8], 2048
    $region33: #{tpu_custom_call.1} parent=1 // pred_fallthru
      _
    %p63 = scmp.eq.s32.totalorder 0, 0
    // Predicated region
    $region34: #{tpu_custom_call.1} parent=1 // pred_check
      %p64 = pneg %p63
    $region35: #{tpu_custom_call.1} parent=1 // pred_check_branch
      %66 = sbr.rel (%p64) target = $region37
    $region36: #{tpu_custom_call.1} parent=1 // pred_region
      %v67 = vld [vmem:[#allocation4] sm:$0xff]
      %v68 = vld [vmem:[#allocation4 + $0x8] sm:$0xff]
      %v69 = vld [vmem:[#allocation4 + $0x10] sm:$0xff]
      %v70 = vld [vmem:[#allocation4 + $0x18] sm:$0xff]
      %v71 = vld [vmem:[#allocation4 + $0x20] sm:$0xff]
      %v72 = vld [vmem:[#allocation4 + $0x28] sm:$0xff]
      %v73 = vld [vmem:[#allocation4 + $0x30] sm:$0xff]
      %v74 = vld [vmem:[#allocation4 + $0x38] sm:$0xff]
      %v75 = vld [vmem:[#allocation4 + $0x40] sm:$0xff]
      %v76 = vld [vmem:[#allocation4 + $0x48] sm:$0xff]
      %v77 = vld [vmem:[#allocation4 + $0x50] sm:$0xff]
      %v78 = vld [vmem:[#allocation4 + $0x58] sm:$0xff]
      %v79 = vld [vmem:[#allocation4 + $0x60] sm:$0xff]
      %v80 = vld [vmem:[#allocation4 + $0x68] sm:$0xff]
      %v81 = vld [vmem:[#allocation4 + $0x70] sm:$0xff]
      %v82 = vld [vmem:[#allocation4 + $0x78] sm:$0xff]
      %v83 = vld [vmem:[#allocation4 + $0x80] sm:$0xff]
      %v84 = vld [vmem:[#allocation4 + $0x88] sm:$0xff]
      %v85 = vld [vmem:[#allocation4 + $0x90] sm:$0xff]
      %v86 = vld [vmem:[#allocation4 + $0x98] sm:$0xff]
      %v87 = vld [vmem:[#allocation4 + $0xa0] sm:$0xff]
      %v88 = vld [vmem:[#allocation4 + $0xa8] sm:$0xff]
      %v89 = vld [vmem:[#allocation4 + $0xb0] sm:$0xff]
      %v90 = vld [vmem:[#allocation4 + $0xb8] sm:$0xff]
      %v91 = vld [vmem:[#allocation4 + $0xc0] sm:$0xff]
      %v92 = vld [vmem:[#allocation4 + $0xc8] sm:$0xff]
      %v93 = vld [vmem:[#allocation4 + $0xd0] sm:$0xff]
      %v94 = vld [vmem:[#allocation4 + $0xd8] sm:$0xff]
      %v95 = vld [vmem:[#allocation4 + $0xe0] sm:$0xff]
      %v96 = vld [vmem:[#allocation4 + $0xe8] sm:$0xff]
      %v97 = vld [vmem:[#allocation4 + $0xf0] sm:$0xff]
      %v98 = vld [vmem:[#allocation4 + $0xf8] sm:$0xff]
      %v99 = vld [vmem:[#allocation4 + $0x100] sm:$0xff]
      %v100 = vld [vmem:[#allocation4 + $0x108] sm:$0xff]
      %v101 = vld [vmem:[#allocation4 + $0x110] sm:$0xff]
      %v102 = vld [vmem:[#allocation4 + $0x118] sm:$0xff]
      %v103 = vld [vmem:[#allocation4 + $0x120] sm:$0xff]
      %v104 = vld [vmem:[#allocation4 + $0x128] sm:$0xff]
      %v105 = vld [vmem:[#allocation4 + $0x130] sm:$0xff]
      %v106 = vld [vmem:[#allocation4 + $0x138] sm:$0xff]
      %v107 = vld [vmem:[#allocation4 + $0x140] sm:$0xff]
      %v108 = vld [vmem:[#allocation4 + $0x148] sm:$0xff]
      %v109 = vld [vmem:[#allocation4 + $0x150] sm:$0xff]
      %v110 = vld [vmem:[#allocation4 + $0x158] sm:$0xff]
      %v111 = vld [vmem:[#allocation4 + $0x160] sm:$0xff]
      %v112 = vld [vmem:[#allocation4 + $0x168] sm:$0xff]
      %v113 = vld [vmem:[#allocation4 + $0x170] sm:$0xff]
      %v114 = vld [vmem:[#allocation4 + $0x178] sm:$0xff]
      %v115 = vld [vmem:[#allocation4 + $0x180] sm:$0xff]
      %v116 = vld [vmem:[#allocation4 + $0x188] sm:$0xff]
      %v117 = vld [vmem:[#allocation4 + $0x190] sm:$0xff]
      %v118 = vld [vmem:[#allocation4 + $0x198] sm:$0xff]
      %v119 = vld [vmem:[#allocation4 + $0x1a0] sm:$0xff]
      %v120 = vld [vmem:[#allocation4 + $0x1a8] sm:$0xff]
      %v121 = vld [vmem:[#allocation4 + $0x1b0] sm:$0xff]
      %v122 = vld [vmem:[#allocation4 + $0x1b8] sm:$0xff]
      %v123 = vld [vmem:[#allocation4 + $0x1c0] sm:$0xff]
      %v124 = vld [vmem:[#allocation4 + $0x1c8] sm:$0xff]
      %v125 = vld [vmem:[#allocation4 + $0x1d0] sm:$0xff]
      %v126 = vld [vmem:[#allocation4 + $0x1d8] sm:$0xff]
      %v127 = vld [vmem:[#allocation4 + $0x1e0] sm:$0xff]
      %v128 = vld [vmem:[#allocation4 + $0x1e8] sm:$0xff]
      %v129 = vld [vmem:[#allocation4 + $0x1f0] sm:$0xff]
      %v130 = vld [vmem:[#allocation4 + $0x1f8] sm:$0xff]
      %131 = vadd.xlane.f32.xlu0 %v67
      %v132 = vpop.xlane.xlu0 %131
      %133 = vadd.xlane.f32.xlu0 %v68
      %v134 = vpop.xlane.xlu0 %133
      %135 = vadd.xlane.f32.xlu0 %v69
      %v136 = vpop.xlane.xlu0 %135
      %137 = vadd.xlane.f32.xlu0 %v70
      %v138 = vpop.xlane.xlu0 %137
      %139 = vadd.xlane.f32.xlu0 %v71
      %v140 = vpop.xlane.xlu0 %139
      %141 = vadd.xlane.f32.xlu0 %v72
      %v142 = vpop.xlane.xlu0 %141
      %143 = vadd.xlane.f32.xlu0 %v73
      %v144 = vpop.xlane.xlu0 %143
      %145 = vadd.xlane.f32.xlu0 %v74
      %v146 = vpop.xlane.xlu0 %145
      %147 = vadd.xlane.f32.xlu0 %v75
      %v148 = vpop.xlane.xlu0 %147
      %149 = vadd.xlane.f32.xlu0 %v76
      %v150 = vpop.xlane.xlu0 %149
      %151 = vadd.xlane.f32.xlu0 %v77
      %v152 = vpop.xlane.xlu0 %151
      %153 = vadd.xlane.f32.xlu0 %v78
      %v154 = vpop.xlane.xlu0 %153
      %155 = vadd.xlane.f32.xlu0 %v79
      %v156 = vpop.xlane.xlu0 %155
      %157 = vadd.xlane.f32.xlu0 %v80
      %v158 = vpop.xlane.xlu0 %157
      %159 = vadd.xlane.f32.xlu0 %v81
      %v160 = vpop.xlane.xlu0 %159
      %161 = vadd.xlane.f32.xlu0 %v82
      %v162 = vpop.xlane.xlu0 %161
      %163 = vadd.xlane.f32.xlu0 %v83
      %v164 = vpop.xlane.xlu0 %163
      %165 = vadd.xlane.f32.xlu0 %v84
      %v166 = vpop.xlane.xlu0 %165
      %167 = vadd.xlane.f32.xlu0 %v85
      %v168 = vpop.xlane.xlu0 %167
      %169 = vadd.xlane.f32.xlu0 %v86
      %v170 = vpop.xlane.xlu0 %169
      %171 = vadd.xlane.f32.xlu0 %v87
      %v172 = vpop.xlane.xlu0 %171
      %173 = vadd.xlane.f32.xlu0 %v88
      %v174 = vpop.xlane.xlu0 %173
      %175 = vadd.xlane.f32.xlu0 %v89
      %v176 = vpop.xlane.xlu0 %175
      %177 = vadd.xlane.f32.xlu0 %v90
      %v178 = vpop.xlane.xlu0 %177
      %179 = vadd.xlane.f32.xlu0 %v91
      %v180 = vpop.xlane.xlu0 %179
      %181 = vadd.xlane.f32.xlu0 %v92
      %v182 = vpop.xlane.xlu0 %181
      %183 = vadd.xlane.f32.xlu0 %v93
      %v184 = vpop.xlane.xlu0 %183
      %185 = vadd.xlane.f32.xlu0 %v94
      %v186 = vpop.xlane.xlu0 %185
      %187 = vadd.xlane.f32.xlu0 %v95
      %v188 = vpop.xlane.xlu0 %187
      %189 = vadd.xlane.f32.xlu0 %v96
      %v190 = vpop.xlane.xlu0 %189
      %191 = vadd.xlane.f32.xlu0 %v97
      %v192 = vpop.xlane.xlu0 %191
      %193 = vadd.xlane.f32.xlu0 %v98
      %v194 = vpop.xlane.xlu0 %193
      %195 = vadd.xlane.f32.xlu0 %v99
      %v196 = vpop.xlane.xlu0 %195
      %197 = vadd.xlane.f32.xlu0 %v100
      %v198 = vpop.xlane.xlu0 %197
      %199 = vadd.xlane.f32.xlu0 %v101
      %v200 = vpop.xlane.xlu0 %199
      %201 = vadd.xlane.f32.xlu0 %v102
      %v202 = vpop.xlane.xlu0 %201
      %203 = vadd.xlane.f32.xlu0 %v103
      %v204 = vpop.xlane.xlu0 %203
      %205 = vadd.xlane.f32.xlu0 %v104
      %v206 = vpop.xlane.xlu0 %205
      %207 = vadd.xlane.f32.xlu0 %v105
      %v208 = vpop.xlane.xlu0 %207
      %209 = vadd.xlane.f32.xlu0 %v106
      %v210 = vpop.xlane.xlu0 %209
      %211 = vadd.xlane.f32.xlu0 %v107
      %v212 = vpop.xlane.xlu0 %211
      %213 = vadd.xlane.f32.xlu0 %v108
      %v214 = vpop.xlane.xlu0 %213
      %215 = vadd.xlane.f32.xlu0 %v109
      %v216 = vpop.xlane.xlu0 %215
      %217 = vadd.xlane.f32.xlu0 %v110
      %v218 = vpop.xlane.xlu0 %217
      %219 = vadd.xlane.f32.xlu0 %v111
      %v220 = vpop.xlane.xlu0 %219
      %221 = vadd.xlane.f32.xlu0 %v112
      %v222 = vpop.xlane.xlu0 %221
      %223 = vadd.xlane.f32.xlu0 %v113
      %v224 = vpop.xlane.xlu0 %223
      %225 = vadd.xlane.f32.xlu0 %v114
      %v226 = vpop.xlane.xlu0 %225
      %227 = vadd.xlane.f32.xlu0 %v115
      %v228 = vpop.xlane.xlu0 %227
      %229 = vadd.xlane.f32.xlu0 %v116
      %v230 = vpop.xlane.xlu0 %229
      %231 = vadd.xlane.f32.xlu0 %v117
      %v232 = vpop.xlane.xlu0 %231
      %233 = vadd.xlane.f32.xlu0 %v118
      %v234 = vpop.xlane.xlu0 %233
      %235 = vadd.xlane.f32.xlu0 %v119
      %v236 = vpop.xlane.xlu0 %235
      %237 = vadd.xlane.f32.xlu0 %v120
      %v238 = vpop.xlane.xlu0 %237
      %239 = vadd.xlane.f32.xlu0 %v121
      %v240 = vpop.xlane.xlu0 %239
      %241 = vadd.xlane.f32.xlu0 %v122
      %v242 = vpop.xlane.xlu0 %241
      %243 = vadd.xlane.f32.xlu0 %v123
      %v244 = vpop.xlane.xlu0 %243
      %245 = vadd.xlane.f32.xlu0 %v124
      %v246 = vpop.xlane.xlu0 %245
      %247 = vadd.xlane.f32.xlu0 %v125
      %v248 = vpop.xlane.xlu0 %247
      %249 = vadd.xlane.f32.xlu0 %v126
      %v250 = vpop.xlane.xlu0 %249
      %251 = vadd.xlane.f32.xlu0 %v127
      %v252 = vpop.xlane.xlu0 %251
      %253 = vadd.xlane.f32.xlu0 %v128
      %v254 = vpop.xlane.xlu0 %253
      %255 = vadd.xlane.f32.xlu0 %v129
      %v256 = vpop.xlane.xlu0 %255
      %257 = vadd.xlane.f32.xlu0 %v130
      %v258 = vpop.xlane.xlu0 %257
      %v259 = vmul.f32 %v67, %v67
      %v260 = vmul.f32 %v68, %v68
      %v261 = vmul.f32 %v69, %v69
      %v262 = vmul.f32 %v70, %v70
      %v263 = vmul.f32 %v71, %v71
      %v264 = vmul.f32 %v72, %v72
      %v265 = vmul.f32 %v73, %v73
      %v266 = vmul.f32 %v74, %v74
      %v267 = vmul.f32 %v75, %v75
      %v268 = vmul.f32 %v76, %v76
      %v269 = vmul.f32 %v77, %v77
      %v270 = vmul.f32 %v78, %v78
      %v271 = vmul.f32 %v79, %v79
      %v272 = vmul.f32 %v80, %v80
      %v273 = vmul.f32 %v81, %v81
      %v274 = vmul.f32 %v82, %v82
      %v275 = vmul.f32 %v83, %v83
      %v276 = vmul.f32 %v84, %v84
      %v277 = vmul.f32 %v85, %v85
      %v278 = vmul.f32 %v86, %v86
      %v279 = vmul.f32 %v87, %v87
      %v280 = vmul.f32 %v88, %v88
      %v281 = vmul.f32 %v89, %v89
      %v282 = vmul.f32 %v90, %v90
      %v283 = vmul.f32 %v91, %v91
      %v284 = vmul.f32 %v92, %v92
      %v285 = vmul.f32 %v93, %v93
      %v286 = vmul.f32 %v94, %v94
      %v287 = vmul.f32 %v95, %v95
      %v288 = vmul.f32 %v96, %v96
      %v289 = vmul.f32 %v97, %v97
      %v290 = vmul.f32 %v98, %v98
      %v291 = vmul.f32 %v99, %v99
      %v292 = vmul.f32 %v100, %v100
      %v293 = vmul.f32 %v101, %v101
      %v294 = vmul.f32 %v102, %v102
      %v295 = vmul.f32 %v103, %v103
      %v296 = vmul.f32 %v104, %v104
      %v297 = vmul.f32 %v105, %v105
      %v298 = vmul.f32 %v106, %v106
      %v299 = vmul.f32 %v107, %v107
      %v300 = vmul.f32 %v108, %v108
      %v301 = vmul.f32 %v109, %v109
      %v302 = vmul.f32 %v110, %v110
      %v303 = vmul.f32 %v111, %v111
      %v304 = vmul.f32 %v112, %v112
      %v305 = vmul.f32 %v113, %v113
      %v306 = vmul.f32 %v114, %v114
      %v307 = vmul.f32 %v115, %v115
      %v308 = vmul.f32 %v116, %v116
      %v309 = vmul.f32 %v117, %v117
      %v310 = vmul.f32 %v118, %v118
      %v311 = vmul.f32 %v119, %v119
      %v312 = vmul.f32 %v120, %v120
      %v313 = vmul.f32 %v121, %v121
      %v314 = vmul.f32 %v122, %v122
      %v315 = vmul.f32 %v123, %v123
      %v316 = vmul.f32 %v124, %v124
      %v317 = vmul.f32 %v125, %v125
      %v318 = vmul.f32 %v126, %v126
      %v319 = vmul.f32 %v127, %v127
      %v320 = vmul.f32 %v128, %v128
      %v321 = vmul.f32 %v129, %v129
      %v322 = vmul.f32 %v130, %v130
      %323 = vadd.xlane.f32.xlu0 %v259
      %v324 = vpop.xlane.xlu0 %323
      %325 = vadd.xlane.f32.xlu0 %v260
      %v326 = vpop.xlane.xlu0 %325
      %327 = vadd.xlane.f32.xlu0 %v261
      %v328 = vpop.xlane.xlu0 %327
      %329 = vadd.xlane.f32.xlu0 %v262
      %v330 = vpop.xlane.xlu0 %329
      %331 = vadd.xlane.f32.xlu0 %v263
      %v332 = vpop.xlane.xlu0 %331
      %333 = vadd.xlane.f32.xlu0 %v264
      %v334 = vpop.xlane.xlu0 %333
      %335 = vadd.xlane.f32.xlu0 %v265
      %v336 = vpop.xlane.xlu0 %335
      %337 = vadd.xlane.f32.xlu0 %v266
      %v338 = vpop.xlane.xlu0 %337
      %339 = vadd.xlane.f32.xlu0 %v267
      %v340 = vpop.xlane.xlu0 %339
      %341 = vadd.xlane.f32.xlu0 %v268
      %v342 = vpop.xlane.xlu0 %341
      %343 = vadd.xlane.f32.xlu0 %v269
      %v344 = vpop.xlane.xlu0 %343
      %345 = vadd.xlane.f32.xlu0 %v270
      %v346 = vpop.xlane.xlu0 %345
      %347 = vadd.xlane.f32.xlu0 %v271
      %v348 = vpop.xlane.xlu0 %347
      %349 = vadd.xlane.f32.xlu0 %v272
      %v350 = vpop.xlane.xlu0 %349
      %351 = vadd.xlane.f32.xlu0 %v273
      %v352 = vpop.xlane.xlu0 %351
      %353 = vadd.xlane.f32.xlu0 %v274
      %v354 = vpop.xlane.xlu0 %353
      %355 = vadd.xlane.f32.xlu0 %v275
      %v356 = vpop.xlane.xlu0 %355
      %357 = vadd.xlane.f32.xlu0 %v276
      %v358 = vpop.xlane.xlu0 %357
      %359 = vadd.xlane.f32.xlu0 %v277
      %v360 = vpop.xlane.xlu0 %359
      %361 = vadd.xlane.f32.xlu0 %v278
      %v362 = vpop.xlane.xlu0 %361
      %363 = vadd.xlane.f32.xlu0 %v279
      %v364 = vpop.xlane.xlu0 %363
      %365 = vadd.xlane.f32.xlu0 %v280
      %v366 = vpop.xlane.xlu0 %365
      %367 = vadd.xlane.f32.xlu0 %v281
      %v368 = vpop.xlane.xlu0 %367
      %369 = vadd.xlane.f32.xlu0 %v282
      %v370 = vpop.xlane.xlu0 %369
      %371 = vadd.xlane.f32.xlu0 %v283
      %v372 = vpop.xlane.xlu0 %371
      %373 = vadd.xlane.f32.xlu0 %v284
      %v374 = vpop.xlane.xlu0 %373
      %375 = vadd.xlane.f32.xlu0 %v285
      %v376 = vpop.xlane.xlu0 %375
      %377 = vadd.xlane.f32.xlu0 %v286
      %v378 = vpop.xlane.xlu0 %377
      %379 = vadd.xlane.f32.xlu0 %v287
      %v380 = vpop.xlane.xlu0 %379
      %381 = vadd.xlane.f32.xlu0 %v288
      %v382 = vpop.xlane.xlu0 %381
      %383 = vadd.xlane.f32.xlu0 %v289
      %v384 = vpop.xlane.xlu0 %383
      %385 = vadd.xlane.f32.xlu0 %v290
      %v386 = vpop.xlane.xlu0 %385
      %387 = vadd.xlane.f32.xlu0 %v291
      %v388 = vpop.xlane.xlu0 %387
      %389 = vadd.xlane.f32.xlu0 %v292
      %v390 = vpop.xlane.xlu0 %389
      %391 = vadd.xlane.f32.xlu0 %v293
      %v392 = vpop.xlane.xlu0 %391
      %393 = vadd.xlane.f32.xlu0 %v294
      %v394 = vpop.xlane.xlu0 %393
      %395 = vadd.xlane.f32.xlu0 %v295
      %v396 = vpop.xlane.xlu0 %395
      %397 = vadd.xlane.f32.xlu0 %v296
      %v398 = vpop.xlane.xlu0 %397
      %399 = vadd.xlane.f32.xlu0 %v297
      %v400 = vpop.xlane.xlu0 %399
      %401 = vadd.xlane.f32.xlu0 %v298
      %v402 = vpop.xlane.xlu0 %401
      %403 = vadd.xlane.f32.xlu0 %v299
      %v404 = vpop.xlane.xlu0 %403
      %405 = vadd.xlane.f32.xlu0 %v300
      %v406 = vpop.xlane.xlu0 %405
      %407 = vadd.xlane.f32.xlu0 %v301
      %v408 = vpop.xlane.xlu0 %407
      %409 = vadd.xlane.f32.xlu0 %v302
      %v410 = vpop.xlane.xlu0 %409
      %411 = vadd.xlane.f32.xlu0 %v303
      %v412 = vpop.xlane.xlu0 %411
      %413 = vadd.xlane.f32.xlu0 %v304
      %v414 = vpop.xlane.xlu0 %413
      %415 = vadd.xlane.f32.xlu0 %v305
      %v416 = vpop.xlane.xlu0 %415
      %417 = vadd.xlane.f32.xlu0 %v306
      %v418 = vpop.xlane.xlu0 %417
      %419 = vadd.xlane.f32.xlu0 %v307
      %v420 = vpop.xlane.xlu0 %419
      %421 = vadd.xlane.f32.xlu0 %v308
      %v422 = vpop.xlane.xlu0 %421
      %423 = vadd.xlane.f32.xlu0 %v309
      %v424 = vpop.xlane.xlu0 %423
      %425 = vadd.xlane.f32.xlu0 %v310
      %v426 = vpop.xlane.xlu0 %425
      %427 = vadd.xlane.f32.xlu0 %v311
      %v428 = vpop.xlane.xlu0 %427
      %429 = vadd.xlane.f32.xlu0 %v312
      %v430 = vpop.xlane.xlu0 %429
      %431 = vadd.xlane.f32.xlu0 %v313
      %v432 = vpop.xlane.xlu0 %431
      %433 = vadd.xlane.f32.xlu0 %v314
      %v434 = vpop.xlane.xlu0 %433
      %435 = vadd.xlane.f32.xlu0 %v315
      %v436 = vpop.xlane.xlu0 %435
      %437 = vadd.xlane.f32.xlu0 %v316
      %v438 = vpop.xlane.xlu0 %437
      %439 = vadd.xlane.f32.xlu0 %v317
      %v440 = vpop.xlane.xlu0 %439
      %441 = vadd.xlane.f32.xlu0 %v318
      %v442 = vpop.xlane.xlu0 %441
      %443 = vadd.xlane.f32.xlu0 %v319
      %v444 = vpop.xlane.xlu0 %443
      %445 = vadd.xlane.f32.xlu0 %v320
      %v446 = vpop.xlane.xlu0 %445
      %447 = vadd.xlane.f32.xlu0 %v321
      %v448 = vpop.xlane.xlu0 %447
      %449 = vadd.xlane.f32.xlu0 %v322
      %v450 = vpop.xlane.xlu0 %449
      %v451 = vmul.f32 %v132, 0.0078125
      %v452 = vmul.f32 %v134, 0.0078125
      %v453 = vmul.f32 %v136, 0.0078125
      %v454 = vmul.f32 %v138, 0.0078125
      %v455 = vmul.f32 %v140, 0.0078125
      %v456 = vmul.f32 %v142, 0.0078125
      %v457 = vmul.f32 %v144, 0.0078125
      %v458 = vmul.f32 %v146, 0.0078125
      %v459 = vmul.f32 %v148, 0.0078125
      %v460 = vmul.f32 %v150, 0.0078125
      %v461 = vmul.f32 %v152, 0.0078125
      %v462 = vmul.f32 %v154, 0.0078125
      %v463 = vmul.f32 %v156, 0.0078125
      %v464 = vmul.f32 %v158, 0.0078125
      %v465 = vmul.f32 %v160, 0.0078125
      %v466 = vmul.f32 %v162, 0.0078125
      %v467 = vmul.f32 %v164, 0.0078125
      %v468 = vmul.f32 %v166, 0.0078125
      %v469 = vmul.f32 %v168, 0.0078125
      %v470 = vmul.f32 %v170, 0.0078125
      %v471 = vmul.f32 %v172, 0.0078125
      %v472 = vmul.f32 %v174, 0.0078125
      %v473 = vmul.f32 %v176, 0.0078125
      %v474 = vmul.f32 %v178, 0.0078125
      %v475 = vmul.f32 %v180, 0.0078125
      %v476 = vmul.f32 %v182, 0.0078125
      %v477 = vmul.f32 %v184, 0.0078125
      %v478 = vmul.f32 %v186, 0.0078125
      %v479 = vmul.f32 %v188, 0.0078125
      %v480 = vmul.f32 %v190, 0.0078125
      %v481 = vmul.f32 %v192, 0.0078125
      %v482 = vmul.f32 %v194, 0.0078125
      %v483 = vmul.f32 %v196, 0.0078125
      %v484 = vmul.f32 %v198, 0.0078125
      %v485 = vmul.f32 %v200, 0.0078125
      %v486 = vmul.f32 %v202, 0.0078125
      %v487 = vmul.f32 %v204, 0.0078125
      %v488 = vmul.f32 %v206, 0.0078125
      %v489 = vmul.f32 %v208, 0.0078125
      %v490 = vmul.f32 %v210, 0.0078125
      %v491 = vmul.f32 %v212, 0.0078125
      %v492 = vmul.f32 %v214, 0.0078125
      %v493 = vmul.f32 %v216, 0.0078125
      %v494 = vmul.f32 %v218, 0.0078125
      %v495 = vmul.f32 %v220, 0.0078125
      %v496 = vmul.f32 %v222, 0.0078125
      %v497 = vmul.f32 %v224, 0.0078125
      %v498 = vmul.f32 %v226, 0.0078125
      %v499 = vmul.f32 %v228, 0.0078125
      %v500 = vmul.f32 %v230, 0.0078125
      %v501 = vmul.f32 %v232, 0.0078125
      %v502 = vmul.f32 %v234, 0.0078125
      %v503 = vmul.f32 %v236, 0.0078125
      %v504 = vmul.f32 %v238, 0.0078125
      %v505 = vmul.f32 %v240, 0.0078125
      %v506 = vmul.f32 %v242, 0.0078125
      %v507 = vmul.f32 %v244, 0.0078125
      %v508 = vmul.f32 %v246, 0.0078125
      %v509 = vmul.f32 %v248, 0.0078125
      %v510 = vmul.f32 %v250, 0.0078125
      %v511 = vmul.f32 %v252, 0.0078125
      %v512 = vmul.f32 %v254, 0.0078125
      %v513 = vmul.f32 %v256, 0.0078125
      %v514 = vmul.f32 %v258, 0.0078125
      %v515 = vmul.f32 %v324, 0.0078125
      %v516 = vmul.f32 %v326, 0.0078125
      %v517 = vmul.f32 %v328, 0.0078125
      %v518 = vmul.f32 %v330, 0.0078125
      %v519 = vmul.f32 %v332, 0.0078125
      %v520 = vmul.f32 %v334, 0.0078125
      %v521 = vmul.f32 %v336, 0.0078125
      %v522 = vmul.f32 %v338, 0.0078125
      %v523 = vmul.f32 %v340, 0.0078125
      %v524 = vmul.f32 %v342, 0.0078125
      %v525 = vmul.f32 %v344, 0.0078125
      %v526 = vmul.f32 %v346, 0.0078125
      %v527 = vmul.f32 %v348, 0.0078125
      %v528 = vmul.f32 %v350, 0.0078125
      %v529 = vmul.f32 %v352, 0.0078125
      %v530 = vmul.f32 %v354, 0.0078125
      %v531 = vmul.f32 %v356, 0.0078125
      %v532 = vmul.f32 %v358, 0.0078125
      %v533 = vmul.f32 %v360, 0.0078125
      %v534 = vmul.f32 %v362, 0.0078125
      %v535 = vmul.f32 %v364, 0.0078125
      %v536 = vmul.f32 %v366, 0.0078125
      %v537 = vmul.f32 %v368, 0.0078125
      %v538 = vmul.f32 %v370, 0.0078125
      %v539 = vmul.f32 %v372, 0.0078125
      %v540 = vmul.f32 %v374, 0.0078125
      %v541 = vmul.f32 %v376, 0.0078125
      %v542 = vmul.f32 %v378, 0.0078125
      %v543 = vmul.f32 %v380, 0.0078125
      %v544 = vmul.f32 %v382, 0.0078125
      %v545 = vmul.f32 %v384, 0.0078125
      %v546 = vmul.f32 %v386, 0.0078125
      %v547 = vmul.f32 %v388, 0.0078125
      %v548 = vmul.f32 %v390, 0.0078125
      %v549 = vmul.f32 %v392, 0.0078125
      %v550 = vmul.f32 %v394, 0.0078125
      %v551 = vmul.f32 %v396, 0.0078125
      %v552 = vmul.f32 %v398, 0.0078125
      %v553 = vmul.f32 %v400, 0.0078125
      %v554 = vmul.f32 %v402, 0.0078125
      %v555 = vmul.f32 %v404, 0.0078125
      %v556 = vmul.f32 %v406, 0.0078125
      %v557 = vmul.f32 %v408, 0.0078125
      %v558 = vmul.f32 %v410, 0.0078125
      %v559 = vmul.f32 %v412, 0.0078125
      %v560 = vmul.f32 %v414, 0.0078125
      %v561 = vmul.f32 %v416, 0.0078125
      %v562 = vmul.f32 %v418, 0.0078125
      %v563 = vmul.f32 %v420, 0.0078125
      %v564 = vmul.f32 %v422, 0.0078125
      %v565 = vmul.f32 %v424, 0.0078125
      %v566 = vmul.f32 %v426, 0.0078125
      %v567 = vmul.f32 %v428, 0.0078125
      %v568 = vmul.f32 %v430, 0.0078125
      %v569 = vmul.f32 %v432, 0.0078125
      %v570 = vmul.f32 %v434, 0.0078125
      %v571 = vmul.f32 %v436, 0.0078125
      %v572 = vmul.f32 %v438, 0.0078125
      %v573 = vmul.f32 %v440, 0.0078125
      %v574 = vmul.f32 %v442, 0.0078125
      %v575 = vmul.f32 %v444, 0.0078125
      %v576 = vmul.f32 %v446, 0.0078125
      %v577 = vmul.f32 %v448, 0.0078125
      %v578 = vmul.f32 %v450, 0.0078125
      %v579 = vmul.f32 %v451, %v451
      %v580 = vmul.f32 %v452, %v452
      %v581 = vmul.f32 %v453, %v453
      %v582 = vmul.f32 %v454, %v454
      %v583 = vmul.f32 %v455, %v455
      %v584 = vmul.f32 %v456, %v456
      %v585 = vmul.f32 %v457, %v457
      %v586 = vmul.f32 %v458, %v458
      %v587 = vmul.f32 %v459, %v459
      %v588 = vmul.f32 %v460, %v460
      %v589 = vmul.f32 %v461, %v461
      %v590 = vmul.f32 %v462, %v462
      %v591 = vmul.f32 %v463, %v463
      %v592 = vmul.f32 %v464, %v464
      %v593 = vmul.f32 %v465, %v465
      %v594 = vmul.f32 %v466, %v466
      %v595 = vmul.f32 %v467, %v467
      %v596 = vmul.f32 %v468, %v468
      %v597 = vmul.f32 %v469, %v469
      %v598 = vmul.f32 %v470, %v470
      %v599 = vmul.f32 %v471, %v471
      %v600 = vmul.f32 %v472, %v472
      %v601 = vmul.f32 %v473, %v473
      %v602 = vmul.f32 %v474, %v474
      %v603 = vmul.f32 %v475, %v475
      %v604 = vmul.f32 %v476, %v476
      %v605 = vmul.f32 %v477, %v477
      %v606 = vmul.f32 %v478, %v478
      %v607 = vmul.f32 %v479, %v479
      %v608 = vmul.f32 %v480, %v480
      %v609 = vmul.f32 %v481, %v481
      %v610 = vmul.f32 %v482, %v482
      %v611 = vmul.f32 %v483, %v483
      %v612 = vmul.f32 %v484, %v484
      %v613 = vmul.f32 %v485, %v485
      %v614 = vmul.f32 %v486, %v486
      %v615 = vmul.f32 %v487, %v487
      %v616 = vmul.f32 %v488, %v488
      %v617 = vmul.f32 %v489, %v489
      %v618 = vmul.f32 %v490, %v490
      %v619 = vmul.f32 %v491, %v491
      %v620 = vmul.f32 %v492, %v492
      %v621 = vmul.f32 %v493, %v493
      %v622 = vmul.f32 %v494, %v494
      %v623 = vmul.f32 %v495, %v495
      %v624 = vmul.f32 %v496, %v496
      %v625 = vmul.f32 %v497, %v497
      %v626 = vmul.f32 %v498, %v498
      %v627 = vmul.f32 %v499, %v499
      %v628 = vmul.f32 %v500, %v500
      %v629 = vmul.f32 %v501, %v501
      %v630 = vmul.f32 %v502, %v502
      %v631 = vmul.f32 %v503, %v503
      %v632 = vmul.f32 %v504, %v504
      %v633 = vmul.f32 %v505, %v505
      %v634 = vmul.f32 %v506, %v506
      %v635 = vmul.f32 %v507, %v507
      %v636 = vmul.f32 %v508, %v508
      %v637 = vmul.f32 %v509, %v509
      %v638 = vmul.f32 %v510, %v510
      %v639 = vmul.f32 %v511, %v511
      %v640 = vmul.f32 %v512, %v512
      %v641 = vmul.f32 %v513, %v513
      %v642 = vmul.f32 %v514, %v514
      %v643 = vsub.f32 %v515, %v579
      %v644 = vsub.f32 %v516, %v580
      %v645 = vsub.f32 %v517, %v581
      %v646 = vsub.f32 %v518, %v582
      %v647 = vsub.f32 %v519, %v583
      %v648 = vsub.f32 %v520, %v584
      %v649 = vsub.f32 %v521, %v585
      %v650 = vsub.f32 %v522, %v586
      %v651 = vsub.f32 %v523, %v587
      %v652 = vsub.f32 %v524, %v588
      %v653 = vsub.f32 %v525, %v589
      %v654 = vsub.f32 %v526, %v590
      %v655 = vsub.f32 %v527, %v591
      %v656 = vsub.f32 %v528, %v592
      %v657 = vsub.f32 %v529, %v593
      %v658 = vsub.f32 %v530, %v594
      %v659 = vsub.f32 %v531, %v595
      %v660 = vsub.f32 %v532, %v596
      %v661 = vsub.f32 %v533, %v597
      %v662 = vsub.f32 %v534, %v598
      %v663 = vsub.f32 %v535, %v599
      %v664 = vsub.f32 %v536, %v600
      %v665 = vsub.f32 %v537, %v601
      %v666 = vsub.f32 %v538, %v602
      %v667 = vsub.f32 %v539, %v603
      %v668 = vsub.f32 %v540, %v604
      %v669 = vsub.f32 %v541, %v605
      %v670 = vsub.f32 %v542, %v606
      %v671 = vsub.f32 %v543, %v607
      %v672 = vsub.f32 %v544, %v608
      %v673 = vsub.f32 %v545, %v609
      %v674 = vsub.f32 %v546, %v610
      %v675 = vsub.f32 %v547, %v611
      %v676 = vsub.f32 %v548, %v612
      %v677 = vsub.f32 %v549, %v613
      %v678 = vsub.f32 %v550, %v614
      %v679 = vsub.f32 %v551, %v615
      %v680 = vsub.f32 %v552, %v616
      %v681 = vsub.f32 %v553, %v617
      %v682 = vsub.f32 %v554, %v618
      %v683 = vsub.f32 %v555, %v619
      %v684 = vsub.f32 %v556, %v620
      %v685 = vsub.f32 %v557, %v621
      %v686 = vsub.f32 %v558, %v622
      %v687 = vsub.f32 %v559, %v623
      %v688 = vsub.f32 %v560, %v624
      %v689 = vsub.f32 %v561, %v625
      %v690 = vsub.f32 %v562, %v626
      %v691 = vsub.f32 %v563, %v627
      %v692 = vsub.f32 %v564, %v628
      %v693 = vsub.f32 %v565, %v629
      %v694 = vsub.f32 %v566, %v630
      %v695 = vsub.f32 %v567, %v631
      %v696 = vsub.f32 %v568, %v632
      %v697 = vsub.f32 %v569, %v633
      %v698 = vsub.f32 %v570, %v634
      %v699 = vsub.f32 %v571, %v635
      %v700 = vsub.f32 %v572, %v636
      %v701 = vsub.f32 %v573, %v637
      %v702 = vsub.f32 %v574, %v638
      %v703 = vsub.f32 %v575, %v639
      %v704 = vsub.f32 %v576, %v640
      %v705 = vsub.f32 %v577, %v641
      %v706 = vsub.f32 %v578, %v642
      %v707 = vmax.f32 %v643, 0.0
      %v708 = vmax.f32 %v644, 0.0
      %v709 = vmax.f32 %v645, 0.0
      %v710 = vmax.f32 %v646, 0.0
      %v711 = vmax.f32 %v647, 0.0
      %v712 = vmax.f32 %v648, 0.0
      %v713 = vmax.f32 %v649, 0.0
      %v714 = vmax.f32 %v650, 0.0
      %v715 = vmax.f32 %v651, 0.0
      %v716 = vmax.f32 %v652, 0.0
      %v717 = vmax.f32 %v653, 0.0
      %v718 = vmax.f32 %v654, 0.0
      %v719 = vmax.f32 %v655, 0.0
      %v720 = vmax.f32 %v656, 0.0
      %v721 = vmax.f32 %v657, 0.0
      %v722 = vmax.f32 %v658, 0.0
      %v723 = vmax.f32 %v659, 0.0
      %v724 = vmax.f32 %v660, 0.0
      %v725 = vmax.f32 %v661, 0.0
      %v726 = vmax.f32 %v662, 0.0
      %v727 = vmax.f32 %v663, 0.0
      %v728 = vmax.f32 %v664, 0.0
      %v729 = vmax.f32 %v665, 0.0
      %v730 = vmax.f32 %v666, 0.0
      %v731 = vmax.f32 %v667, 0.0
      %v732 = vmax.f32 %v668, 0.0
      %v733 = vmax.f32 %v669, 0.0
      %v734 = vmax.f32 %v670, 0.0
      %v735 = vmax.f32 %v671, 0.0
      %v736 = vmax.f32 %v672, 0.0
      %v737 = vmax.f32 %v673, 0.0
      %v738 = vmax.f32 %v674, 0.0
      %v739 = vmax.f32 %v675, 0.0
      %v740 = vmax.f32 %v676, 0.0
      %v741 = vmax.f32 %v677, 0.0
      %v742 = vmax.f32 %v678, 0.0
      %v743 = vmax.f32 %v679, 0.0
      %v744 = vmax.f32 %v680, 0.0
      %v745 = vmax.f32 %v681, 0.0
      %v746 = vmax.f32 %v682, 0.0
      %v747 = vmax.f32 %v683, 0.0
      %v748 = vmax.f32 %v684, 0.0
      %v749 = vmax.f32 %v685, 0.0
      %v750 = vmax.f32 %v686, 0.0
      %v751 = vmax.f32 %v687, 0.0
      %v752 = vmax.f32 %v688, 0.0
      %v753 = vmax.f32 %v689, 0.0
      %v754 = vmax.f32 %v690, 0.0
      %v755 = vmax.f32 %v691, 0.0
      %v756 = vmax.f32 %v692, 0.0
      %v757 = vmax.f32 %v693, 0.0
      %v758 = vmax.f32 %v694, 0.0
      %v759 = vmax.f32 %v695, 0.0
      %v760 = vmax.f32 %v696, 0.0
      %v761 = vmax.f32 %v697, 0.0
      %v762 = vmax.f32 %v698, 0.0
      %v763 = vmax.f32 %v699, 0.0
      %v764 = vmax.f32 %v700, 0.0
      %v765 = vmax.f32 %v701, 0.0
      %v766 = vmax.f32 %v702, 0.0
      %v767 = vmax.f32 %v703, 0.0
      %v768 = vmax.f32 %v704, 0.0
      %v769 = vmax.f32 %v705, 0.0
      %v770 = vmax.f32 %v706, 0.0
      %v771 = vsub.f32 %v67, %v451
      %v772 = vsub.f32 %v68, %v452
      %v773 = vsub.f32 %v69, %v453
      %v774 = vsub.f32 %v70, %v454
      %v775 = vsub.f32 %v71, %v455
      %v776 = vsub.f32 %v72, %v456
      %v777 = vsub.f32 %v73, %v457
      %v778 = vsub.f32 %v74, %v458
      %v779 = vsub.f32 %v75, %v459
      %v780 = vsub.f32 %v76, %v460
      %v781 = vsub.f32 %v77, %v461
      %v782 = vsub.f32 %v78, %v462
      %v783 = vsub.f32 %v79, %v463
      %v784 = vsub.f32 %v80, %v464
      %v785 = vsub.f32 %v81, %v465
      %v786 = vsub.f32 %v82, %v466
      %v787 = vsub.f32 %v83, %v467
      %v788 = vsub.f32 %v84, %v468
      %v789 = vsub.f32 %v85, %v469
      %v790 = vsub.f32 %v86, %v470
      %v791 = vsub.f32 %v87, %v471
      %v792 = vsub.f32 %v88, %v472
      %v793 = vsub.f32 %v89, %v473
      %v794 = vsub.f32 %v90, %v474
      %v795 = vsub.f32 %v91, %v475
      %v796 = vsub.f32 %v92, %v476
      %v797 = vsub.f32 %v93, %v477
      %v798 = vsub.f32 %v94, %v478
      %v799 = vsub.f32 %v95, %v479
      %v800 = vsub.f32 %v96, %v480
      %v801 = vsub.f32 %v97, %v481
      %v802 = vsub.f32 %v98, %v482
      %v803 = vsub.f32 %v99, %v483
      %v804 = vsub.f32 %v100, %v484
      %v805 = vsub.f32 %v101, %v485
      %v806 = vsub.f32 %v102, %v486
      %v807 = vsub.f32 %v103, %v487
      %v808 = vsub.f32 %v104, %v488
      %v809 = vsub.f32 %v105, %v489
      %v810 = vsub.f32 %v106, %v490
      %v811 = vsub.f32 %v107, %v491
      %v812 = vsub.f32 %v108, %v492
      %v813 = vsub.f32 %v109, %v493
      %v814 = vsub.f32 %v110, %v494
      %v815 = vsub.f32 %v111, %v495
      %v816 = vsub.f32 %v112, %v496
      %v817 = vsub.f32 %v113, %v497
      %v818 = vsub.f32 %v114, %v498
      %v819 = vsub.f32 %v115, %v499
      %v820 = vsub.f32 %v116, %v500
      %v821 = vsub.f32 %v117, %v501
      %v822 = vsub.f32 %v118, %v502
      %v823 = vsub.f32 %v119, %v503
      %v824 = vsub.f32 %v120, %v504
      %v825 = vsub.f32 %v121, %v505
      %v826 = vsub.f32 %v122, %v506
      %v827 = vsub.f32 %v123, %v507
      %v828 = vsub.f32 %v124, %v508
      %v829 = vsub.f32 %v125, %v509
      %v830 = vsub.f32 %v126, %v510
      %v831 = vsub.f32 %v127, %v511
      %v832 = vsub.f32 %v128, %v512
      %v833 = vsub.f32 %v129, %v513
      %v834 = vsub.f32 %v130, %v514
      %v835 = vadd.f32 %v707, 1e-05
      %v836 = vadd.f32 %v708, 1e-05
      %v837 = vadd.f32 %v709, 1e-05
      %v838 = vadd.f32 %v710, 1e-05
      %v839 = vadd.f32 %v711, 1e-05
      %v840 = vadd.f32 %v712, 1e-05
      %v841 = vadd.f32 %v713, 1e-05
      %v842 = vadd.f32 %v714, 1e-05
      %v843 = vadd.f32 %v715, 1e-05
      %v844 = vadd.f32 %v716, 1e-05
      %v845 = vadd.f32 %v717, 1e-05
      %v846 = vadd.f32 %v718, 1e-05
      %v847 = vadd.f32 %v719, 1e-05
      %v848 = vadd.f32 %v720, 1e-05
      %v849 = vadd.f32 %v721, 1e-05
      %v850 = vadd.f32 %v722, 1e-05
      %v851 = vadd.f32 %v723, 1e-05
      %v852 = vadd.f32 %v724, 1e-05
      %v853 = vadd.f32 %v725, 1e-05
      %v854 = vadd.f32 %v726, 1e-05
      %v855 = vadd.f32 %v727, 1e-05
      %v856 = vadd.f32 %v728, 1e-05
      %v857 = vadd.f32 %v729, 1e-05
      %v858 = vadd.f32 %v730, 1e-05
      %v859 = vadd.f32 %v731, 1e-05
      %v860 = vadd.f32 %v732, 1e-05
      %v861 = vadd.f32 %v733, 1e-05
      %v862 = vadd.f32 %v734, 1e-05
      %v863 = vadd.f32 %v735, 1e-05
      %v864 = vadd.f32 %v736, 1e-05
      %v865 = vadd.f32 %v737, 1e-05
      %v866 = vadd.f32 %v738, 1e-05
      %v867 = vadd.f32 %v739, 1e-05
      %v868 = vadd.f32 %v740, 1e-05
      %v869 = vadd.f32 %v741, 1e-05
      %v870 = vadd.f32 %v742, 1e-05
      %v871 = vadd.f32 %v743, 1e-05
      %v872 = vadd.f32 %v744, 1e-05
      %v873 = vadd.f32 %v745, 1e-05
      %v874 = vadd.f32 %v746, 1e-05
      %v875 = vadd.f32 %v747, 1e-05
      %v876 = vadd.f32 %v748, 1e-05
      %v877 = vadd.f32 %v749, 1e-05
      %v878 = vadd.f32 %v750, 1e-05
      %v879 = vadd.f32 %v751, 1e-05
      %v880 = vadd.f32 %v752, 1e-05
      %v881 = vadd.f32 %v753, 1e-05
      %v882 = vadd.f32 %v754, 1e-05
      %v883 = vadd.f32 %v755, 1e-05
      %v884 = vadd.f32 %v756, 1e-05
      %v885 = vadd.f32 %v757, 1e-05
      %v886 = vadd.f32 %v758, 1e-05
      %v887 = vadd.f32 %v759, 1e-05
      %v888 = vadd.f32 %v760, 1e-05
      %v889 = vadd.f32 %v761, 1e-05
      %v890 = vadd.f32 %v762, 1e-05
      %v891 = vadd.f32 %v763, 1e-05
      %v892 = vadd.f32 %v764, 1e-05
      %v893 = vadd.f32 %v765, 1e-05
      %v894 = vadd.f32 %v766, 1e-05
      %v895 = vadd.f32 %v767, 1e-05
      %v896 = vadd.f32 %v768, 1e-05
      %v897 = vadd.f32 %v769, 1e-05
      %v898 = vadd.f32 %v770, 1e-05
      %v899 = vrsqrt.pop %v835
      %v900 = vrsqrt.pop %v836
      %v901 = vrsqrt.pop %v837
      %v902 = vrsqrt.pop %v838
      %v903 = vrsqrt.pop %v839
      %v904 = vrsqrt.pop %v840
      %v905 = vrsqrt.pop %v841
      %v906 = vrsqrt.pop %v842
      %v907 = vrsqrt.pop %v843
      %v908 = vrsqrt.pop %v844
      %v909 = vrsqrt.pop %v845
      %v910 = vrsqrt.pop %v846
      %v911 = vrsqrt.pop %v847
      %v912 = vrsqrt.pop %v848
      %v913 = vrsqrt.pop %v849
      %v914 = vrsqrt.pop %v850
      %v915 = vrsqrt.pop %v851
      %v916 = vrsqrt.pop %v852
      %v917 = vrsqrt.pop %v853
      %v918 = vrsqrt.pop %v854
      %v919 = vrsqrt.pop %v855
      %v920 = vrsqrt.pop %v856
      %v921 = vrsqrt.pop %v857
      %v922 = vrsqrt.pop %v858
      %v923 = vrsqrt.pop %v859
      %v924 = vrsqrt.pop %v860
      %v925 = vrsqrt.pop %v861
      %v926 = vrsqrt.pop %v862
      %v927 = vrsqrt.pop %v863
      %v928 = vrsqrt.pop %v864
      %v929 = vrsqrt.pop %v865
      %v930 = vrsqrt.pop %v866
      %v931 = vrsqrt.pop %v867
      %v932 = vrsqrt.pop %v868
      %v933 = vrsqrt.pop %v869
      %v934 = vrsqrt.pop %v870
      %v935 = vrsqrt.pop %v871
      %v936 = vrsqrt.pop %v872
      %v937 = vrsqrt.pop %v873
      %v938 = vrsqrt.pop %v874
      %v939 = vrsqrt.pop %v875
      %v940 = vrsqrt.pop %v876
      %v941 = vrsqrt.pop %v877
      %v942 = vrsqrt.pop %v878
      %v943 = vrsqrt.pop %v879
      %v944 = vrsqrt.pop %v880
      %v945 = vrsqrt.pop %v881
      %v946 = vrsqrt.pop %v882
      %v947 = vrsqrt.pop %v883
      %v948 = vrsqrt.pop %v884
      %v949 = vrsqrt.pop %v885
      %v950 = vrsqrt.pop %v886
      %v951 = vrsqrt.pop %v887
      %v952 = vrsqrt.pop %v888
      %v953 = vrsqrt.pop %v889
      %v954 = vrsqrt.pop %v890
      %v955 = vrsqrt.pop %v891
      %v956 = vrsqrt.pop %v892
      %v957 = vrsqrt.pop %v893
      %v958 = vrsqrt.pop %v894
      %v959 = vrsqrt.pop %v895
      %v960 = vrsqrt.pop %v896
      %v961 = vrsqrt.pop %v897
      %v962 = vrsqrt.pop %v898
      %v963 = vmul.f32 %v771, %v899
      %v964 = vmul.f32 %v772, %v900
      %v965 = vmul.f32 %v773, %v901
      %v966 = vmul.f32 %v774, %v902
      %v967 = vmul.f32 %v775, %v903
      %v968 = vmul.f32 %v776, %v904
      %v969 = vmul.f32 %v777, %v905
      %v970 = vmul.f32 %v778, %v906
      %v971 = vmul.f32 %v779, %v907
      %v972 = vmul.f32 %v780, %v908
      %v973 = vmul.f32 %v781, %v909
      %v974 = vmul.f32 %v782, %v910
      %v975 = vmul.f32 %v783, %v911
      %v976 = vmul.f32 %v784, %v912
      %v977 = vmul.f32 %v785, %v913
      %v978 = vmul.f32 %v786, %v914
      %v979 = vmul.f32 %v787, %v915
      %v980 = vmul.f32 %v788, %v916
      %v981 = vmul.f32 %v789, %v917
      %v982 = vmul.f32 %v790, %v918
      %v983 = vmul.f32 %v791, %v919
      %v984 = vmul.f32 %v792, %v920
      %v985 = vmul.f32 %v793, %v921
      %v986 = vmul.f32 %v794, %v922
      %v987 = vmul.f32 %v795, %v923
      %v988 = vmul.f32 %v796, %v924
      %v989 = vmul.f32 %v797, %v925
      %v990 = vmul.f32 %v798, %v926
      %v991 = vmul.f32 %v799, %v927
      %v992 = vmul.f32 %v800, %v928
      %v993 = vmul.f32 %v801, %v929
      %v994 = vmul.f32 %v802, %v930
      %v995 = vmul.f32 %v803, %v931
      %v996 = vmul.f32 %v804, %v932
      %v997 = vmul.f32 %v805, %v933
      %v998 = vmul.f32 %v806, %v934
      %v999 = vmul.f32 %v807, %v935
      %v1000 = vmul.f32 %v808, %v936
      %v1001 = vmul.f32 %v809, %v937
      %v1002 = vmul.f32 %v810, %v938
      %v1003 = vmul.f32 %v811, %v939
      %v1004 = vmul.f32 %v812, %v940
      %v1005 = vmul.f32 %v813, %v941
      %v1006 = vmul.f32 %v814, %v942
      %v1007 = vmul.f32 %v815, %v943
      %v1008 = vmul.f32 %v816, %v944
      %v1009 = vmul.f32 %v817, %v945
      %v1010 = vmul.f32 %v818, %v946
      %v1011 = vmul.f32 %v819, %v947
      %v1012 = vmul.f32 %v820, %v948
      %v1013 = vmul.f32 %v821, %v949
      %v1014 = vmul.f32 %v822, %v950
      %v1015 = vmul.f32 %v823, %v951
      %v1016 = vmul.f32 %v824, %v952
      %v1017 = vmul.f32 %v825, %v953
      %v1018 = vmul.f32 %v826, %v954
      %v1019 = vmul.f32 %v827, %v955
      %v1020 = vmul.f32 %v828, %v956
      %v1021 = vmul.f32 %v829, %v957
      %v1022 = vmul.f32 %v830, %v958
      %v1023 = vmul.f32 %v831, %v959
      %v1024 = vmul.f32 %v832, %v960
      %v1025 = vmul.f32 %v833, %v961
      %v1026 = vmul.f32 %v834, %v962
      %v1027 = vpack.c.bf16 %v964, %v963
      %v1028 = vpack.c.bf16 %v966, %v965
      %v1029 = vpack.c.bf16 %v968, %v967
      %v1030 = vpack.c.bf16 %v970, %v969
      %v1031 = vpack.c.bf16 %v972, %v971
      %v1032 = vpack.c.bf16 %v974, %v973
      %v1033 = vpack.c.bf16 %v976, %v975
      %v1034 = vpack.c.bf16 %v978, %v977
      %v1035 = vpack.c.bf16 %v980, %v979
      %v1036 = vpack.c.bf16 %v982, %v981
      %v1037 = vpack.c.bf16 %v984, %v983
      %v1038 = vpack.c.bf16 %v986, %v985
      %v1039 = vpack.c.bf16 %v988, %v987
      %v1040 = vpack.c.bf16 %v990, %v989
      %v1041 = vpack.c.bf16 %v992, %v991
      %v1042 = vpack.c.bf16 %v994, %v993
      %v1043 = vpack.c.bf16 %v996, %v995
      %v1044 = vpack.c.bf16 %v998, %v997
      %v1045 = vpack.c.bf16 %v1000, %v999
      %v1046 = vpack.c.bf16 %v1002, %v1001
      %v1047 = vpack.c.bf16 %v1004, %v1003
      %v1048 = vpack.c.bf16 %v1006, %v1005
      %v1049 = vpack.c.bf16 %v1008, %v1007
      %v1050 = vpack.c.bf16 %v1010, %v1009
      %v1051 = vpack.c.bf16 %v1012, %v1011
      %v1052 = vpack.c.bf16 %v1014, %v1013
      %v1053 = vpack.c.bf16 %v1016, %v1015
      %v1054 = vpack.c.bf16 %v1018, %v1017
      %v1055 = vpack.c.bf16 %v1020, %v1019
      %v1056 = vpack.c.bf16 %v1022, %v1021
      %v1057 = vpack.c.bf16 %v1024, %v1023
      %v1058 = vpack.c.bf16 %v1026, %v1025
      %v1091 = vunpack.c.l.b16 %v1027
      %v1092 = vunpack.c.h.b16 %v1027
      %v1093 = vunpack.c.l.b16 %v1028
      %v1094 = vunpack.c.h.b16 %v1028
      %v1095 = vunpack.c.l.b16 %v1029
      %v1096 = vunpack.c.h.b16 %v1029
      %v1097 = vunpack.c.l.b16 %v1030
      %v1098 = vunpack.c.h.b16 %v1030
      %v1099 = vunpack.c.l.b16 %v1031
      %v1100 = vunpack.c.h.b16 %v1031
      %v1101 = vunpack.c.l.b16 %v1032
      %v1102 = vunpack.c.h.b16 %v1032
      %v1103 = vunpack.c.l.b16 %v1033
      %v1104 = vunpack.c.h.b16 %v1033
      %v1105 = vunpack.c.l.b16 %v1034
      %v1106 = vunpack.c.h.b16 %v1034
      %v1107 = vunpack.c.l.b16 %v1035
      %v1108 = vunpack.c.h.b16 %v1035
      %v1109 = vunpack.c.l.b16 %v1036
      %v1110 = vunpack.c.h.b16 %v1036
      %v1111 = vunpack.c.l.b16 %v1037
      %v1112 = vunpack.c.h.b16 %v1037
      %v1113 = vunpack.c.l.b16 %v1038
      %v1114 = vunpack.c.h.b16 %v1038
      %v1115 = vunpack.c.l.b16 %v1039
      %v1116 = vunpack.c.h.b16 %v1039
      %v1117 = vunpack.c.l.b16 %v1040
      %v1118 = vunpack.c.h.b16 %v1040
      %v1119 = vunpack.c.l.b16 %v1041
      %v1120 = vunpack.c.h.b16 %v1041
      %v1121 = vunpack.c.l.b16 %v1042
      %v1122 = vunpack.c.h.b16 %v1042
      %v1123 = vunpack.c.l.b16 %v1043
      %v1124 = vunpack.c.h.b16 %v1043
      %v1125 = vunpack.c.l.b16 %v1044
      %v1126 = vunpack.c.h.b16 %v1044
      %v1127 = vunpack.c.l.b16 %v1045
      %v1128 = vunpack.c.h.b16 %v1045
      %v1129 = vunpack.c.l.b16 %v1046
      %v1130 = vunpack.c.h.b16 %v1046
      %v1131 = vunpack.c.l.b16 %v1047
      %v1132 = vunpack.c.h.b16 %v1047
      %v1133 = vunpack.c.l.b16 %v1048
      %v1134 = vunpack.c.h.b16 %v1048
      %v1135 = vunpack.c.l.b16 %v1049
      %v1136 = vunpack.c.h.b16 %v1049
      %v1137 = vunpack.c.l.b16 %v1050
      %v1138 = vunpack.c.h.b16 %v1050
      %v1139 = vunpack.c.l.b16 %v1051
      %v1140 = vunpack.c.h.b16 %v1051
      %v1141 = vunpack.c.l.b16 %v1052
      %v1142 = vunpack.c.h.b16 %v1052
      %v1143 = vunpack.c.l.b16 %v1053
      %v1144 = vunpack.c.h.b16 %v1053
      %v1145 = vunpack.c.l.b16 %v1054
      %v1146 = vunpack.c.h.b16 %v1054
      %v1147 = vunpack.c.l.b16 %v1055
      %v1148 = vunpack.c.h.b16 %v1055
      %v1149 = vunpack.c.l.b16 %v1056
      %v1150 = vunpack.c.h.b16 %v1056
      %v1151 = vunpack.c.l.b16 %v1057
      %v1152 = vunpack.c.h.b16 %v1057
      %v1153 = vunpack.c.l.b16 %v1058
      %v1154 = vunpack.c.h.b16 %v1058
      %v1155 = vpack.c.b16 %v1091, %v1091
      %v1156 = vpack.c.b16 %v1092, %v1092
      %v1157 = vpack.c.b16 %v1093, %v1093
      %v1158 = vpack.c.b16 %v1094, %v1094
      %v1159 = vpack.c.b16 %v1095, %v1095
      %v1160 = vpack.c.b16 %v1096, %v1096
      %v1161 = vpack.c.b16 %v1097, %v1097
      %v1162 = vpack.c.b16 %v1098, %v1098
      %v1163 = vpack.c.b16 %v1099, %v1099
      %v1164 = vpack.c.b16 %v1100, %v1100
      %v1165 = vpack.c.b16 %v1101, %v1101
      %v1166 = vpack.c.b16 %v1102, %v1102
      %v1167 = vpack.c.b16 %v1103, %v1103
      %v1168 = vpack.c.b16 %v1104, %v1104
      %v1169 = vpack.c.b16 %v1105, %v1105
      %v1170 = vpack.c.b16 %v1106, %v1106
      %v1171 = vpack.c.b16 %v1107, %v1107
      %v1172 = vpack.c.b16 %v1108, %v1108
      %v1173 = vpack.c.b16 %v1109, %v1109
      %v1174 = vpack.c.b16 %v1110, %v1110
      %v1175 = vpack.c.b16 %v1111, %v1111
      %v1176 = vpack.c.b16 %v1112, %v1112
      %v1177 = vpack.c.b16 %v1113, %v1113
      %v1178 = vpack.c.b16 %v1114, %v1114
      %v1179 = vpack.c.b16 %v1115, %v1115
      %v1180 = vpack.c.b16 %v1116, %v1116
      %v1181 = vpack.c.b16 %v1117, %v1117
      %v1182 = vpack.c.b16 %v1118, %v1118
      %v1183 = vpack.c.b16 %v1119, %v1119
      %v1184 = vpack.c.b16 %v1120, %v1120
      %v1185 = vpack.c.b16 %v1121, %v1121
      %v1186 = vpack.c.b16 %v1122, %v1122
      %v1187 = vpack.c.b16 %v1123, %v1123
      %v1188 = vpack.c.b16 %v1124, %v1124
      %v1189 = vpack.c.b16 %v1125, %v1125
      %v1190 = vpack.c.b16 %v1126, %v1126
      %v1191 = vpack.c.b16 %v1127, %v1127
      %v1192 = vpack.c.b16 %v1128, %v1128
      %v1193 = vpack.c.b16 %v1129, %v1129
      %v1194 = vpack.c.b16 %v1130, %v1130
      %v1195 = vpack.c.b16 %v1131, %v1131
      %v1196 = vpack.c.b16 %v1132, %v1132
      %v1197 = vpack.c.b16 %v1133, %v1133
      %v1198 = vpack.c.b16 %v1134, %v1134
      %v1199 = vpack.c.b16 %v1135, %v1135
      %v1200 = vpack.c.b16 %v1136, %v1136
      %v1201 = vpack.c.b16 %v1137, %v1137
      %v1202 = vpack.c.b16 %v1138, %v1138
      %v1203 = vpack.c.b16 %v1139, %v1139
      %v1204 = vpack.c.b16 %v1140, %v1140
      %v1205 = vpack.c.b16 %v1141, %v1141
      %v1206 = vpack.c.b16 %v1142, %v1142
      %v1207 = vpack.c.b16 %v1143, %v1143
      %v1208 = vpack.c.b16 %v1144, %v1144
      %v1209 = vpack.c.b16 %v1145, %v1145
      %v1210 = vpack.c.b16 %v1146, %v1146
      %v1211 = vpack.c.b16 %v1147, %v1147
      %v1212 = vpack.c.b16 %v1148, %v1148
      %v1213 = vpack.c.b16 %v1149, %v1149
      %v1214 = vpack.c.b16 %v1150, %v1150
      %v1215 = vpack.c.b16 %v1151, %v1151
      %v1216 = vpack.c.b16 %v1152, %v1152
      %v1217 = vpack.c.b16 %v1153, %v1153
      %v1218 = vpack.c.b16 %v1154, %v1154
      %1283 = vst [vmem:[#allocation2] sm:$0xf] %v1155
      %1284 = vst [vmem:[#allocation2 + $0x4] sm:$0xf] %v1156
      %1285 = vst [vmem:[#allocation2 + $0x8] sm:$0xf] %v1157
      %1286 = vst [vmem:[#allocation2 + $0xc] sm:$0xf] %v1158
      %1287 = vst [vmem:[#allocation2 + $0x10] sm:$0xf] %v1159
      %1288 = vst [vmem:[#allocation2 + $0x14] sm:$0xf] %v1160
      %1289 = vst [vmem:[#allocation2 + $0x18] sm:$0xf] %v1161
      %1290 = vst [vmem:[#allocation2 + $0x1c] sm:$0xf] %v1162
      %1291 = vst [vmem:[#allocation2 + $0x20] sm:$0xf] %v1163
      %1292 = vst [vmem:[#allocation2 + $0x24] sm:$0xf] %v1164
      %1293 = vst [vmem:[#allocation2 + $0x28] sm:$0xf] %v1165
      %1294 = vst [vmem:[#allocation2 + $0x2c] sm:$0xf] %v1166
      %1295 = vst [vmem:[#allocation2 + $0x30] sm:$0xf] %v1167
      %1296 = vst [vmem:[#allocation2 + $0x34] sm:$0xf] %v1168
      %1297 = vst [vmem:[#allocation2 + $0x38] sm:$0xf] %v1169
      %1298 = vst [vmem:[#allocation2 + $0x3c] sm:$0xf] %v1170
      %1299 = vst [vmem:[#allocation2 + $0x40] sm:$0xf] %v1171
      %1300 = vst [vmem:[#allocation2 + $0x44] sm:$0xf] %v1172
      %1301 = vst [vmem:[#allocation2 + $0x48] sm:$0xf] %v1173
      %1302 = vst [vmem:[#allocation2 + $0x4c] sm:$0xf] %v1174
      %1303 = vst [vmem:[#allocation2 + $0x50] sm:$0xf] %v1175
      %1304 = vst [vmem:[#allocation2 + $0x54] sm:$0xf] %v1176
      %1305 = vst [vmem:[#allocation2 + $0x58] sm:$0xf] %v1177
      %1306 = vst [vmem:[#allocation2 + $0x5c] sm:$0xf] %v1178
      %1307 = vst [vmem:[#allocation2 + $0x60] sm:$0xf] %v1179
      %1308 = vst [vmem:[#allocation2 + $0x64] sm:$0xf] %v1180
      %1309 = vst [vmem:[#allocation2 + $0x68] sm:$0xf] %v1181
      %1310 = vst [vmem:[#allocation2 + $0x6c] sm:$0xf] %v1182
      %1311 = vst [vmem:[#allocation2 + $0x70] sm:$0xf] %v1183
      %1312 = vst [vmem:[#allocation2 + $0x74] sm:$0xf] %v1184
      %1313 = vst [vmem:[#allocation2 + $0x78] sm:$0xf] %v1185
      %1314 = vst [vmem:[#allocation2 + $0x7c] sm:$0xf] %v1186
      %1315 = vst [vmem:[#allocation2 + $0x80] sm:$0xf] %v1187
      %1316 = vst [vmem:[#allocation2 + $0x84] sm:$0xf] %v1188
      %1317 = vst [vmem:[#allocation2 + $0x88] sm:$0xf] %v1189
      %1318 = vst [vmem:[#allocation2 + $0x8c] sm:$0xf] %v1190
      %1319 = vst [vmem:[#allocation2 + $0x90] sm:$0xf] %v1191
      %1320 = vst [vmem:[#allocation2 + $0x94] sm:$0xf] %v1192
      %1321 = vst [vmem:[#allocation2 + $0x98] sm:$0xf] %v1193
      %1322 = vst [vmem:[#allocation2 + $0x9c] sm:$0xf] %v1194
      %1323 = vst [vmem:[#allocation2 + $0xa0] sm:$0xf] %v1195
      %1324 = vst [vmem:[#allocation2 + $0xa4] sm:$0xf] %v1196
      %1325 = vst [vmem:[#allocation2 + $0xa8] sm:$0xf] %v1197
      %1326 = vst [vmem:[#allocation2 + $0xac] sm:$0xf] %v1198
      %1327 = vst [vmem:[#allocation2 + $0xb0] sm:$0xf] %v1199
      %1328 = vst [vmem:[#allocation2 + $0xb4] sm:$0xf] %v1200
      %1329 = vst [vmem:[#allocation2 + $0xb8] sm:$0xf] %v1201
      %1330 = vst [vmem:[#allocation2 + $0xbc] sm:$0xf] %v1202
      %1331 = vst [vmem:[#allocation2 + $0xc0] sm:$0xf] %v1203
      %1332 = vst [vmem:[#allocation2 + $0xc4] sm:$0xf] %v1204
      %1333 = vst [vmem:[#allocation2 + $0xc8] sm:$0xf] %v1205
      %1334 = vst [vmem:[#allocation2 + $0xcc] sm:$0xf] %v1206
      %1335 = vst [vmem:[#allocation2 + $0xd0] sm:$0xf] %v1207
      %1336 = vst [vmem:[#allocation2 + $0xd4] sm:$0xf] %v1208
      %1337 = vst [vmem:[#allocation2 + $0xd8] sm:$0xf] %v1209
      %1338 = vst [vmem:[#allocation2 + $0xdc] sm:$0xf] %v1210
      %1339 = vst [vmem:[#allocation2 + $0xe0] sm:$0xf] %v1211
      %1340 = vst [vmem:[#allocation2 + $0xe4] sm:$0xf] %v1212
      %1341 = vst [vmem:[#allocation2 + $0xe8] sm:$0xf] %v1213
      %1342 = vst [vmem:[#allocation2 + $0xec] sm:$0xf] %v1214
      %1343 = vst [vmem:[#allocation2 + $0xf0] sm:$0xf] %v1215
      %1344 = vst [vmem:[#allocation2 + $0xf4] sm:$0xf] %v1216
      %1345 = vst [vmem:[#allocation2 + $0xf8] sm:$0xf] %v1217
      %1346 = vst [vmem:[#allocation2 + $0xfc] sm:$0xf] %v1218
      %1347 = vst [vmem:[#allocation3] sm:$0xff] 0.0
      %1348 = vst [vmem:[#allocation3 + $0x8] sm:$0xff] 0.0
      %1349 = vst [vmem:[#allocation3 + $0x10] sm:$0xff] 0.0
      %1350 = vst [vmem:[#allocation3 + $0x18] sm:$0xff] 0.0
      %1351 = vst [vmem:[#allocation3 + $0x20] sm:$0xff] 0.0
      %1352 = vst [vmem:[#allocation3 + $0x28] sm:$0xff] 0.0
      %1353 = vst [vmem:[#allocation3 + $0x30] sm:$0xff] 0.0
      %1354 = vst [vmem:[#allocation3 + $0x38] sm:$0xff] 0.0
      %1355 = vst [vmem:[#allocation3 + $0x40] sm:$0xff] 0.0
      %1356 = vst [vmem:[#allocation3 + $0x48] sm:$0xff] 0.0
      %1357 = vst [vmem:[#allocation3 + $0x50] sm:$0xff] 0.0
      %1358 = vst [vmem:[#allocation3 + $0x58] sm:$0xff] 0.0
      %1359 = vst [vmem:[#allocation3 + $0x60] sm:$0xff] 0.0
      %1360 = vst [vmem:[#allocation3 + $0x68] sm:$0xff] 0.0
      %1361 = vst [vmem:[#allocation3 + $0x70] sm:$0xff] 0.0
      %1362 = vst [vmem:[#allocation3 + $0x78] sm:$0xff] 0.0
      %1363 = vst [vmem:[#allocation3 + $0x80] sm:$0xff] 0.0
      %1364 = vst [vmem:[#allocation3 + $0x88] sm:$0xff] 0.0
      %1365 = vst [vmem:[#allocation3 + $0x90] sm:$0xff] 0.0
      %1366 = vst [vmem:[#allocation3 + $0x98] sm:$0xff] 0.0
      %1367 = vst [vmem:[#allocation3 + $0xa0] sm:$0xff] 0.0
      %1368 = vst [vmem:[#allocation3 + $0xa8] sm:$0xff] 0.0
      %1369 = vst [vmem:[#allocation3 + $0xb0] sm:$0xff] 0.0
      %1370 = vst [vmem:[#allocation3 + $0xb8] sm:$0xff] 0.0
      %1371 = vst [vmem:[#allocation3 + $0xc0] sm:$0xff] 0.0
      %1372 = vst [vmem:[#allocation3 + $0xc8] sm:$0xff] 0.0
      %1373 = vst [vmem:[#allocation3 + $0xd0] sm:$0xff] 0.0
      %1374 = vst [vmem:[#allocation3 + $0xd8] sm:$0xff] 0.0
      %1375 = vst [vmem:[#allocation3 + $0xe0] sm:$0xff] 0.0
      %1376 = vst [vmem:[#allocation3 + $0xe8] sm:$0xff] 0.0
      %1377 = vst [vmem:[#allocation3 + $0xf0] sm:$0xff] 0.0
      %1378 = vst [vmem:[#allocation3 + $0xf8] sm:$0xff] 0.0
      %1379 = vst [vmem:[#allocation3 + $0x100] sm:$0xff] 0.0
      %1380 = vst [vmem:[#allocation3 + $0x108] sm:$0xff] 0.0
      %1381 = vst [vmem:[#allocation3 + $0x110] sm:$0xff] 0.0
      %1382 = vst [vmem:[#allocation3 + $0x118] sm:$0xff] 0.0
      %1383 = vst [vmem:[#allocation3 + $0x120] sm:$0xff] 0.0
      %1384 = vst [vmem:[#allocation3 + $0x128] sm:$0xff] 0.0
      %1385 = vst [vmem:[#allocation3 + $0x130] sm:$0xff] 0.0
      %1386 = vst [vmem:[#allocation3 + $0x138] sm:$0xff] 0.0
      %1387 = vst [vmem:[#allocation3 + $0x140] sm:$0xff] 0.0
      %1388 = vst [vmem:[#allocation3 + $0x148] sm:$0xff] 0.0
      %1389 = vst [vmem:[#allocation3 + $0x150] sm:$0xff] 0.0
      %1390 = vst [vmem:[#allocation3 + $0x158] sm:$0xff] 0.0
      %1391 = vst [vmem:[#allocation3 + $0x160] sm:$0xff] 0.0
      %1392 = vst [vmem:[#allocation3 + $0x168] sm:$0xff] 0.0
      %1393 = vst [vmem:[#allocation3 + $0x170] sm:$0xff] 0.0
      %1394 = vst [vmem:[#allocation3 + $0x178] sm:$0xff] 0.0
      %1395 = vst [vmem:[#allocation3 + $0x180] sm:$0xff] 0.0
      %1396 = vst [vmem:[#allocation3 + $0x188] sm:$0xff] 0.0
      %1397 = vst [vmem:[#allocation3 + $0x190] sm:$0xff] 0.0
      %1398 = vst [vmem:[#allocation3 + $0x198] sm:$0xff] 0.0
      %1399 = vst [vmem:[#allocation3 + $0x1a0] sm:$0xff] 0.0
      %1400 = vst [vmem:[#allocation3 + $0x1a8] sm:$0xff] 0.0
      %1401 = vst [vmem:[#allocation3 + $0x1b0] sm:$0xff] 0.0
      %1402 = vst [vmem:[#allocation3 + $0x1b8] sm:$0xff] 0.0
      %1403 = vst [vmem:[#allocation3 + $0x1c0] sm:$0xff] 0.0
      %1404 = vst [vmem:[#allocation3 + $0x1c8] sm:$0xff] 0.0
      %1405 = vst [vmem:[#allocation3 + $0x1d0] sm:$0xff] 0.0
      %1406 = vst [vmem:[#allocation3 + $0x1d8] sm:$0xff] 0.0
      %1407 = vst [vmem:[#allocation3 + $0x1e0] sm:$0xff] 0.0
      %1408 = vst [vmem:[#allocation3 + $0x1e8] sm:$0xff] 0.0
      %1409 = vst [vmem:[#allocation3 + $0x1f0] sm:$0xff] 0.0
      %1410 = vst [vmem:[#allocation3 + $0x1f8] sm:$0xff] 0.0
    $region37: #{tpu_custom_call.1} parent=1 // pred_fallthru
      _
    %v1411 = vld [vmem:[#allocation2] sm:$0xf]
    %v1412 = vld [vmem:[#allocation2 + $0x4] sm:$0xf]
    %v1413 = vld [vmem:[#allocation2 + $0x8] sm:$0xf]
    %v1414 = vld [vmem:[#allocation2 + $0xc] sm:$0xf]
    %v1415 = vld [vmem:[#allocation2 + $0x10] sm:$0xf]
    %v1416 = vld [vmem:[#allocation2 + $0x14] sm:$0xf]
    %v1417 = vld [vmem:[#allocation2 + $0x18] sm:$0xf]
    %v1418 = vld [vmem:[#allocation2 + $0x1c] sm:$0xf]
    %v1419 = vld [vmem:[#allocation2 + $0x20] sm:$0xf]
    %v1420 = vld [vmem:[#allocation2 + $0x24] sm:$0xf]
    %v1421 = vld [vmem:[#allocation2 + $0x28] sm:$0xf]
    %v1422 = vld [vmem:[#allocation2 + $0x2c] sm:$0xf]
    %v1423 = vld [vmem:[#allocation2 + $0x30] sm:$0xf]
    %v1424 = vld [vmem:[#allocation2 + $0x34] sm:$0xf]
    %v1425 = vld [vmem:[#allocation2 + $0x38] sm:$0xf]
    %v1426 = vld [vmem:[#allocation2 + $0x3c] sm:$0xf]
    %v1427 = vld [vmem:[#allocation2 + $0x40] sm:$0xf]
    %v1428 = vld [vmem:[#allocation2 + $0x44] sm:$0xf]
    %v1429 = vld [vmem:[#allocation2 + $0x48] sm:$0xf]
    %v1430 = vld [vmem:[#allocation2 + $0x4c] sm:$0xf]
    %v1431 = vld [vmem:[#allocation2 + $0x50] sm:$0xf]
    %v1432 = vld [vmem:[#allocation2 + $0x54] sm:$0xf]
    %v1433 = vld [vmem:[#allocation2 + $0x58] sm:$0xf]
    %v1434 = vld [vmem:[#allocation2 + $0x5c] sm:$0xf]
    %v1435 = vld [vmem:[#allocation2 + $0x60] sm:$0xf]
    %v1436 = vld [vmem:[#allocation2 + $0x64] sm:$0xf]
    %v1437 = vld [vmem:[#allocation2 + $0x68] sm:$0xf]
    %v1438 = vld [vmem:[#allocation2 + $0x6c] sm:$0xf]
    %v1439 = vld [vmem:[#allocation2 + $0x70] sm:$0xf]
    %v1440 = vld [vmem:[#allocation2 + $0x74] sm:$0xf]
    %v1441 = vld [vmem:[#allocation2 + $0x78] sm:$0xf]
    %v1442 = vld [vmem:[#allocation2 + $0x7c] sm:$0xf]
    %v1443 = vld [vmem:[#allocation2 + $0x80] sm:$0xf]
    %v1444 = vld [vmem:[#allocation2 + $0x84] sm:$0xf]
    %v1445 = vld [vmem:[#allocation2 + $0x88] sm:$0xf]
    %v1446 = vld [vmem:[#allocation2 + $0x8c] sm:$0xf]
    %v1447 = vld [vmem:[#allocation2 + $0x90] sm:$0xf]
    %v1448 = vld [vmem:[#allocation2 + $0x94] sm:$0xf]
    %v1449 = vld [vmem:[#allocation2 + $0x98] sm:$0xf]
    %v1450 = vld [vmem:[#allocation2 + $0x9c] sm:$0xf]
    %v1451 = vld [vmem:[#allocation2 + $0xa0] sm:$0xf]
    %v1452 = vld [vmem:[#allocation2 + $0xa4] sm:$0xf]
    %v1453 = vld [vmem:[#allocation2 + $0xa8] sm:$0xf]
    %v1454 = vld [vmem:[#allocation2 + $0xac] sm:$0xf]
    %v1455 = vld [vmem:[#allocation2 + $0xb0] sm:$0xf]
    %v1456 = vld [vmem:[#allocation2 + $0xb4] sm:$0xf]
    %v1457 = vld [vmem:[#allocation2 + $0xb8] sm:$0xf]
    %v1458 = vld [vmem:[#allocation2 + $0xbc] sm:$0xf]
    %v1459 = vld [vmem:[#allocation2 + $0xc0] sm:$0xf]
    %v1460 = vld [vmem:[#allocation2 + $0xc4] sm:$0xf]
    %v1461 = vld [vmem:[#allocation2 + $0xc8] sm:$0xf]
    %v1462 = vld [vmem:[#allocation2 + $0xcc] sm:$0xf]
    %v1463 = vld [vmem:[#allocation2 + $0xd0] sm:$0xf]
    %v1464 = vld [vmem:[#allocation2 + $0xd4] sm:$0xf]
    %v1465 = vld [vmem:[#allocation2 + $0xd8] sm:$0xf]
    %v1466 = vld [vmem:[#allocation2 + $0xdc] sm:$0xf]
    %v1467 = vld [vmem:[#allocation2 + $0xe0] sm:$0xf]
    %v1468 = vld [vmem:[#allocation2 + $0xe4] sm:$0xf]
    %v1469 = vld [vmem:[#allocation2 + $0xe8] sm:$0xf]
    %v1470 = vld [vmem:[#allocation2 + $0xec] sm:$0xf]
    %v1471 = vld [vmem:[#allocation2 + $0xf0] sm:$0xf]
    %v1472 = vld [vmem:[#allocation2 + $0xf4] sm:$0xf]
    %v1473 = vld [vmem:[#allocation2 + $0xf8] sm:$0xf]
    %v1474 = vld [vmem:[#allocation2 + $0xfc] sm:$0xf]
    %v1475 = vld [vmem:[#allocation7] sm:$0xff]
    %v1476 = vld [vmem:[#allocation7 + $0x8] sm:$0xff]
    %v1477 = vld [vmem:[#allocation7 + $0x10] sm:$0xff]
    %v1478 = vld [vmem:[#allocation7 + $0x18] sm:$0xff]
    %v1479 = vld [vmem:[#allocation7 + $0x20] sm:$0xff]
    %v1480 = vld [vmem:[#allocation7 + $0x28] sm:$0xff]
    %v1481 = vld [vmem:[#allocation7 + $0x30] sm:$0xff]
    %v1482 = vld [vmem:[#allocation7 + $0x38] sm:$0xff]
    %v1483 = vld [vmem:[#allocation7 + $0x40] sm:$0xff]
    %v1484 = vld [vmem:[#allocation7 + $0x48] sm:$0xff]
    %v1485 = vld [vmem:[#allocation7 + $0x50] sm:$0xff]
    %v1486 = vld [vmem:[#allocation7 + $0x58] sm:$0xff]
    %v1487 = vld [vmem:[#allocation7 + $0x60] sm:$0xff]
    %v1488 = vld [vmem:[#allocation7 + $0x68] sm:$0xff]
    %v1489 = vld [vmem:[#allocation7 + $0x70] sm:$0xff]
    %v1490 = vld [vmem:[#allocation7 + $0x78] sm:$0xff]
    %v1491 = vld [vmem:[%s2] sm:$0x3]
    %v1493 = vlaneseq
    %v1494 = vshrl.u32 %v1493, 7
    %v1495 = vsub.s32 0, %v1494
    %v1496 = vrot.slane %v1491, %v1495
    %v1497 = vlaneseq
    %v1498 = vshrl.u32 %v1497, 7
    %v1499 = vsub.s32 1, %v1498
    %v1500 = vrot.slane %v1491, %v1499
    %v1567 = vunpack.c.l.b16 %v1411
    %v1568 = vunpack.c.l.b16 %v1412
    %v1569 = vunpack.c.l.b16 %v1413
    %v1570 = vunpack.c.l.b16 %v1414
    %v1571 = vunpack.c.l.b16 %v1415
    %v1572 = vunpack.c.l.b16 %v1416
    %v1573 = vunpack.c.l.b16 %v1417
    %v1574 = vunpack.c.l.b16 %v1418
    %v1575 = vunpack.c.l.b16 %v1419
    %v1576 = vunpack.c.l.b16 %v1420
    %v1577 = vunpack.c.l.b16 %v1421
    %v1578 = vunpack.c.l.b16 %v1422
    %v1579 = vunpack.c.l.b16 %v1423
    %v1580 = vunpack.c.l.b16 %v1424
    %v1581 = vunpack.c.l.b16 %v1425
    %v1582 = vunpack.c.l.b16 %v1426
    %v1583 = vunpack.c.l.b16 %v1427
    %v1584 = vunpack.c.l.b16 %v1428
    %v1585 = vunpack.c.l.b16 %v1429
    %v1586 = vunpack.c.l.b16 %v1430
    %v1587 = vunpack.c.l.b16 %v1431
    %v1588 = vunpack.c.l.b16 %v1432
    %v1589 = vunpack.c.l.b16 %v1433
    %v1590 = vunpack.c.l.b16 %v1434
    %v1591 = vunpack.c.l.b16 %v1435
    %v1592 = vunpack.c.l.b16 %v1436
    %v1593 = vunpack.c.l.b16 %v1437
    %v1594 = vunpack.c.l.b16 %v1438
    %v1595 = vunpack.c.l.b16 %v1439
    %v1596 = vunpack.c.l.b16 %v1440
    %v1597 = vunpack.c.l.b16 %v1441
    %v1598 = vunpack.c.l.b16 %v1442
    %v1599 = vunpack.c.l.b16 %v1443
    %v1600 = vunpack.c.l.b16 %v1444
    %v1601 = vunpack.c.l.b16 %v1445
    %v1602 = vunpack.c.l.b16 %v1446
    %v1603 = vunpack.c.l.b16 %v1447
    %v1604 = vunpack.c.l.b16 %v1448
    %v1605 = vunpack.c.l.b16 %v1449
    %v1606 = vunpack.c.l.b16 %v1450
    %v1607 = vunpack.c.l.b16 %v1451
    %v1608 = vunpack.c.l.b16 %v1452
    %v1609 = vunpack.c.l.b16 %v1453
    %v1610 = vunpack.c.l.b16 %v1454
    %v1611 = vunpack.c.l.b16 %v1455
    %v1612 = vunpack.c.l.b16 %v1456
    %v1613 = vunpack.c.l.b16 %v1457
    %v1614 = vunpack.c.l.b16 %v1458
    %v1615 = vunpack.c.l.b16 %v1459
    %v1616 = vunpack.c.l.b16 %v1460
    %v1617 = vunpack.c.l.b16 %v1461
    %v1618 = vunpack.c.l.b16 %v1462
    %v1619 = vunpack.c.l.b16 %v1463
    %v1620 = vunpack.c.l.b16 %v1464
    %v1621 = vunpack.c.l.b16 %v1465
    %v1622 = vunpack.c.l.b16 %v1466
    %v1623 = vunpack.c.l.b16 %v1467
    %v1624 = vunpack.c.l.b16 %v1468
    %v1625 = vunpack.c.l.b16 %v1469
    %v1626 = vunpack.c.l.b16 %v1470
    %v1627 = vunpack.c.l.b16 %v1471
    %v1628 = vunpack.c.l.b16 %v1472
    %v1629 = vunpack.c.l.b16 %v1473
    %v1630 = vunpack.c.l.b16 %v1474
    %v1631 = vpack.c.b16 %v1568, %v1567
    %v1632 = vpack.c.b16 %v1570, %v1569
    %v1633 = vpack.c.b16 %v1572, %v1571
    %v1634 = vpack.c.b16 %v1574, %v1573
    %v1635 = vpack.c.b16 %v1576, %v1575
    %v1636 = vpack.c.b16 %v1578, %v1577
    %v1637 = vpack.c.b16 %v1580, %v1579
    %v1638 = vpack.c.b16 %v1582, %v1581
    %v1639 = vpack.c.b16 %v1584, %v1583
    %v1640 = vpack.c.b16 %v1586, %v1585
    %v1641 = vpack.c.b16 %v1588, %v1587
    %v1642 = vpack.c.b16 %v1590, %v1589
    %v1643 = vpack.c.b16 %v1592, %v1591
    %v1644 = vpack.c.b16 %v1594, %v1593
    %v1645 = vpack.c.b16 %v1596, %v1595
    %v1646 = vpack.c.b16 %v1598, %v1597
    %v1647 = vpack.c.b16 %v1600, %v1599
    %v1648 = vpack.c.b16 %v1602, %v1601
    %v1649 = vpack.c.b16 %v1604, %v1603
    %v1650 = vpack.c.b16 %v1606, %v1605
    %v1651 = vpack.c.b16 %v1608, %v1607
    %v1652 = vpack.c.b16 %v1610, %v1609
    %v1653 = vpack.c.b16 %v1612, %v1611
    %v1654 = vpack.c.b16 %v1614, %v1613
    %v1655 = vpack.c.b16 %v1616, %v1615
    %v1656 = vpack.c.b16 %v1618, %v1617
    %v1657 = vpack.c.b16 %v1620, %v1619
    %v1658 = vpack.c.b16 %v1622, %v1621
    %v1659 = vpack.c.b16 %v1624, %v1623
    %v1660 = vpack.c.b16 %v1626, %v1625
    %v1661 = vpack.c.b16 %v1628, %v1627
    %v1662 = vpack.c.b16 %v1630, %v1629
    %v1711 = vunpack.c.l.b16 %v1475
    %v1712 = vunpack.c.h.b16 %v1475
    %v1713 = vunpack.c.l.b16 %v1476
    %v1714 = vunpack.c.h.b16 %v1476
    %v1715 = vunpack.c.l.b16 %v1477
    %v1716 = vunpack.c.h.b16 %v1477
    %v1717 = vunpack.c.l.b16 %v1478
    %v1718 = vunpack.c.h.b16 %v1478
    %v1719 = vunpack.c.l.b16 %v1479
    %v1720 = vunpack.c.h.b16 %v1479
    %v1721 = vunpack.c.l.b16 %v1480
    %v1722 = vunpack.c.h.b16 %v1480
    %v1723 = vunpack.c.l.b16 %v1481
    %v1724 = vunpack.c.h.b16 %v1481
    %v1725 = vunpack.c.l.b16 %v1482
    %v1726 = vunpack.c.h.b16 %v1482
    %v1727 = vunpack.c.l.b16 %v1483
    %v1728 = vunpack.c.h.b16 %v1483
    %v1729 = vunpack.c.l.b16 %v1484
    %v1730 = vunpack.c.h.b16 %v1484
    %v1731 = vunpack.c.l.b16 %v1485
    %v1732 = vunpack.c.h.b16 %v1485
    %v1733 = vunpack.c.l.b16 %v1486
    %v1734 = vunpack.c.h.b16 %v1486
    %v1735 = vunpack.c.l.b16 %v1487
    %v1736 = vunpack.c.h.b16 %v1487
    %v1737 = vunpack.c.l.b16 %v1488
    %v1738 = vunpack.c.h.b16 %v1488
    %v1739 = vunpack.c.l.b16 %v1489
    %v1740 = vunpack.c.h.b16 %v1489
    %v1741 = vunpack.c.l.b16 %v1490
    %v1742 = vunpack.c.h.b16 %v1490
    %v1743 = vpack.c.b16 %v1713, %v1711
    %v1744 = vpack.c.b16 %v1714, %v1712
    %v1745 = vpack.c.b16 %v1717, %v1715
    %v1746 = vpack.c.b16 %v1718, %v1716
    %v1747 = vpack.c.b16 %v1721, %v1719
    %v1748 = vpack.c.b16 %v1722, %v1720
    %v1749 = vpack.c.b16 %v1725, %v1723
    %v1750 = vpack.c.b16 %v1726, %v1724
    %v1751 = vpack.c.b16 %v1729, %v1727
    %v1752 = vpack.c.b16 %v1730, %v1728
    %v1753 = vpack.c.b16 %v1733, %v1731
    %v1754 = vpack.c.b16 %v1734, %v1732
    %v1755 = vpack.c.b16 %v1737, %v1735
    %v1756 = vpack.c.b16 %v1738, %v1736
    %v1757 = vpack.c.b16 %v1741, %v1739
    %v1758 = vpack.c.b16 %v1742, %v1740
    %1775 = vmatprep.subr.bf16.mxu0 %v1758
    %1776 = vmatpush1.bf16.msra.mxu0 %v1757
    %1777 = vmatprep.subr.bf16.mxu0 %v1756
    %1778 = vmatpush1.bf16.msra.mxu0 %v1755
    %1779 = vmatprep.subr.bf16.mxu0 %v1754
    %1780 = vmatpush1.bf16.msra.mxu0 %v1753
    %1781 = vmatprep.subr.bf16.mxu0 %v1752
    %1782 = vmatpush1.bf16.msra.mxu0 %v1751
    %1783 = vmatprep.subr.bf16.mxu0 %v1750
    %1784 = vmatpush1.bf16.msra.mxu0 %v1749
    %1785 = vmatprep.subr.bf16.mxu0 %v1748
    %1786 = vmatpush1.bf16.msra.mxu0 %v1747
    %1787 = vmatprep.subr.bf16.mxu0 %v1746
    %1788 = vmatpush1.bf16.msra.mxu0 %v1745
    %1789 = vmatprep.subr.bf16.mxu0 %v1744
    %1790 = vmatpush1.bf16.msra.mxu0 %v1743
    %1791 = vmatprep.subr.bf16.mxu0 0
    %1792 = vmatpush2.bf16.msra.mxu0 0
    %1793 = vmatprep.subr.bf16.mxu0 0
    %1794 = vmatpush2.bf16.msra.mxu0 0
    %1795 = vmatprep.subr.bf16.mxu0 0
    %1796 = vmatpush2.bf16.msra.mxu0 0
    %1797 = vmatprep.subr.bf16.mxu0 0
    %1798 = vmatpush2.bf16.msra.mxu0 0
    %1799 = vmatprep.subr.bf16.mxu0 0
    %1800 = vmatpush2.bf16.msra.mxu0 0
    %1801 = vmatprep.subr.bf16.mxu0 0
    %1802 = vmatpush2.bf16.msra.mxu0 0
    %1803 = vmatprep.subr.bf16.mxu0 0
    %1804 = vmatpush2.bf16.msra.mxu0 0
    %1805 = vmatprep.subr.bf16.mxu0 0
    %1806 = vmatpush2.bf16.msra.mxu0 0
    %1807 = vmatprep.mubr.bf16.mxu0 0
    %1808 = vmatmul.mubr.bf16.gmra.mxu0 %v1631
    %v1809 = vpop.f32.mrf.mxu0
    %v1810 = vadd.f32 %v1496, %v1809
    %v1811 = vpop.f32.mrf.mxu0
    %v1812 = vadd.f32 %v1500, %v1811
    %v1813 = vpop.f32.mrf.mxu0
    %v1814 = vadd.f32 %v1496, %v1813
    %v1815 = vpop.f32.mrf.mxu0
    %v1816 = vadd.f32 %v1500, %v1815
    %1817 = vmatprep.mubr.bf16.mxu0 0
    %1818 = vmatmul.mubr.bf16.gmra.mxu0 %v1632
    %v1819 = vpop.f32.mrf.mxu0
    %v1820 = vadd.f32 %v1496, %v1819
    %v1821 = vpop.f32.mrf.mxu0
    %v1822 = vadd.f32 %v1500, %v1821
    %v1823 = vpop.f32.mrf.mxu0
    %v1824 = vadd.f32 %v1496, %v1823
    %v1825 = vpop.f32.mrf.mxu0
    %v1826 = vadd.f32 %v1500, %v1825
    %1827 = vmatprep.mubr.bf16.mxu0 0
    %1828 = vmatmul.mubr.bf16.gmra.mxu0 %v1633
    %v1829 = vpop.f32.mrf.mxu0
    %v1830 = vadd.f32 %v1496, %v1829
    %v1831 = vpop.f32.mrf.mxu0
    %v1832 = vadd.f32 %v1500, %v1831
    %v1833 = vpop.f32.mrf.mxu0
    %v1834 = vadd.f32 %v1496, %v1833
    %v1835 = vpop.f32.mrf.mxu0
    %v1836 = vadd.f32 %v1500, %v1835
    %1837 = vmatprep.mubr.bf16.mxu0 0
    %1838 = vmatmul.mubr.bf16.gmra.mxu0 %v1634
    %v1839 = vpop.f32.mrf.mxu0
    %v1840 = vadd.f32 %v1496, %v1839
    %v1841 = vpop.f32.mrf.mxu0
    %v1842 = vadd.f32 %v1500, %v1841
    %v1843 = vpop.f32.mrf.mxu0
    %v1844 = vadd.f32 %v1496, %v1843
    %v1845 = vpop.f32.mrf.mxu0
    %v1846 = vadd.f32 %v1500, %v1845
    %1847 = vmatprep.mubr.bf16.mxu0 0
    %1848 = vmatmul.mubr.bf16.gmra.mxu0 %v1635
    %v1849 = vpop.f32.mrf.mxu0
    %v1850 = vadd.f32 %v1496, %v1849
    %v1851 = vpop.f32.mrf.mxu0
    %v1852 = vadd.f32 %v1500, %v1851
    %v1853 = vpop.f32.mrf.mxu0
    %v1854 = vadd.f32 %v1496, %v1853
    %v1855 = vpop.f32.mrf.mxu0
    %v1856 = vadd.f32 %v1500, %v1855
    %1857 = vmatprep.mubr.bf16.mxu0 0
    %1858 = vmatmul.mubr.bf16.gmra.mxu0 %v1636
    %v1859 = vpop.f32.mrf.mxu0
    %v1860 = vadd.f32 %v1496, %v1859
    %v1861 = vpop.f32.mrf.mxu0
    %v1862 = vadd.f32 %v1500, %v1861
    %v1863 = vpop.f32.mrf.mxu0
    %v1864 = vadd.f32 %v1496, %v1863
    %v1865 = vpop.f32.mrf.mxu0
    %v1866 = vadd.f32 %v1500, %v1865
    %1867 = vmatprep.mubr.bf16.mxu0 0
    %1868 = vmatmul.mubr.bf16.gmra.mxu0 %v1637
    %v1869 = vpop.f32.mrf.mxu0
    %v1870 = vadd.f32 %v1496, %v1869
    %v1871 = vpop.f32.mrf.mxu0
    %v1872 = vadd.f32 %v1500, %v1871
    %v1873 = vpop.f32.mrf.mxu0
    %v1874 = vadd.f32 %v1496, %v1873
    %v1875 = vpop.f32.mrf.mxu0
    %v1876 = vadd.f32 %v1500, %v1875
    %1877 = vmatprep.mubr.bf16.mxu0 0
    %1878 = vmatmul.mubr.bf16.gmra.mxu0 %v1638
    %v1879 = vpop.f32.mrf.mxu0
    %v1880 = vadd.f32 %v1496, %v1879
    %v1881 = vpop.f32.mrf.mxu0
    %v1882 = vadd.f32 %v1500, %v1881
    %v1883 = vpop.f32.mrf.mxu0
    %v1884 = vadd.f32 %v1496, %v1883
    %v1885 = vpop.f32.mrf.mxu0
    %v1886 = vadd.f32 %v1500, %v1885
    %1887 = vmatprep.mubr.bf16.mxu0 0
    %1888 = vmatmul.mubr.bf16.gmra.mxu0 %v1639
    %v1889 = vpop.f32.mrf.mxu0
    %v1890 = vadd.f32 %v1496, %v1889
    %v1891 = vpop.f32.mrf.mxu0
    %v1892 = vadd.f32 %v1500, %v1891
    %v1893 = vpop.f32.mrf.mxu0
    %v1894 = vadd.f32 %v1496, %v1893
    %v1895 = vpop.f32.mrf.mxu0
    %v1896 = vadd.f32 %v1500, %v1895
    %1897 = vmatprep.mubr.bf16.mxu0 0
    %1898 = vmatmul.mubr.bf16.gmra.mxu0 %v1640
    %v1899 = vpop.f32.mrf.mxu0
    %v1900 = vadd.f32 %v1496, %v1899
    %v1901 = vpop.f32.mrf.mxu0
    %v1902 = vadd.f32 %v1500, %v1901
    %v1903 = vpop.f32.mrf.mxu0
    %v1904 = vadd.f32 %v1496, %v1903
    %v1905 = vpop.f32.mrf.mxu0
    %v1906 = vadd.f32 %v1500, %v1905
    %1907 = vmatprep.mubr.bf16.mxu0 0
    %1908 = vmatmul.mubr.bf16.gmra.mxu0 %v1641
    %v1909 = vpop.f32.mrf.mxu0
    %v1910 = vadd.f32 %v1496, %v1909
    %v1911 = vpop.f32.mrf.mxu0
    %v1912 = vadd.f32 %v1500, %v1911
    %v1913 = vpop.f32.mrf.mxu0
    %v1914 = vadd.f32 %v1496, %v1913
    %v1915 = vpop.f32.mrf.mxu0
    %v1916 = vadd.f32 %v1500, %v1915
    %1917 = vmatprep.mubr.bf16.mxu0 0
    %1918 = vmatmul.mubr.bf16.gmra.mxu0 %v1642
    %v1919 = vpop.f32.mrf.mxu0
    %v1920 = vadd.f32 %v1496, %v1919
    %v1921 = vpop.f32.mrf.mxu0
    %v1922 = vadd.f32 %v1500, %v1921
    %v1923 = vpop.f32.mrf.mxu0
    %v1924 = vadd.f32 %v1496, %v1923
    %v1925 = vpop.f32.mrf.mxu0
    %v1926 = vadd.f32 %v1500, %v1925
    %1927 = vmatprep.mubr.bf16.mxu0 0
    %1928 = vmatmul.mubr.bf16.gmra.mxu0 %v1643
    %v1929 = vpop.f32.mrf.mxu0
    %v1930 = vadd.f32 %v1496, %v1929
    %v1931 = vpop.f32.mrf.mxu0
    %v1932 = vadd.f32 %v1500, %v1931
    %v1933 = vpop.f32.mrf.mxu0
    %v1934 = vadd.f32 %v1496, %v1933
    %v1935 = vpop.f32.mrf.mxu0
    %v1936 = vadd.f32 %v1500, %v1935
    %1937 = vmatprep.mubr.bf16.mxu0 0
    %1938 = vmatmul.mubr.bf16.gmra.mxu0 %v1644
    %v1939 = vpop.f32.mrf.mxu0
    %v1940 = vadd.f32 %v1496, %v1939
    %v1941 = vpop.f32.mrf.mxu0
    %v1942 = vadd.f32 %v1500, %v1941
    %v1943 = vpop.f32.mrf.mxu0
    %v1944 = vadd.f32 %v1496, %v1943
    %v1945 = vpop.f32.mrf.mxu0
    %v1946 = vadd.f32 %v1500, %v1945
    %1947 = vmatprep.mubr.bf16.mxu0 0
    %1948 = vmatmul.mubr.bf16.gmra.mxu0 %v1645
    %v1949 = vpop.f32.mrf.mxu0
    %v1950 = vadd.f32 %v1496, %v1949
    %v1951 = vpop.f32.mrf.mxu0
    %v1952 = vadd.f32 %v1500, %v1951
    %v1953 = vpop.f32.mrf.mxu0
    %v1954 = vadd.f32 %v1496, %v1953
    %v1955 = vpop.f32.mrf.mxu0
    %v1956 = vadd.f32 %v1500, %v1955
    %1957 = vmatprep.mubr.bf16.mxu0 0
    %1958 = vmatmul.mubr.bf16.gmra.mxu0 %v1646
    %v1959 = vpop.f32.mrf.mxu0
    %v1960 = vadd.f32 %v1496, %v1959
    %v1961 = vpop.f32.mrf.mxu0
    %v1962 = vadd.f32 %v1500, %v1961
    %v1963 = vpop.f32.mrf.mxu0
    %v1964 = vadd.f32 %v1496, %v1963
    %v1965 = vpop.f32.mrf.mxu0
    %v1966 = vadd.f32 %v1500, %v1965
    %1967 = vmatprep.mubr.bf16.mxu0 0
    %1968 = vmatmul.mubr.bf16.gmra.mxu0 %v1647
    %v1969 = vpop.f32.mrf.mxu0
    %v1970 = vadd.f32 %v1496, %v1969
    %v1971 = vpop.f32.mrf.mxu0
    %v1972 = vadd.f32 %v1500, %v1971
    %v1973 = vpop.f32.mrf.mxu0
    %v1974 = vadd.f32 %v1496, %v1973
    %v1975 = vpop.f32.mrf.mxu0
    %v1976 = vadd.f32 %v1500, %v1975
    %1977 = vmatprep.mubr.bf16.mxu0 0
    %1978 = vmatmul.mubr.bf16.gmra.mxu0 %v1648
    %v1979 = vpop.f32.mrf.mxu0
    %v1980 = vadd.f32 %v1496, %v1979
    %v1981 = vpop.f32.mrf.mxu0
    %v1982 = vadd.f32 %v1500, %v1981
    %v1983 = vpop.f32.mrf.mxu0
    %v1984 = vadd.f32 %v1496, %v1983
    %v1985 = vpop.f32.mrf.mxu0
    %v1986 = vadd.f32 %v1500, %v1985
    %1987 = vmatprep.mubr.bf16.mxu0 0
    %1988 = vmatmul.mubr.bf16.gmra.mxu0 %v1649
    %v1989 = vpop.f32.mrf.mxu0
    %v1990 = vadd.f32 %v1496, %v1989
    %v1991 = vpop.f32.mrf.mxu0
    %v1992 = vadd.f32 %v1500, %v1991
    %v1993 = vpop.f32.mrf.mxu0
    %v1994 = vadd.f32 %v1496, %v1993
    %v1995 = vpop.f32.mrf.mxu0
    %v1996 = vadd.f32 %v1500, %v1995
    %1997 = vmatprep.mubr.bf16.mxu0 0
    %1998 = vmatmul.mubr.bf16.gmra.mxu0 %v1650
    %v1999 = vpop.f32.mrf.mxu0
    %v2000 = vadd.f32 %v1496, %v1999
    %v2001 = vpop.f32.mrf.mxu0
    %v2002 = vadd.f32 %v1500, %v2001
    %v2003 = vpop.f32.mrf.mxu0
    %v2004 = vadd.f32 %v1496, %v2003
    %v2005 = vpop.f32.mrf.mxu0
    %v2006 = vadd.f32 %v1500, %v2005
    %2007 = vmatprep.mubr.bf16.mxu0 0
    %2008 = vmatmul.mubr.bf16.gmra.mxu0 %v1651
    %v2009 = vpop.f32.mrf.mxu0
    %v2010 = vadd.f32 %v1496, %v2009
    %v2011 = vpop.f32.mrf.mxu0
    %v2012 = vadd.f32 %v1500, %v2011
    %v2013 = vpop.f32.mrf.mxu0
    %v2014 = vadd.f32 %v1496, %v2013
    %v2015 = vpop.f32.mrf.mxu0
    %v2016 = vadd.f32 %v1500, %v2015
    %2017 = vmatprep.mubr.bf16.mxu0 0
    %2018 = vmatmul.mubr.bf16.gmra.mxu0 %v1652
    %v2019 = vpop.f32.mrf.mxu0
    %v2020 = vadd.f32 %v1496, %v2019
    %v2021 = vpop.f32.mrf.mxu0
    %v2022 = vadd.f32 %v1500, %v2021
    %v2023 = vpop.f32.mrf.mxu0
    %v2024 = vadd.f32 %v1496, %v2023
    %v2025 = vpop.f32.mrf.mxu0
    %v2026 = vadd.f32 %v1500, %v2025
    %2027 = vmatprep.mubr.bf16.mxu0 0
    %2028 = vmatmul.mubr.bf16.gmra.mxu0 %v1653
    %v2029 = vpop.f32.mrf.mxu0
    %v2030 = vadd.f32 %v1496, %v2029
    %v2031 = vpop.f32.mrf.mxu0
    %v2032 = vadd.f32 %v1500, %v2031
    %v2033 = vpop.f32.mrf.mxu0
    %v2034 = vadd.f32 %v1496, %v2033
    %v2035 = vpop.f32.mrf.mxu0
    %v2036 = vadd.f32 %v1500, %v2035
    %2037 = vmatprep.mubr.bf16.mxu0 0
    %2038 = vmatmul.mubr.bf16.gmra.mxu0 %v1654
    %v2039 = vpop.f32.mrf.mxu0
    %v2040 = vadd.f32 %v1496, %v2039
    %v2041 = vpop.f32.mrf.mxu0
    %v2042 = vadd.f32 %v1500, %v2041
    %v2043 = vpop.f32.mrf.mxu0
    %v2044 = vadd.f32 %v1496, %v2043
    %v2045 = vpop.f32.mrf.mxu0
    %v2046 = vadd.f32 %v1500, %v2045
    %2047 = vmatprep.mubr.bf16.mxu0 0
    %2048 = vmatmul.mubr.bf16.gmra.mxu0 %v1655
    %v2049 = vpop.f32.mrf.mxu0
    %v2050 = vadd.f32 %v1496, %v2049
    %v2051 = vpop.f32.mrf.mxu0
    %v2052 = vadd.f32 %v1500, %v2051
    %v2053 = vpop.f32.mrf.mxu0
    %v2054 = vadd.f32 %v1496, %v2053
    %v2055 = vpop.f32.mrf.mxu0
    %v2056 = vadd.f32 %v1500, %v2055
    %2057 = vmatprep.mubr.bf16.mxu0 0
    %2058 = vmatmul.mubr.bf16.gmra.mxu0 %v1656
    %v2059 = vpop.f32.mrf.mxu0
    %v2060 = vadd.f32 %v1496, %v2059
    %v2061 = vpop.f32.mrf.mxu0
    %v2062 = vadd.f32 %v1500, %v2061
    %v2063 = vpop.f32.mrf.mxu0
    %v2064 = vadd.f32 %v1496, %v2063
    %v2065 = vpop.f32.mrf.mxu0
    %v2066 = vadd.f32 %v1500, %v2065
    %2067 = vmatprep.mubr.bf16.mxu0 0
    %2068 = vmatmul.mubr.bf16.gmra.mxu0 %v1657
    %v2069 = vpop.f32.mrf.mxu0
    %v2070 = vadd.f32 %v1496, %v2069
    %v2071 = vpop.f32.mrf.mxu0
    %v2072 = vadd.f32 %v1500, %v2071
    %v2073 = vpop.f32.mrf.mxu0
    %v2074 = vadd.f32 %v1496, %v2073
    %v2075 = vpop.f32.mrf.mxu0
    %v2076 = vadd.f32 %v1500, %v2075
    %2077 = vmatprep.mubr.bf16.mxu0 0
    %2078 = vmatmul.mubr.bf16.gmra.mxu0 %v1658
    %v2079 = vpop.f32.mrf.mxu0
    %v2080 = vadd.f32 %v1496, %v2079
    %v2081 = vpop.f32.mrf.mxu0
    %v2082 = vadd.f32 %v1500, %v2081
    %v2083 = vpop.f32.mrf.mxu0
    %v2084 = vadd.f32 %v1496, %v2083
    %v2085 = vpop.f32.mrf.mxu0
    %v2086 = vadd.f32 %v1500, %v2085
    %2087 = vmatprep.mubr.bf16.mxu0 0
    %2088 = vmatmul.mubr.bf16.gmra.mxu0 %v1659
    %v2089 = vpop.f32.mrf.mxu0
    %v2090 = vadd.f32 %v1496, %v2089
    %v2091 = vpop.f32.mrf.mxu0
    %v2092 = vadd.f32 %v1500, %v2091
    %v2093 = vpop.f32.mrf.mxu0
    %v2094 = vadd.f32 %v1496, %v2093
    %v2095 = vpop.f32.mrf.mxu0
    %v2096 = vadd.f32 %v1500, %v2095
    %2097 = vmatprep.mubr.bf16.mxu0 0
    %2098 = vmatmul.mubr.bf16.gmra.mxu0 %v1660
    %v2099 = vpop.f32.mrf.mxu0
    %v2100 = vadd.f32 %v1496, %v2099
    %v2101 = vpop.f32.mrf.mxu0
    %v2102 = vadd.f32 %v1500, %v2101
    %v2103 = vpop.f32.mrf.mxu0
    %v2104 = vadd.f32 %v1496, %v2103
    %v2105 = vpop.f32.mrf.mxu0
    %v2106 = vadd.f32 %v1500, %v2105
    %2107 = vmatprep.mubr.bf16.mxu0 0
    %2108 = vmatmul.mubr.bf16.gmra.mxu0 %v1661
    %v2109 = vpop.f32.mrf.mxu0
    %v2110 = vadd.f32 %v1496, %v2109
    %v2111 = vpop.f32.mrf.mxu0
    %v2112 = vadd.f32 %v1500, %v2111
    %v2113 = vpop.f32.mrf.mxu0
    %v2114 = vadd.f32 %v1496, %v2113
    %v2115 = vpop.f32.mrf.mxu0
    %v2116 = vadd.f32 %v1500, %v2115
    %2117 = vmatprep.mubr.bf16.mxu0 0
    %2118 = vmatmul.mubr.bf16.gmra.mxu0 %v1662
    %v2119 = vpop.f32.mrf.mxu0
    %v2120 = vadd.f32 %v1496, %v2119
    %v2121 = vpop.f32.mrf.mxu0
    %v2122 = vadd.f32 %v1500, %v2121
    %v2123 = vpop.f32.mrf.mxu0
    %v2124 = vadd.f32 %v1496, %v2123
    %v2125 = vpop.f32.mrf.mxu0
    %v2126 = vadd.f32 %v1500, %v2125
    %2127 = vdwg.mxu0
    %v2128 = vmul.f32 %v1810, %v1810
    %v2129 = vmul.f32 %v1812, %v1812
    %v2130 = vmul.f32 %v1814, %v1814
    %v2131 = vmul.f32 %v1816, %v1816
    %v2132 = vmul.f32 %v1820, %v1820
    %v2133 = vmul.f32 %v1822, %v1822
    %v2134 = vmul.f32 %v1824, %v1824
    %v2135 = vmul.f32 %v1826, %v1826
    %v2136 = vmul.f32 %v1830, %v1830
    %v2137 = vmul.f32 %v1832, %v1832
    %v2138 = vmul.f32 %v1834, %v1834
    %v2139 = vmul.f32 %v1836, %v1836
    %v2140 = vmul.f32 %v1840, %v1840
    %v2141 = vmul.f32 %v1842, %v1842
    %v2142 = vmul.f32 %v1844, %v1844
    %v2143 = vmul.f32 %v1846, %v1846
    %v2144 = vmul.f32 %v1850, %v1850
    %v2145 = vmul.f32 %v1852, %v1852
    %v2146 = vmul.f32 %v1854, %v1854
    %v2147 = vmul.f32 %v1856, %v1856
    %v2148 = vmul.f32 %v1860, %v1860
    %v2149 = vmul.f32 %v1862, %v1862
    %v2150 = vmul.f32 %v1864, %v1864
    %v2151 = vmul.f32 %v1866, %v1866
    %v2152 = vmul.f32 %v1870, %v1870
    %v2153 = vmul.f32 %v1872, %v1872
    %v2154 = vmul.f32 %v1874, %v1874
    %v2155 = vmul.f32 %v1876, %v1876
    %v2156 = vmul.f32 %v1880, %v1880
    %v2157 = vmul.f32 %v1882, %v1882
    %v2158 = vmul.f32 %v1884, %v1884
    %v2159 = vmul.f32 %v1886, %v1886
    %v2160 = vmul.f32 %v1890, %v1890
    %v2161 = vmul.f32 %v1892, %v1892
    %v2162 = vmul.f32 %v1894, %v1894
    %v2163 = vmul.f32 %v1896, %v1896
    %v2164 = vmul.f32 %v1900, %v1900
    %v2165 = vmul.f32 %v1902, %v1902
    %v2166 = vmul.f32 %v1904, %v1904
    %v2167 = vmul.f32 %v1906, %v1906
    %v2168 = vmul.f32 %v1910, %v1910
    %v2169 = vmul.f32 %v1912, %v1912
    %v2170 = vmul.f32 %v1914, %v1914
    %v2171 = vmul.f32 %v1916, %v1916
    %v2172 = vmul.f32 %v1920, %v1920
    %v2173 = vmul.f32 %v1922, %v1922
    %v2174 = vmul.f32 %v1924, %v1924
    %v2175 = vmul.f32 %v1926, %v1926
    %v2176 = vmul.f32 %v1930, %v1930
    %v2177 = vmul.f32 %v1932, %v1932
    %v2178 = vmul.f32 %v1934, %v1934
    %v2179 = vmul.f32 %v1936, %v1936
    %v2180 = vmul.f32 %v1940, %v1940
    %v2181 = vmul.f32 %v1942, %v1942
    %v2182 = vmul.f32 %v1944, %v1944
    %v2183 = vmul.f32 %v1946, %v1946
    %v2184 = vmul.f32 %v1950, %v1950
    %v2185 = vmul.f32 %v1952, %v1952
    %v2186 = vmul.f32 %v1954, %v1954
    %v2187 = vmul.f32 %v1956, %v1956
    %v2188 = vmul.f32 %v1960, %v1960
    %v2189 = vmul.f32 %v1962, %v1962
    %v2190 = vmul.f32 %v1964, %v1964
    %v2191 = vmul.f32 %v1966, %v1966
    %v2192 = vmul.f32 %v1970, %v1970
    %v2193 = vmul.f32 %v1972, %v1972
    %v2194 = vmul.f32 %v1974, %v1974
    %v2195 = vmul.f32 %v1976, %v1976
    %v2196 = vmul.f32 %v1980, %v1980
    %v2197 = vmul.f32 %v1982, %v1982
    %v2198 = vmul.f32 %v1984, %v1984
    %v2199 = vmul.f32 %v1986, %v1986
    %v2200 = vmul.f32 %v1990, %v1990
    %v2201 = vmul.f32 %v1992, %v1992
    %v2202 = vmul.f32 %v1994, %v1994
    %v2203 = vmul.f32 %v1996, %v1996
    %v2204 = vmul.f32 %v2000, %v2000
    %v2205 = vmul.f32 %v2002, %v2002
    %v2206 = vmul.f32 %v2004, %v2004
    %v2207 = vmul.f32 %v2006, %v2006
    %v2208 = vmul.f32 %v2010, %v2010
    %v2209 = vmul.f32 %v2012, %v2012
    %v2210 = vmul.f32 %v2014, %v2014
    %v2211 = vmul.f32 %v2016, %v2016
    %v2212 = vmul.f32 %v2020, %v2020
    %v2213 = vmul.f32 %v2022, %v2022
    %v2214 = vmul.f32 %v2024, %v2024
    %v2215 = vmul.f32 %v2026, %v2026
    %v2216 = vmul.f32 %v2030, %v2030
    %v2217 = vmul.f32 %v2032, %v2032
    %v2218 = vmul.f32 %v2034, %v2034
    %v2219 = vmul.f32 %v2036, %v2036
    %v2220 = vmul.f32 %v2040, %v2040
    %v2221 = vmul.f32 %v2042, %v2042
    %v2222 = vmul.f32 %v2044, %v2044
    %v2223 = vmul.f32 %v2046, %v2046
    %v2224 = vmul.f32 %v2050, %v2050
    %v2225 = vmul.f32 %v2052, %v2052
    %v2226 = vmul.f32 %v2054, %v2054
    %v2227 = vmul.f32 %v2056, %v2056
    %v2228 = vmul.f32 %v2060, %v2060
    %v2229 = vmul.f32 %v2062, %v2062
    %v2230 = vmul.f32 %v2064, %v2064
    %v2231 = vmul.f32 %v2066, %v2066
    %v2232 = vmul.f32 %v2070, %v2070
    %v2233 = vmul.f32 %v2072, %v2072
    %v2234 = vmul.f32 %v2074, %v2074
    %v2235 = vmul.f32 %v2076, %v2076
    %v2236 = vmul.f32 %v2080, %v2080
    %v2237 = vmul.f32 %v2082, %v2082
    %v2238 = vmul.f32 %v2084, %v2084
    %v2239 = vmul.f32 %v2086, %v2086
    %v2240 = vmul.f32 %v2090, %v2090
    %v2241 = vmul.f32 %v2092, %v2092
    %v2242 = vmul.f32 %v2094, %v2094
    %v2243 = vmul.f32 %v2096, %v2096
    %v2244 = vmul.f32 %v2100, %v2100
    %v2245 = vmul.f32 %v2102, %v2102
    %v2246 = vmul.f32 %v2104, %v2104
    %v2247 = vmul.f32 %v2106, %v2106
    %v2248 = vmul.f32 %v2110, %v2110
    %v2249 = vmul.f32 %v2112, %v2112
    %v2250 = vmul.f32 %v2114, %v2114
    %v2251 = vmul.f32 %v2116, %v2116
    %v2252 = vmul.f32 %v2120, %v2120
    %v2253 = vmul.f32 %v2122, %v2122
    %v2254 = vmul.f32 %v2124, %v2124
    %v2255 = vmul.f32 %v2126, %v2126
    %v2256 = vmul.f32 %v1810, %v2128
    %v2257 = vmul.f32 %v1812, %v2129
    %v2258 = vmul.f32 %v1814, %v2130
    %v2259 = vmul.f32 %v1816, %v2131
    %v2260 = vmul.f32 %v1820, %v2132
    %v2261 = vmul.f32 %v1822, %v2133
    %v2262 = vmul.f32 %v1824, %v2134
    %v2263 = vmul.f32 %v1826, %v2135
    %v2264 = vmul.f32 %v1830, %v2136
    %v2265 = vmul.f32 %v1832, %v2137
    %v2266 = vmul.f32 %v1834, %v2138
    %v2267 = vmul.f32 %v1836, %v2139
    %v2268 = vmul.f32 %v1840, %v2140
    %v2269 = vmul.f32 %v1842, %v2141
    %v2270 = vmul.f32 %v1844, %v2142
    %v2271 = vmul.f32 %v1846, %v2143
    %v2272 = vmul.f32 %v1850, %v2144
    %v2273 = vmul.f32 %v1852, %v2145
    %v2274 = vmul.f32 %v1854, %v2146
    %v2275 = vmul.f32 %v1856, %v2147
    %v2276 = vmul.f32 %v1860, %v2148
    %v2277 = vmul.f32 %v1862, %v2149
    %v2278 = vmul.f32 %v1864, %v2150
    %v2279 = vmul.f32 %v1866, %v2151
    %v2280 = vmul.f32 %v1870, %v2152
    %v2281 = vmul.f32 %v1872, %v2153
    %v2282 = vmul.f32 %v1874, %v2154
    %v2283 = vmul.f32 %v1876, %v2155
    %v2284 = vmul.f32 %v1880, %v2156
    %v2285 = vmul.f32 %v1882, %v2157
    %v2286 = vmul.f32 %v1884, %v2158
    %v2287 = vmul.f32 %v1886, %v2159
    %v2288 = vmul.f32 %v1890, %v2160
    %v2289 = vmul.f32 %v1892, %v2161
    %v2290 = vmul.f32 %v1894, %v2162
    %v2291 = vmul.f32 %v1896, %v2163
    %v2292 = vmul.f32 %v1900, %v2164
    %v2293 = vmul.f32 %v1902, %v2165
    %v2294 = vmul.f32 %v1904, %v2166
    %v2295 = vmul.f32 %v1906, %v2167
    %v2296 = vmul.f32 %v1910, %v2168
    %v2297 = vmul.f32 %v1912, %v2169
    %v2298 = vmul.f32 %v1914, %v2170
    %v2299 = vmul.f32 %v1916, %v2171
    %v2300 = vmul.f32 %v1920, %v2172
    %v2301 = vmul.f32 %v1922, %v2173
    %v2302 = vmul.f32 %v1924, %v2174
    %v2303 = vmul.f32 %v1926, %v2175
    %v2304 = vmul.f32 %v1930, %v2176
    %v2305 = vmul.f32 %v1932, %v2177
    %v2306 = vmul.f32 %v1934, %v2178
    %v2307 = vmul.f32 %v1936, %v2179
    %v2308 = vmul.f32 %v1940, %v2180
    %v2309 = vmul.f32 %v1942, %v2181
    %v2310 = vmul.f32 %v1944, %v2182
    %v2311 = vmul.f32 %v1946, %v2183
    %v2312 = vmul.f32 %v1950, %v2184
    %v2313 = vmul.f32 %v1952, %v2185
    %v2314 = vmul.f32 %v1954, %v2186
    %v2315 = vmul.f32 %v1956, %v2187
    %v2316 = vmul.f32 %v1960, %v2188
    %v2317 = vmul.f32 %v1962, %v2189
    %v2318 = vmul.f32 %v1964, %v2190
    %v2319 = vmul.f32 %v1966, %v2191
    %v2320 = vmul.f32 %v1970, %v2192
    %v2321 = vmul.f32 %v1972, %v2193
    %v2322 = vmul.f32 %v1974, %v2194
    %v2323 = vmul.f32 %v1976, %v2195
    %v2324 = vmul.f32 %v1980, %v2196
    %v2325 = vmul.f32 %v1982, %v2197
    %v2326 = vmul.f32 %v1984, %v2198
    %v2327 = vmul.f32 %v1986, %v2199
    %v2328 = vmul.f32 %v1990, %v2200
    %v2329 = vmul.f32 %v1992, %v2201
    %v2330 = vmul.f32 %v1994, %v2202
    %v2331 = vmul.f32 %v1996, %v2203
    %v2332 = vmul.f32 %v2000, %v2204
    %v2333 = vmul.f32 %v2002, %v2205
    %v2334 = vmul.f32 %v2004, %v2206
    %v2335 = vmul.f32 %v2006, %v2207
    %v2336 = vmul.f32 %v2010, %v2208
    %v2337 = vmul.f32 %v2012, %v2209
    %v2338 = vmul.f32 %v2014, %v2210
    %v2339 = vmul.f32 %v2016, %v2211
    %v2340 = vmul.f32 %v2020, %v2212
    %v2341 = vmul.f32 %v2022, %v2213
    %v2342 = vmul.f32 %v2024, %v2214
    %v2343 = vmul.f32 %v2026, %v2215
    %v2344 = vmul.f32 %v2030, %v2216
    %v2345 = vmul.f32 %v2032, %v2217
    %v2346 = vmul.f32 %v2034, %v2218
    %v2347 = vmul.f32 %v2036, %v2219
    %v2348 = vmul.f32 %v2040, %v2220
    %v2349 = vmul.f32 %v2042, %v2221
    %v2350 = vmul.f32 %v2044, %v2222
    %v2351 = vmul.f32 %v2046, %v2223
    %v2352 = vmul.f32 %v2050, %v2224
    %v2353 = vmul.f32 %v2052, %v2225
    %v2354 = vmul.f32 %v2054, %v2226
    %v2355 = vmul.f32 %v2056, %v2227
    %v2356 = vmul.f32 %v2060, %v2228
    %v2357 = vmul.f32 %v2062, %v2229
    %v2358 = vmul.f32 %v2064, %v2230
    %v2359 = vmul.f32 %v2066, %v2231
    %v2360 = vmul.f32 %v2070, %v2232
    %v2361 = vmul.f32 %v2072, %v2233
    %v2362 = vmul.f32 %v2074, %v2234
    %v2363 = vmul.f32 %v2076, %v2235
    %v2364 = vmul.f32 %v2080, %v2236
    %v2365 = vmul.f32 %v2082, %v2237
    %v2366 = vmul.f32 %v2084, %v2238
    %v2367 = vmul.f32 %v2086, %v2239
    %v2368 = vmul.f32 %v2090, %v2240
    %v2369 = vmul.f32 %v2092, %v2241
    %v2370 = vmul.f32 %v2094, %v2242
    %v2371 = vmul.f32 %v2096, %v2243
    %v2372 = vmul.f32 %v2100, %v2244
    %v2373 = vmul.f32 %v2102, %v2245
    %v2374 = vmul.f32 %v2104, %v2246
    %v2375 = vmul.f32 %v2106, %v2247
    %v2376 = vmul.f32 %v2110, %v2248
    %v2377 = vmul.f32 %v2112, %v2249
    %v2378 = vmul.f32 %v2114, %v2250
    %v2379 = vmul.f32 %v2116, %v2251
    %v2380 = vmul.f32 %v2120, %v2252
    %v2381 = vmul.f32 %v2122, %v2253
    %v2382 = vmul.f32 %v2124, %v2254
    %v2383 = vmul.f32 %v2126, %v2255
    %v2384 = vmul.f32 %v2256, 0.044715
    %v2385 = vmul.f32 %v2257, 0.044715
    %v2386 = vmul.f32 %v2258, 0.044715
    %v2387 = vmul.f32 %v2259, 0.044715
    %v2388 = vmul.f32 %v2260, 0.044715
    %v2389 = vmul.f32 %v2261, 0.044715
    %v2390 = vmul.f32 %v2262, 0.044715
    %v2391 = vmul.f32 %v2263, 0.044715
    %v2392 = vmul.f32 %v2264, 0.044715
    %v2393 = vmul.f32 %v2265, 0.044715
    %v2394 = vmul.f32 %v2266, 0.044715
    %v2395 = vmul.f32 %v2267, 0.044715
    %v2396 = vmul.f32 %v2268, 0.044715
    %v2397 = vmul.f32 %v2269, 0.044715
    %v2398 = vmul.f32 %v2270, 0.044715
    %v2399 = vmul.f32 %v2271, 0.044715
    %v2400 = vmul.f32 %v2272, 0.044715
    %v2401 = vmul.f32 %v2273, 0.044715
    %v2402 = vmul.f32 %v2274, 0.044715
    %v2403 = vmul.f32 %v2275, 0.044715
    %v2404 = vmul.f32 %v2276, 0.044715
    %v2405 = vmul.f32 %v2277, 0.044715
    %v2406 = vmul.f32 %v2278, 0.044715
    %v2407 = vmul.f32 %v2279, 0.044715
    %v2408 = vmul.f32 %v2280, 0.044715
    %v2409 = vmul.f32 %v2281, 0.044715
    %v2410 = vmul.f32 %v2282, 0.044715
    %v2411 = vmul.f32 %v2283, 0.044715
    %v2412 = vmul.f32 %v2284, 0.044715
    %v2413 = vmul.f32 %v2285, 0.044715
    %v2414 = vmul.f32 %v2286, 0.044715
    %v2415 = vmul.f32 %v2287, 0.044715
    %v2416 = vmul.f32 %v2288, 0.044715
    %v2417 = vmul.f32 %v2289, 0.044715
    %v2418 = vmul.f32 %v2290, 0.044715
    %v2419 = vmul.f32 %v2291, 0.044715
    %v2420 = vmul.f32 %v2292, 0.044715
    %v2421 = vmul.f32 %v2293, 0.044715
    %v2422 = vmul.f32 %v2294, 0.044715
    %v2423 = vmul.f32 %v2295, 0.044715
    %v2424 = vmul.f32 %v2296, 0.044715
    %v2425 = vmul.f32 %v2297, 0.044715
    %v2426 = vmul.f32 %v2298, 0.044715
    %v2427 = vmul.f32 %v2299, 0.044715
    %v2428 = vmul.f32 %v2300, 0.044715
    %v2429 = vmul.f32 %v2301, 0.044715
    %v2430 = vmul.f32 %v2302, 0.044715
    %v2431 = vmul.f32 %v2303, 0.044715
    %v2432 = vmul.f32 %v2304, 0.044715
    %v2433 = vmul.f32 %v2305, 0.044715
    %v2434 = vmul.f32 %v2306, 0.044715
    %v2435 = vmul.f32 %v2307, 0.044715
    %v2436 = vmul.f32 %v2308, 0.044715
    %v2437 = vmul.f32 %v2309, 0.044715
    %v2438 = vmul.f32 %v2310, 0.044715
    %v2439 = vmul.f32 %v2311, 0.044715
    %v2440 = vmul.f32 %v2312, 0.044715
    %v2441 = vmul.f32 %v2313, 0.044715
    %v2442 = vmul.f32 %v2314, 0.044715
    %v2443 = vmul.f32 %v2315, 0.044715
    %v2444 = vmul.f32 %v2316, 0.044715
    %v2445 = vmul.f32 %v2317, 0.044715
    %v2446 = vmul.f32 %v2318, 0.044715
    %v2447 = vmul.f32 %v2319, 0.044715
    %v2448 = vmul.f32 %v2320, 0.044715
    %v2449 = vmul.f32 %v2321, 0.044715
    %v2450 = vmul.f32 %v2322, 0.044715
    %v2451 = vmul.f32 %v2323, 0.044715
    %v2452 = vmul.f32 %v2324, 0.044715
    %v2453 = vmul.f32 %v2325, 0.044715
    %v2454 = vmul.f32 %v2326, 0.044715
    %v2455 = vmul.f32 %v2327, 0.044715
    %v2456 = vmul.f32 %v2328, 0.044715
    %v2457 = vmul.f32 %v2329, 0.044715
    %v2458 = vmul.f32 %v2330, 0.044715
    %v2459 = vmul.f32 %v2331, 0.044715
    %v2460 = vmul.f32 %v2332, 0.044715
    %v2461 = vmul.f32 %v2333, 0.044715
    %v2462 = vmul.f32 %v2334, 0.044715
    %v2463 = vmul.f32 %v2335, 0.044715
    %v2464 = vmul.f32 %v2336, 0.044715
    %v2465 = vmul.f32 %v2337, 0.044715
    %v2466 = vmul.f32 %v2338, 0.044715
    %v2467 = vmul.f32 %v2339, 0.044715
    %v2468 = vmul.f32 %v2340, 0.044715
    %v2469 = vmul.f32 %v2341, 0.044715
    %v2470 = vmul.f32 %v2342, 0.044715
    %v2471 = vmul.f32 %v2343, 0.044715
    %v2472 = vmul.f32 %v2344, 0.044715
    %v2473 = vmul.f32 %v2345, 0.044715
    %v2474 = vmul.f32 %v2346, 0.044715
    %v2475 = vmul.f32 %v2347, 0.044715
    %v2476 = vmul.f32 %v2348, 0.044715
    %v2477 = vmul.f32 %v2349, 0.044715
    %v2478 = vmul.f32 %v2350, 0.044715
    %v2479 = vmul.f32 %v2351, 0.044715
    %v2480 = vmul.f32 %v2352, 0.044715
    %v2481 = vmul.f32 %v2353, 0.044715
    %v2482 = vmul.f32 %v2354, 0.044715
    %v2483 = vmul.f32 %v2355, 0.044715
    %v2484 = vmul.f32 %v2356, 0.044715
    %v2485 = vmul.f32 %v2357, 0.044715
    %v2486 = vmul.f32 %v2358, 0.044715
    %v2487 = vmul.f32 %v2359, 0.044715
    %v2488 = vmul.f32 %v2360, 0.044715
    %v2489 = vmul.f32 %v2361, 0.044715
    %v2490 = vmul.f32 %v2362, 0.044715
    %v2491 = vmul.f32 %v2363, 0.044715
    %v2492 = vmul.f32 %v2364, 0.044715
    %v2493 = vmul.f32 %v2365, 0.044715
    %v2494 = vmul.f32 %v2366, 0.044715
    %v2495 = vmul.f32 %v2367, 0.044715
    %v2496 = vmul.f32 %v2368, 0.044715
    %v2497 = vmul.f32 %v2369, 0.044715
    %v2498 = vmul.f32 %v2370, 0.044715
    %v2499 = vmul.f32 %v2371, 0.044715
    %v2500 = vmul.f32 %v2372, 0.044715
    %v2501 = vmul.f32 %v2373, 0.044715
    %v2502 = vmul.f32 %v2374, 0.044715
    %v2503 = vmul.f32 %v2375, 0.044715
    %v2504 = vmul.f32 %v2376, 0.044715
    %v2505 = vmul.f32 %v2377, 0.044715
    %v2506 = vmul.f32 %v2378, 0.044715
    %v2507 = vmul.f32 %v2379, 0.044715
    %v2508 = vmul.f32 %v2380, 0.044715
    %v2509 = vmul.f32 %v2381, 0.044715
    %v2510 = vmul.f32 %v2382, 0.044715
    %v2511 = vmul.f32 %v2383, 0.044715
    %v2512 = vadd.f32 %v1810, %v2384
    %v2513 = vadd.f32 %v1812, %v2385
    %v2514 = vadd.f32 %v1814, %v2386
    %v2515 = vadd.f32 %v1816, %v2387
    %v2516 = vadd.f32 %v1820, %v2388
    %v2517 = vadd.f32 %v1822, %v2389
    %v2518 = vadd.f32 %v1824, %v2390
    %v2519 = vadd.f32 %v1826, %v2391
    %v2520 = vadd.f32 %v1830, %v2392
    %v2521 = vadd.f32 %v1832, %v2393
    %v2522 = vadd.f32 %v1834, %v2394
    %v2523 = vadd.f32 %v1836, %v2395
    %v2524 = vadd.f32 %v1840, %v2396
    %v2525 = vadd.f32 %v1842, %v2397
    %v2526 = vadd.f32 %v1844, %v2398
    %v2527 = vadd.f32 %v1846, %v2399
    %v2528 = vadd.f32 %v1850, %v2400
    %v2529 = vadd.f32 %v1852, %v2401
    %v2530 = vadd.f32 %v1854, %v2402
    %v2531 = vadd.f32 %v1856, %v2403
    %v2532 = vadd.f32 %v1860, %v2404
    %v2533 = vadd.f32 %v1862, %v2405
    %v2534 = vadd.f32 %v1864, %v2406
    %v2535 = vadd.f32 %v1866, %v2407
    %v2536 = vadd.f32 %v1870, %v2408
    %v2537 = vadd.f32 %v1872, %v2409
    %v2538 = vadd.f32 %v1874, %v2410
    %v2539 = vadd.f32 %v1876, %v2411
    %v2540 = vadd.f32 %v1880, %v2412
    %v2541 = vadd.f32 %v1882, %v2413
    %v2542 = vadd.f32 %v1884, %v2414
    %v2543 = vadd.f32 %v1886, %v2415
    %v2544 = vadd.f32 %v1890, %v2416
    %v2545 = vadd.f32 %v1892, %v2417
    %v2546 = vadd.f32 %v1894, %v2418
    %v2547 = vadd.f32 %v1896, %v2419
    %v2548 = vadd.f32 %v1900, %v2420
    %v2549 = vadd.f32 %v1902, %v2421
    %v2550 = vadd.f32 %v1904, %v2422
    %v2551 = vadd.f32 %v1906, %v2423
    %v2552 = vadd.f32 %v1910, %v2424
    %v2553 = vadd.f32 %v1912, %v2425
    %v2554 = vadd.f32 %v1914, %v2426
    %v2555 = vadd.f32 %v1916, %v2427
    %v2556 = vadd.f32 %v1920, %v2428
    %v2557 = vadd.f32 %v1922, %v2429
    %v2558 = vadd.f32 %v1924, %v2430
    %v2559 = vadd.f32 %v1926, %v2431
    %v2560 = vadd.f32 %v1930, %v2432
    %v2561 = vadd.f32 %v1932, %v2433
    %v2562 = vadd.f32 %v1934, %v2434
    %v2563 = vadd.f32 %v1936, %v2435
    %v2564 = vadd.f32 %v1940, %v2436
    %v2565 = vadd.f32 %v1942, %v2437
    %v2566 = vadd.f32 %v1944, %v2438
    %v2567 = vadd.f32 %v1946, %v2439
    %v2568 = vadd.f32 %v1950, %v2440
    %v2569 = vadd.f32 %v1952, %v2441
    %v2570 = vadd.f32 %v1954, %v2442
    %v2571 = vadd.f32 %v1956, %v2443
    %v2572 = vadd.f32 %v1960, %v2444
    %v2573 = vadd.f32 %v1962, %v2445
    %v2574 = vadd.f32 %v1964, %v2446
    %v2575 = vadd.f32 %v1966, %v2447
    %v2576 = vadd.f32 %v1970, %v2448
    %v2577 = vadd.f32 %v1972, %v2449
    %v2578 = vadd.f32 %v1974, %v2450
    %v2579 = vadd.f32 %v1976, %v2451
    %v2580 = vadd.f32 %v1980, %v2452
    %v2581 = vadd.f32 %v1982, %v2453
    %v2582 = vadd.f32 %v1984, %v2454
    %v2583 = vadd.f32 %v1986, %v2455
    %v2584 = vadd.f32 %v1990, %v2456
    %v2585 = vadd.f32 %v1992, %v2457
    %v2586 = vadd.f32 %v1994, %v2458
    %v2587 = vadd.f32 %v1996, %v2459
    %v2588 = vadd.f32 %v2000, %v2460
    %v2589 = vadd.f32 %v2002, %v2461
    %v2590 = vadd.f32 %v2004, %v2462
    %v2591 = vadd.f32 %v2006, %v2463
    %v2592 = vadd.f32 %v2010, %v2464
    %v2593 = vadd.f32 %v2012, %v2465
    %v2594 = vadd.f32 %v2014, %v2466
    %v2595 = vadd.f32 %v2016, %v2467
    %v2596 = vadd.f32 %v2020, %v2468
    %v2597 = vadd.f32 %v2022, %v2469
    %v2598 = vadd.f32 %v2024, %v2470
    %v2599 = vadd.f32 %v2026, %v2471
    %v2600 = vadd.f32 %v2030, %v2472
    %v2601 = vadd.f32 %v2032, %v2473
    %v2602 = vadd.f32 %v2034, %v2474
    %v2603 = vadd.f32 %v2036, %v2475
    %v2604 = vadd.f32 %v2040, %v2476
    %v2605 = vadd.f32 %v2042, %v2477
    %v2606 = vadd.f32 %v2044, %v2478
    %v2607 = vadd.f32 %v2046, %v2479
    %v2608 = vadd.f32 %v2050, %v2480
    %v2609 = vadd.f32 %v2052, %v2481
    %v2610 = vadd.f32 %v2054, %v2482
    %v2611 = vadd.f32 %v2056, %v2483
    %v2612 = vadd.f32 %v2060, %v2484
    %v2613 = vadd.f32 %v2062, %v2485
    %v2614 = vadd.f32 %v2064, %v2486
    %v2615 = vadd.f32 %v2066, %v2487
    %v2616 = vadd.f32 %v2070, %v2488
    %v2617 = vadd.f32 %v2072, %v2489
    %v2618 = vadd.f32 %v2074, %v2490
    %v2619 = vadd.f32 %v2076, %v2491
    %v2620 = vadd.f32 %v2080, %v2492
    %v2621 = vadd.f32 %v2082, %v2493
    %v2622 = vadd.f32 %v2084, %v2494
    %v2623 = vadd.f32 %v2086, %v2495
    %v2624 = vadd.f32 %v2090, %v2496
    %v2625 = vadd.f32 %v2092, %v2497
    %v2626 = vadd.f32 %v2094, %v2498
    %v2627 = vadd.f32 %v2096, %v2499
    %v2628 = vadd.f32 %v2100, %v2500
    %v2629 = vadd.f32 %v2102, %v2501
    %v2630 = vadd.f32 %v2104, %v2502
    %v2631 = vadd.f32 %v2106, %v2503
    %v2632 = vadd.f32 %v2110, %v2504
    %v2633 = vadd.f32 %v2112, %v2505
    %v2634 = vadd.f32 %v2114, %v2506
    %v2635 = vadd.f32 %v2116, %v2507
    %v2636 = vadd.f32 %v2120, %v2508
    %v2637 = vadd.f32 %v2122, %v2509
    %v2638 = vadd.f32 %v2124, %v2510
    %v2639 = vadd.f32 %v2126, %v2511
    %v2640 = vmul.f32 %v2512, 0.7978846
    %v2641 = vmul.f32 %v2513, 0.7978846
    %v2642 = vmul.f32 %v2514, 0.7978846
    %v2643 = vmul.f32 %v2515, 0.7978846
    %v2644 = vmul.f32 %v2516, 0.7978846
    %v2645 = vmul.f32 %v2517, 0.7978846
    %v2646 = vmul.f32 %v2518, 0.7978846
    %v2647 = vmul.f32 %v2519, 0.7978846
    %v2648 = vmul.f32 %v2520, 0.7978846
    %v2649 = vmul.f32 %v2521, 0.7978846
    %v2650 = vmul.f32 %v2522, 0.7978846
    %v2651 = vmul.f32 %v2523, 0.7978846
    %v2652 = vmul.f32 %v2524, 0.7978846
    %v2653 = vmul.f32 %v2525, 0.7978846
    %v2654 = vmul.f32 %v2526, 0.7978846
    %v2655 = vmul.f32 %v2527, 0.7978846
    %v2656 = vmul.f32 %v2528, 0.7978846
    %v2657 = vmul.f32 %v2529, 0.7978846
    %v2658 = vmul.f32 %v2530, 0.7978846
    %v2659 = vmul.f32 %v2531, 0.7978846
    %v2660 = vmul.f32 %v2532, 0.7978846
    %v2661 = vmul.f32 %v2533, 0.7978846
    %v2662 = vmul.f32 %v2534, 0.7978846
    %v2663 = vmul.f32 %v2535, 0.7978846
    %v2664 = vmul.f32 %v2536, 0.7978846
    %v2665 = vmul.f32 %v2537, 0.7978846
    %v2666 = vmul.f32 %v2538, 0.7978846
    %v2667 = vmul.f32 %v2539, 0.7978846
    %v2668 = vmul.f32 %v2540, 0.7978846
    %v2669 = vmul.f32 %v2541, 0.7978846
    %v2670 = vmul.f32 %v2542, 0.7978846
    %v2671 = vmul.f32 %v2543, 0.7978846
    %v2672 = vmul.f32 %v2544, 0.7978846
    %v2673 = vmul.f32 %v2545, 0.7978846
    %v2674 = vmul.f32 %v2546, 0.7978846
    %v2675 = vmul.f32 %v2547, 0.7978846
    %v2676 = vmul.f32 %v2548, 0.7978846
    %v2677 = vmul.f32 %v2549, 0.7978846
    %v2678 = vmul.f32 %v2550, 0.7978846
    %v2679 = vmul.f32 %v2551, 0.7978846
    %v2680 = vmul.f32 %v2552, 0.7978846
    %v2681 = vmul.f32 %v2553, 0.7978846
    %v2682 = vmul.f32 %v2554, 0.7978846
    %v2683 = vmul.f32 %v2555, 0.7978846
    %v2684 = vmul.f32 %v2556, 0.7978846
    %v2685 = vmul.f32 %v2557, 0.7978846
    %v2686 = vmul.f32 %v2558, 0.7978846
    %v2687 = vmul.f32 %v2559, 0.7978846
    %v2688 = vmul.f32 %v2560, 0.7978846
    %v2689 = vmul.f32 %v2561, 0.7978846
    %v2690 = vmul.f32 %v2562, 0.7978846
    %v2691 = vmul.f32 %v2563, 0.7978846
    %v2692 = vmul.f32 %v2564, 0.7978846
    %v2693 = vmul.f32 %v2565, 0.7978846
    %v2694 = vmul.f32 %v2566, 0.7978846
    %v2695 = vmul.f32 %v2567, 0.7978846
    %v2696 = vmul.f32 %v2568, 0.7978846
    %v2697 = vmul.f32 %v2569, 0.7978846
    %v2698 = vmul.f32 %v2570, 0.7978846
    %v2699 = vmul.f32 %v2571, 0.7978846
    %v2700 = vmul.f32 %v2572, 0.7978846
    %v2701 = vmul.f32 %v2573, 0.7978846
    %v2702 = vmul.f32 %v2574, 0.7978846
    %v2703 = vmul.f32 %v2575, 0.7978846
    %v2704 = vmul.f32 %v2576, 0.7978846
    %v2705 = vmul.f32 %v2577, 0.7978846
    %v2706 = vmul.f32 %v2578, 0.7978846
    %v2707 = vmul.f32 %v2579, 0.7978846
    %v2708 = vmul.f32 %v2580, 0.7978846
    %v2709 = vmul.f32 %v2581, 0.7978846
    %v2710 = vmul.f32 %v2582, 0.7978846
    %v2711 = vmul.f32 %v2583, 0.7978846
    %v2712 = vmul.f32 %v2584, 0.7978846
    %v2713 = vmul.f32 %v2585, 0.7978846
    %v2714 = vmul.f32 %v2586, 0.7978846
    %v2715 = vmul.f32 %v2587, 0.7978846
    %v2716 = vmul.f32 %v2588, 0.7978846
    %v2717 = vmul.f32 %v2589, 0.7978846
    %v2718 = vmul.f32 %v2590, 0.7978846
    %v2719 = vmul.f32 %v2591, 0.7978846
    %v2720 = vmul.f32 %v2592, 0.7978846
    %v2721 = vmul.f32 %v2593, 0.7978846
    %v2722 = vmul.f32 %v2594, 0.7978846
    %v2723 = vmul.f32 %v2595, 0.7978846
    %v2724 = vmul.f32 %v2596, 0.7978846
    %v2725 = vmul.f32 %v2597, 0.7978846
    %v2726 = vmul.f32 %v2598, 0.7978846
    %v2727 = vmul.f32 %v2599, 0.7978846
    %v2728 = vmul.f32 %v2600, 0.7978846
    %v2729 = vmul.f32 %v2601, 0.7978846
    %v2730 = vmul.f32 %v2602, 0.7978846
    %v2731 = vmul.f32 %v2603, 0.7978846
    %v2732 = vmul.f32 %v2604, 0.7978846
    %v2733 = vmul.f32 %v2605, 0.7978846
    %v2734 = vmul.f32 %v2606, 0.7978846
    %v2735 = vmul.f32 %v2607, 0.7978846
    %v2736 = vmul.f32 %v2608, 0.7978846
    %v2737 = vmul.f32 %v2609, 0.7978846
    %v2738 = vmul.f32 %v2610, 0.7978846
    %v2739 = vmul.f32 %v2611, 0.7978846
    %v2740 = vmul.f32 %v2612, 0.7978846
    %v2741 = vmul.f32 %v2613, 0.7978846
    %v2742 = vmul.f32 %v2614, 0.7978846
    %v2743 = vmul.f32 %v2615, 0.7978846
    %v2744 = vmul.f32 %v2616, 0.7978846
    %v2745 = vmul.f32 %v2617, 0.7978846
    %v2746 = vmul.f32 %v2618, 0.7978846
    %v2747 = vmul.f32 %v2619, 0.7978846
    %v2748 = vmul.f32 %v2620, 0.7978846
    %v2749 = vmul.f32 %v2621, 0.7978846
    %v2750 = vmul.f32 %v2622, 0.7978846
    %v2751 = vmul.f32 %v2623, 0.7978846
    %v2752 = vmul.f32 %v2624, 0.7978846
    %v2753 = vmul.f32 %v2625, 0.7978846
    %v2754 = vmul.f32 %v2626, 0.7978846
    %v2755 = vmul.f32 %v2627, 0.7978846
    %v2756 = vmul.f32 %v2628, 0.7978846
    %v2757 = vmul.f32 %v2629, 0.7978846
    %v2758 = vmul.f32 %v2630, 0.7978846
    %v2759 = vmul.f32 %v2631, 0.7978846
    %v2760 = vmul.f32 %v2632, 0.7978846
    %v2761 = vmul.f32 %v2633, 0.7978846
    %v2762 = vmul.f32 %v2634, 0.7978846
    %v2763 = vmul.f32 %v2635, 0.7978846
    %v2764 = vmul.f32 %v2636, 0.7978846
    %v2765 = vmul.f32 %v2637, 0.7978846
    %v2766 = vmul.f32 %v2638, 0.7978846
    %v2767 = vmul.f32 %v2639, 0.7978846
    %v2768 = vtanh.pop %v2640
    %v2769 = vtanh.pop %v2641
    %v2770 = vtanh.pop %v2642
    %v2771 = vtanh.pop %v2643
    %v2772 = vtanh.pop %v2644
    %v2773 = vtanh.pop %v2645
    %v2774 = vtanh.pop %v2646
    %v2775 = vtanh.pop %v2647
    %v2776 = vtanh.pop %v2648
    %v2777 = vtanh.pop %v2649
    %v2778 = vtanh.pop %v2650
    %v2779 = vtanh.pop %v2651
    %v2780 = vtanh.pop %v2652
    %v2781 = vtanh.pop %v2653
    %v2782 = vtanh.pop %v2654
    %v2783 = vtanh.pop %v2655
    %v2784 = vtanh.pop %v2656
    %v2785 = vtanh.pop %v2657
    %v2786 = vtanh.pop %v2658
    %v2787 = vtanh.pop %v2659
    %v2788 = vtanh.pop %v2660
    %v2789 = vtanh.pop %v2661
    %v2790 = vtanh.pop %v2662
    %v2791 = vtanh.pop %v2663
    %v2792 = vtanh.pop %v2664
    %v2793 = vtanh.pop %v2665
    %v2794 = vtanh.pop %v2666
    %v2795 = vtanh.pop %v2667
    %v2796 = vtanh.pop %v2668
    %v2797 = vtanh.pop %v2669
    %v2798 = vtanh.pop %v2670
    %v2799 = vtanh.pop %v2671
    %v2800 = vtanh.pop %v2672
    %v2801 = vtanh.pop %v2673
    %v2802 = vtanh.pop %v2674
    %v2803 = vtanh.pop %v2675
    %v2804 = vtanh.pop %v2676
    %v2805 = vtanh.pop %v2677
    %v2806 = vtanh.pop %v2678
    %v2807 = vtanh.pop %v2679
    %v2808 = vtanh.pop %v2680
    %v2809 = vtanh.pop %v2681
    %v2810 = vtanh.pop %v2682
    %v2811 = vtanh.pop %v2683
    %v2812 = vtanh.pop %v2684
    %v2813 = vtanh.pop %v2685
    %v2814 = vtanh.pop %v2686
    %v2815 = vtanh.pop %v2687
    %v2816 = vtanh.pop %v2688
    %v2817 = vtanh.pop %v2689
    %v2818 = vtanh.pop %v2690
    %v2819 = vtanh.pop %v2691
    %v2820 = vtanh.pop %v2692
    %v2821 = vtanh.pop %v2693
    %v2822 = vtanh.pop %v2694
    %v2823 = vtanh.pop %v2695
    %v2824 = vtanh.pop %v2696
    %v2825 = vtanh.pop %v2697
    %v2826 = vtanh.pop %v2698
    %v2827 = vtanh.pop %v2699
    %v2828 = vtanh.pop %v2700
    %v2829 = vtanh.pop %v2701
    %v2830 = vtanh.pop %v2702
    %v2831 = vtanh.pop %v2703
    %v2832 = vtanh.pop %v2704
    %v2833 = vtanh.pop %v2705
    %v2834 = vtanh.pop %v2706
    %v2835 = vtanh.pop %v2707
    %v2836 = vtanh.pop %v2708
    %v2837 = vtanh.pop %v2709
    %v2838 = vtanh.pop %v2710
    %v2839 = vtanh.pop %v2711
    %v2840 = vtanh.pop %v2712
    %v2841 = vtanh.pop %v2713
    %v2842 = vtanh.pop %v2714
    %v2843 = vtanh.pop %v2715
    %v2844 = vtanh.pop %v2716
    %v2845 = vtanh.pop %v2717
    %v2846 = vtanh.pop %v2718
    %v2847 = vtanh.pop %v2719
    %v2848 = vtanh.pop %v2720
    %v2849 = vtanh.pop %v2721
    %v2850 = vtanh.pop %v2722
    %v2851 = vtanh.pop %v2723
    %v2852 = vtanh.pop %v2724
    %v2853 = vtanh.pop %v2725
    %v2854 = vtanh.pop %v2726
    %v2855 = vtanh.pop %v2727
    %v2856 = vtanh.pop %v2728
    %v2857 = vtanh.pop %v2729
    %v2858 = vtanh.pop %v2730
    %v2859 = vtanh.pop %v2731
    %v2860 = vtanh.pop %v2732
    %v2861 = vtanh.pop %v2733
    %v2862 = vtanh.pop %v2734
    %v2863 = vtanh.pop %v2735
    %v2864 = vtanh.pop %v2736
    %v2865 = vtanh.pop %v2737
    %v2866 = vtanh.pop %v2738
    %v2867 = vtanh.pop %v2739
    %v2868 = vtanh.pop %v2740
    %v2869 = vtanh.pop %v2741
    %v2870 = vtanh.pop %v2742
    %v2871 = vtanh.pop %v2743
    %v2872 = vtanh.pop %v2744
    %v2873 = vtanh.pop %v2745
    %v2874 = vtanh.pop %v2746
    %v2875 = vtanh.pop %v2747
    %v2876 = vtanh.pop %v2748
    %v2877 = vtanh.pop %v2749
    %v2878 = vtanh.pop %v2750
    %v2879 = vtanh.pop %v2751
    %v2880 = vtanh.pop %v2752
    %v2881 = vtanh.pop %v2753
    %v2882 = vtanh.pop %v2754
    %v2883 = vtanh.pop %v2755
    %v2884 = vtanh.pop %v2756
    %v2885 = vtanh.pop %v2757
    %v2886 = vtanh.pop %v2758
    %v2887 = vtanh.pop %v2759
    %v2888 = vtanh.pop %v2760
    %v2889 = vtanh.pop %v2761
    %v2890 = vtanh.pop %v2762
    %v2891 = vtanh.pop %v2763
    %v2892 = vtanh.pop %v2764
    %v2893 = vtanh.pop %v2765
    %v2894 = vtanh.pop %v2766
    %v2895 = vtanh.pop %v2767
    %v2896 = vadd.f32 %v2768, 1.0
    %v2897 = vadd.f32 %v2769, 1.0
    %v2898 = vadd.f32 %v2770, 1.0
    %v2899 = vadd.f32 %v2771, 1.0
    %v2900 = vadd.f32 %v2772, 1.0
    %v2901 = vadd.f32 %v2773, 1.0
    %v2902 = vadd.f32 %v2774, 1.0
    %v2903 = vadd.f32 %v2775, 1.0
    %v2904 = vadd.f32 %v2776, 1.0
    %v2905 = vadd.f32 %v2777, 1.0
    %v2906 = vadd.f32 %v2778, 1.0
    %v2907 = vadd.f32 %v2779, 1.0
    %v2908 = vadd.f32 %v2780, 1.0
    %v2909 = vadd.f32 %v2781, 1.0
    %v2910 = vadd.f32 %v2782, 1.0
    %v2911 = vadd.f32 %v2783, 1.0
    %v2912 = vadd.f32 %v2784, 1.0
    %v2913 = vadd.f32 %v2785, 1.0
    %v2914 = vadd.f32 %v2786, 1.0
    %v2915 = vadd.f32 %v2787, 1.0
    %v2916 = vadd.f32 %v2788, 1.0
    %v2917 = vadd.f32 %v2789, 1.0
    %v2918 = vadd.f32 %v2790, 1.0
    %v2919 = vadd.f32 %v2791, 1.0
    %v2920 = vadd.f32 %v2792, 1.0
    %v2921 = vadd.f32 %v2793, 1.0
    %v2922 = vadd.f32 %v2794, 1.0
    %v2923 = vadd.f32 %v2795, 1.0
    %v2924 = vadd.f32 %v2796, 1.0
    %v2925 = vadd.f32 %v2797, 1.0
    %v2926 = vadd.f32 %v2798, 1.0
    %v2927 = vadd.f32 %v2799, 1.0
    %v2928 = vadd.f32 %v2800, 1.0
    %v2929 = vadd.f32 %v2801, 1.0
    %v2930 = vadd.f32 %v2802, 1.0
    %v2931 = vadd.f32 %v2803, 1.0
    %v2932 = vadd.f32 %v2804, 1.0
    %v2933 = vadd.f32 %v2805, 1.0
    %v2934 = vadd.f32 %v2806, 1.0
    %v2935 = vadd.f32 %v2807, 1.0
    %v2936 = vadd.f32 %v2808, 1.0
    %v2937 = vadd.f32 %v2809, 1.0
    %v2938 = vadd.f32 %v2810, 1.0
    %v2939 = vadd.f32 %v2811, 1.0
    %v2940 = vadd.f32 %v2812, 1.0
    %v2941 = vadd.f32 %v2813, 1.0
    %v2942 = vadd.f32 %v2814, 1.0
    %v2943 = vadd.f32 %v2815, 1.0
    %v2944 = vadd.f32 %v2816, 1.0
    %v2945 = vadd.f32 %v2817, 1.0
    %v2946 = vadd.f32 %v2818, 1.0
    %v2947 = vadd.f32 %v2819, 1.0
    %v2948 = vadd.f32 %v2820, 1.0
    %v2949 = vadd.f32 %v2821, 1.0
    %v2950 = vadd.f32 %v2822, 1.0
    %v2951 = vadd.f32 %v2823, 1.0
    %v2952 = vadd.f32 %v2824, 1.0
    %v2953 = vadd.f32 %v2825, 1.0
    %v2954 = vadd.f32 %v2826, 1.0
    %v2955 = vadd.f32 %v2827, 1.0
    %v2956 = vadd.f32 %v2828, 1.0
    %v2957 = vadd.f32 %v2829, 1.0
    %v2958 = vadd.f32 %v2830, 1.0
    %v2959 = vadd.f32 %v2831, 1.0
    %v2960 = vadd.f32 %v2832, 1.0
    %v2961 = vadd.f32 %v2833, 1.0
    %v2962 = vadd.f32 %v2834, 1.0
    %v2963 = vadd.f32 %v2835, 1.0
    %v2964 = vadd.f32 %v2836, 1.0
    %v2965 = vadd.f32 %v2837, 1.0
    %v2966 = vadd.f32 %v2838, 1.0
    %v2967 = vadd.f32 %v2839, 1.0
    %v2968 = vadd.f32 %v2840, 1.0
    %v2969 = vadd.f32 %v2841, 1.0
    %v2970 = vadd.f32 %v2842, 1.0
    %v2971 = vadd.f32 %v2843, 1.0
    %v2972 = vadd.f32 %v2844, 1.0
    %v2973 = vadd.f32 %v2845, 1.0
    %v2974 = vadd.f32 %v2846, 1.0
    %v2975 = vadd.f32 %v2847, 1.0
    %v2976 = vadd.f32 %v2848, 1.0
    %v2977 = vadd.f32 %v2849, 1.0
    %v2978 = vadd.f32 %v2850, 1.0
    %v2979 = vadd.f32 %v2851, 1.0
    %v2980 = vadd.f32 %v2852, 1.0
    %v2981 = vadd.f32 %v2853, 1.0
    %v2982 = vadd.f32 %v2854, 1.0
    %v2983 = vadd.f32 %v2855, 1.0
    %v2984 = vadd.f32 %v2856, 1.0
    %v2985 = vadd.f32 %v2857, 1.0
    %v2986 = vadd.f32 %v2858, 1.0
    %v2987 = vadd.f32 %v2859, 1.0
    %v2988 = vadd.f32 %v2860, 1.0
    %v2989 = vadd.f32 %v2861, 1.0
    %v2990 = vadd.f32 %v2862, 1.0
    %v2991 = vadd.f32 %v2863, 1.0
    %v2992 = vadd.f32 %v2864, 1.0
    %v2993 = vadd.f32 %v2865, 1.0
    %v2994 = vadd.f32 %v2866, 1.0
    %v2995 = vadd.f32 %v2867, 1.0
    %v2996 = vadd.f32 %v2868, 1.0
    %v2997 = vadd.f32 %v2869, 1.0
    %v2998 = vadd.f32 %v2870, 1.0
    %v2999 = vadd.f32 %v2871, 1.0
    %v3000 = vadd.f32 %v2872, 1.0
    %v3001 = vadd.f32 %v2873, 1.0
    %v3002 = vadd.f32 %v2874, 1.0
    %v3003 = vadd.f32 %v2875, 1.0
    %v3004 = vadd.f32 %v2876, 1.0
    %v3005 = vadd.f32 %v2877, 1.0
    %v3006 = vadd.f32 %v2878, 1.0
    %v3007 = vadd.f32 %v2879, 1.0
    %v3008 = vadd.f32 %v2880, 1.0
    %v3009 = vadd.f32 %v2881, 1.0
    %v3010 = vadd.f32 %v2882, 1.0
    %v3011 = vadd.f32 %v2883, 1.0
    %v3012 = vadd.f32 %v2884, 1.0
    %v3013 = vadd.f32 %v2885, 1.0
    %v3014 = vadd.f32 %v2886, 1.0
    %v3015 = vadd.f32 %v2887, 1.0
    %v3016 = vadd.f32 %v2888, 1.0
    %v3017 = vadd.f32 %v2889, 1.0
    %v3018 = vadd.f32 %v2890, 1.0
    %v3019 = vadd.f32 %v2891, 1.0
    %v3020 = vadd.f32 %v2892, 1.0
    %v3021 = vadd.f32 %v2893, 1.0
    %v3022 = vadd.f32 %v2894, 1.0
    %v3023 = vadd.f32 %v2895, 1.0
    %v3024 = vmul.f32 %v2896, 0.5
    %v3025 = vmul.f32 %v2897, 0.5
    %v3026 = vmul.f32 %v2898, 0.5
    %v3027 = vmul.f32 %v2899, 0.5
    %v3028 = vmul.f32 %v2900, 0.5
    %v3029 = vmul.f32 %v2901, 0.5
    %v3030 = vmul.f32 %v2902, 0.5
    %v3031 = vmul.f32 %v2903, 0.5
    %v3032 = vmul.f32 %v2904, 0.5
    %v3033 = vmul.f32 %v2905, 0.5
    %v3034 = vmul.f32 %v2906, 0.5
    %v3035 = vmul.f32 %v2907, 0.5
    %v3036 = vmul.f32 %v2908, 0.5
    %v3037 = vmul.f32 %v2909, 0.5
    %v3038 = vmul.f32 %v2910, 0.5
    %v3039 = vmul.f32 %v2911, 0.5
    %v3040 = vmul.f32 %v2912, 0.5
    %v3041 = vmul.f32 %v2913, 0.5
    %v3042 = vmul.f32 %v2914, 0.5
    %v3043 = vmul.f32 %v2915, 0.5
    %v3044 = vmul.f32 %v2916, 0.5
    %v3045 = vmul.f32 %v2917, 0.5
    %v3046 = vmul.f32 %v2918, 0.5
    %v3047 = vmul.f32 %v2919, 0.5
    %v3048 = vmul.f32 %v2920, 0.5
    %v3049 = vmul.f32 %v2921, 0.5
    %v3050 = vmul.f32 %v2922, 0.5
    %v3051 = vmul.f32 %v2923, 0.5
    %v3052 = vmul.f32 %v2924, 0.5
    %v3053 = vmul.f32 %v2925, 0.5
    %v3054 = vmul.f32 %v2926, 0.5
    %v3055 = vmul.f32 %v2927, 0.5
    %v3056 = vmul.f32 %v2928, 0.5
    %v3057 = vmul.f32 %v2929, 0.5
    %v3058 = vmul.f32 %v2930, 0.5
    %v3059 = vmul.f32 %v2931, 0.5
    %v3060 = vmul.f32 %v2932, 0.5
    %v3061 = vmul.f32 %v2933, 0.5
    %v3062 = vmul.f32 %v2934, 0.5
    %v3063 = vmul.f32 %v2935, 0.5
    %v3064 = vmul.f32 %v2936, 0.5
    %v3065 = vmul.f32 %v2937, 0.5
    %v3066 = vmul.f32 %v2938, 0.5
    %v3067 = vmul.f32 %v2939, 0.5
    %v3068 = vmul.f32 %v2940, 0.5
    %v3069 = vmul.f32 %v2941, 0.5
    %v3070 = vmul.f32 %v2942, 0.5
    %v3071 = vmul.f32 %v2943, 0.5
    %v3072 = vmul.f32 %v2944, 0.5
    %v3073 = vmul.f32 %v2945, 0.5
    %v3074 = vmul.f32 %v2946, 0.5
    %v3075 = vmul.f32 %v2947, 0.5
    %v3076 = vmul.f32 %v2948, 0.5
    %v3077 = vmul.f32 %v2949, 0.5
    %v3078 = vmul.f32 %v2950, 0.5
    %v3079 = vmul.f32 %v2951, 0.5
    %v3080 = vmul.f32 %v2952, 0.5
    %v3081 = vmul.f32 %v2953, 0.5
    %v3082 = vmul.f32 %v2954, 0.5
    %v3083 = vmul.f32 %v2955, 0.5
    %v3084 = vmul.f32 %v2956, 0.5
    %v3085 = vmul.f32 %v2957, 0.5
    %v3086 = vmul.f32 %v2958, 0.5
    %v3087 = vmul.f32 %v2959, 0.5
    %v3088 = vmul.f32 %v2960, 0.5
    %v3089 = vmul.f32 %v2961, 0.5
    %v3090 = vmul.f32 %v2962, 0.5
    %v3091 = vmul.f32 %v2963, 0.5
    %v3092 = vmul.f32 %v2964, 0.5
    %v3093 = vmul.f32 %v2965, 0.5
    %v3094 = vmul.f32 %v2966, 0.5
    %v3095 = vmul.f32 %v2967, 0.5
    %v3096 = vmul.f32 %v2968, 0.5
    %v3097 = vmul.f32 %v2969, 0.5
    %v3098 = vmul.f32 %v2970, 0.5
    %v3099 = vmul.f32 %v2971, 0.5
    %v3100 = vmul.f32 %v2972, 0.5
    %v3101 = vmul.f32 %v2973, 0.5
    %v3102 = vmul.f32 %v2974, 0.5
    %v3103 = vmul.f32 %v2975, 0.5
    %v3104 = vmul.f32 %v2976, 0.5
    %v3105 = vmul.f32 %v2977, 0.5
    %v3106 = vmul.f32 %v2978, 0.5
    %v3107 = vmul.f32 %v2979, 0.5
    %v3108 = vmul.f32 %v2980, 0.5
    %v3109 = vmul.f32 %v2981, 0.5
    %v3110 = vmul.f32 %v2982, 0.5
    %v3111 = vmul.f32 %v2983, 0.5
    %v3112 = vmul.f32 %v2984, 0.5
    %v3113 = vmul.f32 %v2985, 0.5
    %v3114 = vmul.f32 %v2986, 0.5
    %v3115 = vmul.f32 %v2987, 0.5
    %v3116 = vmul.f32 %v2988, 0.5
    %v3117 = vmul.f32 %v2989, 0.5
    %v3118 = vmul.f32 %v2990, 0.5
    %v3119 = vmul.f32 %v2991, 0.5
    %v3120 = vmul.f32 %v2992, 0.5
    %v3121 = vmul.f32 %v2993, 0.5
    %v3122 = vmul.f32 %v2994, 0.5
    %v3123 = vmul.f32 %v2995, 0.5
    %v3124 = vmul.f32 %v2996, 0.5
    %v3125 = vmul.f32 %v2997, 0.5
    %v3126 = vmul.f32 %v2998, 0.5
    %v3127 = vmul.f32 %v2999, 0.5
    %v3128 = vmul.f32 %v3000, 0.5
    %v3129 = vmul.f32 %v3001, 0.5
    %v3130 = vmul.f32 %v3002, 0.5
    %v3131 = vmul.f32 %v3003, 0.5
    %v3132 = vmul.f32 %v3004, 0.5
    %v3133 = vmul.f32 %v3005, 0.5
    %v3134 = vmul.f32 %v3006, 0.5
    %v3135 = vmul.f32 %v3007, 0.5
    %v3136 = vmul.f32 %v3008, 0.5
    %v3137 = vmul.f32 %v3009, 0.5
    %v3138 = vmul.f32 %v3010, 0.5
    %v3139 = vmul.f32 %v3011, 0.5
    %v3140 = vmul.f32 %v3012, 0.5
    %v3141 = vmul.f32 %v3013, 0.5
    %v3142 = vmul.f32 %v3014, 0.5
    %v3143 = vmul.f32 %v3015, 0.5
    %v3144 = vmul.f32 %v3016, 0.5
    %v3145 = vmul.f32 %v3017, 0.5
    %v3146 = vmul.f32 %v3018, 0.5
    %v3147 = vmul.f32 %v3019, 0.5
    %v3148 = vmul.f32 %v3020, 0.5
    %v3149 = vmul.f32 %v3021, 0.5
    %v3150 = vmul.f32 %v3022, 0.5
    %v3151 = vmul.f32 %v3023, 0.5
    %v3152 = vmul.f32 %v1810, %v3024
    %v3153 = vmul.f32 %v1812, %v3025
    %v3154 = vmul.f32 %v1814, %v3026
    %v3155 = vmul.f32 %v1816, %v3027
    %v3156 = vmul.f32 %v1820, %v3028
    %v3157 = vmul.f32 %v1822, %v3029
    %v3158 = vmul.f32 %v1824, %v3030
    %v3159 = vmul.f32 %v1826, %v3031
    %v3160 = vmul.f32 %v1830, %v3032
    %v3161 = vmul.f32 %v1832, %v3033
    %v3162 = vmul.f32 %v1834, %v3034
    %v3163 = vmul.f32 %v1836, %v3035
    %v3164 = vmul.f32 %v1840, %v3036
    %v3165 = vmul.f32 %v1842, %v3037
    %v3166 = vmul.f32 %v1844, %v3038
    %v3167 = vmul.f32 %v1846, %v3039
    %v3168 = vmul.f32 %v1850, %v3040
    %v3169 = vmul.f32 %v1852, %v3041
    %v3170 = vmul.f32 %v1854, %v3042
    %v3171 = vmul.f32 %v1856, %v3043
    %v3172 = vmul.f32 %v1860, %v3044
    %v3173 = vmul.f32 %v1862, %v3045
    %v3174 = vmul.f32 %v1864, %v3046
    %v3175 = vmul.f32 %v1866, %v3047
    %v3176 = vmul.f32 %v1870, %v3048
    %v3177 = vmul.f32 %v1872, %v3049
    %v3178 = vmul.f32 %v1874, %v3050
    %v3179 = vmul.f32 %v1876, %v3051
    %v3180 = vmul.f32 %v1880, %v3052
    %v3181 = vmul.f32 %v1882, %v3053
    %v3182 = vmul.f32 %v1884, %v3054
    %v3183 = vmul.f32 %v1886, %v3055
    %v3184 = vmul.f32 %v1890, %v3056
    %v3185 = vmul.f32 %v1892, %v3057
    %v3186 = vmul.f32 %v1894, %v3058
    %v3187 = vmul.f32 %v1896, %v3059
    %v3188 = vmul.f32 %v1900, %v3060
    %v3189 = vmul.f32 %v1902, %v3061
    %v3190 = vmul.f32 %v1904, %v3062
    %v3191 = vmul.f32 %v1906, %v3063
    %v3192 = vmul.f32 %v1910, %v3064
    %v3193 = vmul.f32 %v1912, %v3065
    %v3194 = vmul.f32 %v1914, %v3066
    %v3195 = vmul.f32 %v1916, %v3067
    %v3196 = vmul.f32 %v1920, %v3068
    %v3197 = vmul.f32 %v1922, %v3069
    %v3198 = vmul.f32 %v1924, %v3070
    %v3199 = vmul.f32 %v1926, %v3071
    %v3200 = vmul.f32 %v1930, %v3072
    %v3201 = vmul.f32 %v1932, %v3073
    %v3202 = vmul.f32 %v1934, %v3074
    %v3203 = vmul.f32 %v1936, %v3075
    %v3204 = vmul.f32 %v1940, %v3076
    %v3205 = vmul.f32 %v1942, %v3077
    %v3206 = vmul.f32 %v1944, %v3078
    %v3207 = vmul.f32 %v1946, %v3079
    %v3208 = vmul.f32 %v1950, %v3080
    %v3209 = vmul.f32 %v1952, %v3081
    %v3210 = vmul.f32 %v1954, %v3082
    %v3211 = vmul.f32 %v1956, %v3083
    %v3212 = vmul.f32 %v1960, %v3084
    %v3213 = vmul.f32 %v1962, %v3085
    %v3214 = vmul.f32 %v1964, %v3086
    %v3215 = vmul.f32 %v1966, %v3087
    %v3216 = vmul.f32 %v1970, %v3088
    %v3217 = vmul.f32 %v1972, %v3089
    %v3218 = vmul.f32 %v1974, %v3090
    %v3219 = vmul.f32 %v1976, %v3091
    %v3220 = vmul.f32 %v1980, %v3092
    %v3221 = vmul.f32 %v1982, %v3093
    %v3222 = vmul.f32 %v1984, %v3094
    %v3223 = vmul.f32 %v1986, %v3095
    %v3224 = vmul.f32 %v1990, %v3096
    %v3225 = vmul.f32 %v1992, %v3097
    %v3226 = vmul.f32 %v1994, %v3098
    %v3227 = vmul.f32 %v1996, %v3099
    %v3228 = vmul.f32 %v2000, %v3100
    %v3229 = vmul.f32 %v2002, %v3101
    %v3230 = vmul.f32 %v2004, %v3102
    %v3231 = vmul.f32 %v2006, %v3103
    %v3232 = vmul.f32 %v2010, %v3104
    %v3233 = vmul.f32 %v2012, %v3105
    %v3234 = vmul.f32 %v2014, %v3106
    %v3235 = vmul.f32 %v2016, %v3107
    %v3236 = vmul.f32 %v2020, %v3108
    %v3237 = vmul.f32 %v2022, %v3109
    %v3238 = vmul.f32 %v2024, %v3110
    %v3239 = vmul.f32 %v2026, %v3111
    %v3240 = vmul.f32 %v2030, %v3112
    %v3241 = vmul.f32 %v2032, %v3113
    %v3242 = vmul.f32 %v2034, %v3114
    %v3243 = vmul.f32 %v2036, %v3115
    %v3244 = vmul.f32 %v2040, %v3116
    %v3245 = vmul.f32 %v2042, %v3117
    %v3246 = vmul.f32 %v2044, %v3118
    %v3247 = vmul.f32 %v2046, %v3119
    %v3248 = vmul.f32 %v2050, %v3120
    %v3249 = vmul.f32 %v2052, %v3121
    %v3250 = vmul.f32 %v2054, %v3122
    %v3251 = vmul.f32 %v2056, %v3123
    %v3252 = vmul.f32 %v2060, %v3124
    %v3253 = vmul.f32 %v2062, %v3125
    %v3254 = vmul.f32 %v2064, %v3126
    %v3255 = vmul.f32 %v2066, %v3127
    %v3256 = vmul.f32 %v2070, %v3128
    %v3257 = vmul.f32 %v2072, %v3129
    %v3258 = vmul.f32 %v2074, %v3130
    %v3259 = vmul.f32 %v2076, %v3131
    %v3260 = vmul.f32 %v2080, %v3132
    %v3261 = vmul.f32 %v2082, %v3133
    %v3262 = vmul.f32 %v2084, %v3134
    %v3263 = vmul.f32 %v2086, %v3135
    %v3264 = vmul.f32 %v2090, %v3136
    %v3265 = vmul.f32 %v2092, %v3137
    %v3266 = vmul.f32 %v2094, %v3138
    %v3267 = vmul.f32 %v2096, %v3139
    %v3268 = vmul.f32 %v2100, %v3140
    %v3269 = vmul.f32 %v2102, %v3141
    %v3270 = vmul.f32 %v2104, %v3142
    %v3271 = vmul.f32 %v2106, %v3143
    %v3272 = vmul.f32 %v2110, %v3144
    %v3273 = vmul.f32 %v2112, %v3145
    %v3274 = vmul.f32 %v2114, %v3146
    %v3275 = vmul.f32 %v2116, %v3147
    %v3276 = vmul.f32 %v2120, %v3148
    %v3277 = vmul.f32 %v2122, %v3149
    %v3278 = vmul.f32 %v2124, %v3150
    %v3279 = vmul.f32 %v2126, %v3151
    %v3280 = vld [vmem:[#allocation3] sm:$0xff]
    %v3281 = vld [vmem:[#allocation3 + $0x8] sm:$0xff]
    %v3282 = vld [vmem:[#allocation3 + $0x10] sm:$0xff]
    %v3283 = vld [vmem:[#allocation3 + $0x18] sm:$0xff]
    %v3284 = vld [vmem:[#allocation3 + $0x20] sm:$0xff]
    %v3285 = vld [vmem:[#allocation3 + $0x28] sm:$0xff]
    %v3286 = vld [vmem:[#allocation3 + $0x30] sm:$0xff]
    %v3287 = vld [vmem:[#allocation3 + $0x38] sm:$0xff]
    %v3288 = vld [vmem:[#allocation3 + $0x40] sm:$0xff]
    %v3289 = vld [vmem:[#allocation3 + $0x48] sm:$0xff]
    %v3290 = vld [vmem:[#allocation3 + $0x50] sm:$0xff]
    %v3291 = vld [vmem:[#allocation3 + $0x58] sm:$0xff]
    %v3292 = vld [vmem:[#allocation3 + $0x60] sm:$0xff]
    %v3293 = vld [vmem:[#allocation3 + $0x68] sm:$0xff]
    %v3294 = vld [vmem:[#allocation3 + $0x70] sm:$0xff]
    %v3295 = vld [vmem:[#allocation3 + $0x78] sm:$0xff]
    %v3296 = vld [vmem:[#allocation3 + $0x80] sm:$0xff]
    %v3297 = vld [vmem:[#allocation3 + $0x88] sm:$0xff]
    %v3298 = vld [vmem:[#allocation3 + $0x90] sm:$0xff]
    %v3299 = vld [vmem:[#allocation3 + $0x98] sm:$0xff]
    %v3300 = vld [vmem:[#allocation3 + $0xa0] sm:$0xff]
    %v3301 = vld [vmem:[#allocation3 + $0xa8] sm:$0xff]
    %v3302 = vld [vmem:[#allocation3 + $0xb0] sm:$0xff]
    %v3303 = vld [vmem:[#allocation3 + $0xb8] sm:$0xff]
    %v3304 = vld [vmem:[#allocation3 + $0xc0] sm:$0xff]
    %v3305 = vld [vmem:[#allocation3 + $0xc8] sm:$0xff]
    %v3306 = vld [vmem:[#allocation3 + $0xd0] sm:$0xff]
    %v3307 = vld [vmem:[#allocation3 + $0xd8] sm:$0xff]
    %v3308 = vld [vmem:[#allocation3 + $0xe0] sm:$0xff]
    %v3309 = vld [vmem:[#allocation3 + $0xe8] sm:$0xff]
    %v3310 = vld [vmem:[#allocation3 + $0xf0] sm:$0xff]
    %v3311 = vld [vmem:[#allocation3 + $0xf8] sm:$0xff]
    %v3312 = vld [vmem:[#allocation3 + $0x100] sm:$0xff]
    %v3313 = vld [vmem:[#allocation3 + $0x108] sm:$0xff]
    %v3314 = vld [vmem:[#allocation3 + $0x110] sm:$0xff]
    %v3315 = vld [vmem:[#allocation3 + $0x118] sm:$0xff]
    %v3316 = vld [vmem:[#allocation3 + $0x120] sm:$0xff]
    %v3317 = vld [vmem:[#allocation3 + $0x128] sm:$0xff]
    %v3318 = vld [vmem:[#allocation3 + $0x130] sm:$0xff]
    %v3319 = vld [vmem:[#allocation3 + $0x138] sm:$0xff]
    %v3320 = vld [vmem:[#allocation3 + $0x140] sm:$0xff]
    %v3321 = vld [vmem:[#allocation3 + $0x148] sm:$0xff]
    %v3322 = vld [vmem:[#allocation3 + $0x150] sm:$0xff]
    %v3323 = vld [vmem:[#allocation3 + $0x158] sm:$0xff]
    %v3324 = vld [vmem:[#allocation3 + $0x160] sm:$0xff]
    %v3325 = vld [vmem:[#allocation3 + $0x168] sm:$0xff]
    %v3326 = vld [vmem:[#allocation3 + $0x170] sm:$0xff]
    %v3327 = vld [vmem:[#allocation3 + $0x178] sm:$0xff]
    %v3328 = vld [vmem:[#allocation3 + $0x180] sm:$0xff]
    %v3329 = vld [vmem:[#allocation3 + $0x188] sm:$0xff]
    %v3330 = vld [vmem:[#allocation3 + $0x190] sm:$0xff]
    %v3331 = vld [vmem:[#allocation3 + $0x198] sm:$0xff]
    %v3332 = vld [vmem:[#allocation3 + $0x1a0] sm:$0xff]
    %v3333 = vld [vmem:[#allocation3 + $0x1a8] sm:$0xff]
    %v3334 = vld [vmem:[#allocation3 + $0x1b0] sm:$0xff]
    %v3335 = vld [vmem:[#allocation3 + $0x1b8] sm:$0xff]
    %v3336 = vld [vmem:[#allocation3 + $0x1c0] sm:$0xff]
    %v3337 = vld [vmem:[#allocation3 + $0x1c8] sm:$0xff]
    %v3338 = vld [vmem:[#allocation3 + $0x1d0] sm:$0xff]
    %v3339 = vld [vmem:[#allocation3 + $0x1d8] sm:$0xff]
    %v3340 = vld [vmem:[#allocation3 + $0x1e0] sm:$0xff]
    %v3341 = vld [vmem:[#allocation3 + $0x1e8] sm:$0xff]
    %v3342 = vld [vmem:[#allocation3 + $0x1f0] sm:$0xff]
    %v3343 = vld [vmem:[#allocation3 + $0x1f8] sm:$0xff]
    %v3344 = vpack.c.bf16 %v3154, %v3152
    %v3345 = vpack.c.bf16 %v3155, %v3153
    %v3346 = vpack.c.bf16 %v3158, %v3156
    %v3347 = vpack.c.bf16 %v3159, %v3157
    %v3348 = vpack.c.bf16 %v3162, %v3160
    %v3349 = vpack.c.bf16 %v3163, %v3161
    %v3350 = vpack.c.bf16 %v3166, %v3164
    %v3351 = vpack.c.bf16 %v3167, %v3165
    %v3352 = vpack.c.bf16 %v3170, %v3168
    %v3353 = vpack.c.bf16 %v3171, %v3169
    %v3354 = vpack.c.bf16 %v3174, %v3172
    %v3355 = vpack.c.bf16 %v3175, %v3173
    %v3356 = vpack.c.bf16 %v3178, %v3176
    %v3357 = vpack.c.bf16 %v3179, %v3177
    %v3358 = vpack.c.bf16 %v3182, %v3180
    %v3359 = vpack.c.bf16 %v3183, %v3181
    %v3360 = vpack.c.bf16 %v3186, %v3184
    %v3361 = vpack.c.bf16 %v3187, %v3185
    %v3362 = vpack.c.bf16 %v3190, %v3188
    %v3363 = vpack.c.bf16 %v3191, %v3189
    %v3364 = vpack.c.bf16 %v3194, %v3192
    %v3365 = vpack.c.bf16 %v3195, %v3193
    %v3366 = vpack.c.bf16 %v3198, %v3196
    %v3367 = vpack.c.bf16 %v3199, %v3197
    %v3368 = vpack.c.bf16 %v3202, %v3200
    %v3369 = vpack.c.bf16 %v3203, %v3201
    %v3370 = vpack.c.bf16 %v3206, %v3204
    %v3371 = vpack.c.bf16 %v3207, %v3205
    %v3372 = vpack.c.bf16 %v3210, %v3208
    %v3373 = vpack.c.bf16 %v3211, %v3209
    %v3374 = vpack.c.bf16 %v3214, %v3212
    %v3375 = vpack.c.bf16 %v3215, %v3213
    %v3376 = vpack.c.bf16 %v3218, %v3216
    %v3377 = vpack.c.bf16 %v3219, %v3217
    %v3378 = vpack.c.bf16 %v3222, %v3220
    %v3379 = vpack.c.bf16 %v3223, %v3221
    %v3380 = vpack.c.bf16 %v3226, %v3224
    %v3381 = vpack.c.bf16 %v3227, %v3225
    %v3382 = vpack.c.bf16 %v3230, %v3228
    %v3383 = vpack.c.bf16 %v3231, %v3229
    %v3384 = vpack.c.bf16 %v3234, %v3232
    %v3385 = vpack.c.bf16 %v3235, %v3233
    %v3386 = vpack.c.bf16 %v3238, %v3236
    %v3387 = vpack.c.bf16 %v3239, %v3237
    %v3388 = vpack.c.bf16 %v3242, %v3240
    %v3389 = vpack.c.bf16 %v3243, %v3241
    %v3390 = vpack.c.bf16 %v3246, %v3244
    %v3391 = vpack.c.bf16 %v3247, %v3245
    %v3392 = vpack.c.bf16 %v3250, %v3248
    %v3393 = vpack.c.bf16 %v3251, %v3249
    %v3394 = vpack.c.bf16 %v3254, %v3252
    %v3395 = vpack.c.bf16 %v3255, %v3253
    %v3396 = vpack.c.bf16 %v3258, %v3256
    %v3397 = vpack.c.bf16 %v3259, %v3257
    %v3398 = vpack.c.bf16 %v3262, %v3260
    %v3399 = vpack.c.bf16 %v3263, %v3261
    %v3400 = vpack.c.bf16 %v3266, %v3264
    %v3401 = vpack.c.bf16 %v3267, %v3265
    %v3402 = vpack.c.bf16 %v3270, %v3268
    %v3403 = vpack.c.bf16 %v3271, %v3269
    %v3404 = vpack.c.bf16 %v3274, %v3272
    %v3405 = vpack.c.bf16 %v3275, %v3273
    %v3406 = vpack.c.bf16 %v3278, %v3276
    %v3407 = vpack.c.bf16 %v3279, %v3277
    %v3408 = vld [vmem:[#allocation9] sm:$0xf]
    %v3409 = vld [vmem:[#allocation9 + $0x4] sm:$0xf]
    %v3410 = vld [vmem:[#allocation9 + $0x8] sm:$0xf]
    %v3411 = vld [vmem:[#allocation9 + $0xc] sm:$0xf]
    %v3412 = vld [vmem:[#allocation9 + $0x10] sm:$0xf]
    %v3413 = vld [vmem:[#allocation9 + $0x14] sm:$0xf]
    %v3414 = vld [vmem:[#allocation9 + $0x18] sm:$0xf]
    %v3415 = vld [vmem:[#allocation9 + $0x1c] sm:$0xf]
    %v3416 = vld [vmem:[#allocation9 + $0x20] sm:$0xf]
    %v3417 = vld [vmem:[#allocation9 + $0x24] sm:$0xf]
    %v3418 = vld [vmem:[#allocation9 + $0x28] sm:$0xf]
    %v3419 = vld [vmem:[#allocation9 + $0x2c] sm:$0xf]
    %v3420 = vld [vmem:[#allocation9 + $0x30] sm:$0xf]
    %v3421 = vld [vmem:[#allocation9 + $0x34] sm:$0xf]
    %v3422 = vld [vmem:[#allocation9 + $0x38] sm:$0xf]
    %v3423 = vld [vmem:[#allocation9 + $0x3c] sm:$0xf]
    %v3424 = vld [vmem:[#allocation9 + $0x40] sm:$0xf]
    %v3425 = vld [vmem:[#allocation9 + $0x44] sm:$0xf]
    %v3426 = vld [vmem:[#allocation9 + $0x48] sm:$0xf]
    %v3427 = vld [vmem:[#allocation9 + $0x4c] sm:$0xf]
    %v3428 = vld [vmem:[#allocation9 + $0x50] sm:$0xf]
    %v3429 = vld [vmem:[#allocation9 + $0x54] sm:$0xf]
    %v3430 = vld [vmem:[#allocation9 + $0x58] sm:$0xf]
    %v3431 = vld [vmem:[#allocation9 + $0x5c] sm:$0xf]
    %v3432 = vld [vmem:[#allocation9 + $0x60] sm:$0xf]
    %v3433 = vld [vmem:[#allocation9 + $0x64] sm:$0xf]
    %v3434 = vld [vmem:[#allocation9 + $0x68] sm:$0xf]
    %v3435 = vld [vmem:[#allocation9 + $0x6c] sm:$0xf]
    %v3436 = vld [vmem:[#allocation9 + $0x70] sm:$0xf]
    %v3437 = vld [vmem:[#allocation9 + $0x74] sm:$0xf]
    %v3438 = vld [vmem:[#allocation9 + $0x78] sm:$0xf]
    %v3439 = vld [vmem:[#allocation9 + $0x7c] sm:$0xf]
    %v3472 = vunpack.c.l.b16 %v3408
    %v3473 = vunpack.c.l.b16 %v3409
    %v3474 = vunpack.c.l.b16 %v3410
    %v3475 = vunpack.c.l.b16 %v3411
    %v3476 = vunpack.c.l.b16 %v3412
    %v3477 = vunpack.c.l.b16 %v3413
    %v3478 = vunpack.c.l.b16 %v3414
    %v3479 = vunpack.c.l.b16 %v3415
    %v3480 = vunpack.c.l.b16 %v3416
    %v3481 = vunpack.c.l.b16 %v3417
    %v3482 = vunpack.c.l.b16 %v3418
    %v3483 = vunpack.c.l.b16 %v3419
    %v3484 = vunpack.c.l.b16 %v3420
    %v3485 = vunpack.c.l.b16 %v3421
    %v3486 = vunpack.c.l.b16 %v3422
    %v3487 = vunpack.c.l.b16 %v3423
    %v3488 = vunpack.c.l.b16 %v3424
    %v3489 = vunpack.c.l.b16 %v3425
    %v3490 = vunpack.c.l.b16 %v3426
    %v3491 = vunpack.c.l.b16 %v3427
    %v3492 = vunpack.c.l.b16 %v3428
    %v3493 = vunpack.c.l.b16 %v3429
    %v3494 = vunpack.c.l.b16 %v3430
    %v3495 = vunpack.c.l.b16 %v3431
    %v3496 = vunpack.c.l.b16 %v3432
    %v3497 = vunpack.c.l.b16 %v3433
    %v3498 = vunpack.c.l.b16 %v3434
    %v3499 = vunpack.c.l.b16 %v3435
    %v3500 = vunpack.c.l.b16 %v3436
    %v3501 = vunpack.c.l.b16 %v3437
    %v3502 = vunpack.c.l.b16 %v3438
    %v3503 = vunpack.c.l.b16 %v3439
    %v3504 = vpack.c.b16 %v3473, %v3472
    %v3505 = vpack.c.b16 %v3475, %v3474
    %v3506 = vpack.c.b16 %v3477, %v3476
    %v3507 = vpack.c.b16 %v3479, %v3478
    %v3508 = vpack.c.b16 %v3481, %v3480
    %v3509 = vpack.c.b16 %v3483, %v3482
    %v3510 = vpack.c.b16 %v3485, %v3484
    %v3511 = vpack.c.b16 %v3487, %v3486
    %v3512 = vpack.c.b16 %v3489, %v3488
    %v3513 = vpack.c.b16 %v3491, %v3490
    %v3514 = vpack.c.b16 %v3493, %v3492
    %v3515 = vpack.c.b16 %v3495, %v3494
    %v3516 = vpack.c.b16 %v3497, %v3496
    %v3517 = vpack.c.b16 %v3499, %v3498
    %v3518 = vpack.c.b16 %v3501, %v3500
    %v3519 = vpack.c.b16 %v3503, %v3502
    %3536 = vmatprep.subr.bf16.mxu0 0
    %3537 = vmatpush1.bf16.msra.mxu0 %v3511
    %3538 = vmatprep.subr.bf16.mxu0 0
    %3539 = vmatpush1.bf16.msra.mxu0 %v3510
    %3540 = vmatprep.subr.bf16.mxu0 0
    %3541 = vmatpush1.bf16.msra.mxu0 %v3509
    %3542 = vmatprep.subr.bf16.mxu0 0
    %3543 = vmatpush1.bf16.msra.mxu0 %v3508
    %3544 = vmatprep.subr.bf16.mxu0 0
    %3545 = vmatpush1.bf16.msra.mxu0 %v3507
    %3546 = vmatprep.subr.bf16.mxu0 0
    %3547 = vmatpush1.bf16.msra.mxu0 %v3506
    %3548 = vmatprep.subr.bf16.mxu0 0
    %3549 = vmatpush1.bf16.msra.mxu0 %v3505
    %3550 = vmatprep.subr.bf16.mxu0 0
    %3551 = vmatpush1.bf16.msra.mxu0 %v3504
    %3552 = vmatprep.subr.bf16.mxu0 0
    %3553 = vmatpush2.bf16.msra.mxu0 %v3519
    %3554 = vmatprep.subr.bf16.mxu0 0
    %3555 = vmatpush2.bf16.msra.mxu0 %v3518
    %3556 = vmatprep.subr.bf16.mxu0 0
    %3557 = vmatpush2.bf16.msra.mxu0 %v3517
    %3558 = vmatprep.subr.bf16.mxu0 0
    %3559 = vmatpush2.bf16.msra.mxu0 %v3516
    %3560 = vmatprep.subr.bf16.mxu0 0
    %3561 = vmatpush2.bf16.msra.mxu0 %v3515
    %3562 = vmatprep.subr.bf16.mxu0 0
    %3563 = vmatpush2.bf16.msra.mxu0 %v3514
    %3564 = vmatprep.subr.bf16.mxu0 0
    %3565 = vmatpush2.bf16.msra.mxu0 %v3513
    %3566 = vmatprep.subr.bf16.mxu0 0
    %3567 = vmatpush2.bf16.msra.mxu0 %v3512
    %3568 = vmatprep.mubr.bf16.mxu0 %v3345
    %3569 = vmatmul.mubr.bf16.gmra.mxu0 %v3344
    %v3570 = vpop.f32.mrf.mxu0
    %v3571 = vadd.f32 0.0, %v3570
    %v3572 = vpop.f32.mrf.mxu0
    %v3573 = vpop.f32.mrf.mxu0
    %v3574 = vadd.f32 0.0, %v3573
    %v3575 = vpop.f32.mrf.mxu0
    %3576 = vmatprep.mubr.bf16.mxu0 %v3347
    %3577 = vmatmul.mubr.bf16.gmra.mxu0 %v3346
    %v3578 = vpop.f32.mrf.mxu0
    %v3579 = vadd.f32 0.0, %v3578
    %v3580 = vpop.f32.mrf.mxu0
    %v3581 = vpop.f32.mrf.mxu0
    %v3582 = vadd.f32 0.0, %v3581
    %v3583 = vpop.f32.mrf.mxu0
    %3584 = vmatprep.mubr.bf16.mxu0 %v3349
    %3585 = vmatmul.mubr.bf16.gmra.mxu0 %v3348
    %v3586 = vpop.f32.mrf.mxu0
    %v3587 = vadd.f32 0.0, %v3586
    %v3588 = vpop.f32.mrf.mxu0
    %v3589 = vpop.f32.mrf.mxu0
    %v3590 = vadd.f32 0.0, %v3589
    %v3591 = vpop.f32.mrf.mxu0
    %3592 = vmatprep.mubr.bf16.mxu0 %v3351
    %3593 = vmatmul.mubr.bf16.gmra.mxu0 %v3350
    %v3594 = vpop.f32.mrf.mxu0
    %v3595 = vadd.f32 0.0, %v3594
    %v3596 = vpop.f32.mrf.mxu0
    %v3597 = vpop.f32.mrf.mxu0
    %v3598 = vadd.f32 0.0, %v3597
    %v3599 = vpop.f32.mrf.mxu0
    %3600 = vmatprep.mubr.bf16.mxu0 %v3353
    %3601 = vmatmul.mubr.bf16.gmra.mxu0 %v3352
    %v3602 = vpop.f32.mrf.mxu0
    %v3603 = vadd.f32 0.0, %v3602
    %v3604 = vpop.f32.mrf.mxu0
    %v3605 = vpop.f32.mrf.mxu0
    %v3606 = vadd.f32 0.0, %v3605
    %v3607 = vpop.f32.mrf.mxu0
    %3608 = vmatprep.mubr.bf16.mxu0 %v3355
    %3609 = vmatmul.mubr.bf16.gmra.mxu0 %v3354
    %v3610 = vpop.f32.mrf.mxu0
    %v3611 = vadd.f32 0.0, %v3610
    %v3612 = vpop.f32.mrf.mxu0
    %v3613 = vpop.f32.mrf.mxu0
    %v3614 = vadd.f32 0.0, %v3613
    %v3615 = vpop.f32.mrf.mxu0
    %3616 = vmatprep.mubr.bf16.mxu0 %v3357
    %3617 = vmatmul.mubr.bf16.gmra.mxu0 %v3356
    %v3618 = vpop.f32.mrf.mxu0
    %v3619 = vadd.f32 0.0, %v3618
    %v3620 = vpop.f32.mrf.mxu0
    %v3621 = vpop.f32.mrf.mxu0
    %v3622 = vadd.f32 0.0, %v3621
    %v3623 = vpop.f32.mrf.mxu0
    %3624 = vmatprep.mubr.bf16.mxu0 %v3359
    %3625 = vmatmul.mubr.bf16.gmra.mxu0 %v3358
    %v3626 = vpop.f32.mrf.mxu0
    %v3627 = vadd.f32 0.0, %v3626
    %v3628 = vpop.f32.mrf.mxu0
    %v3629 = vpop.f32.mrf.mxu0
    %v3630 = vadd.f32 0.0, %v3629
    %v3631 = vpop.f32.mrf.mxu0
    %3632 = vmatprep.mubr.bf16.mxu0 %v3361
    %3633 = vmatmul.mubr.bf16.gmra.mxu0 %v3360
    %v3634 = vpop.f32.mrf.mxu0
    %v3635 = vadd.f32 0.0, %v3634
    %v3636 = vpop.f32.mrf.mxu0
    %v3637 = vpop.f32.mrf.mxu0
    %v3638 = vadd.f32 0.0, %v3637
    %v3639 = vpop.f32.mrf.mxu0
    %3640 = vmatprep.mubr.bf16.mxu0 %v3363
    %3641 = vmatmul.mubr.bf16.gmra.mxu0 %v3362
    %v3642 = vpop.f32.mrf.mxu0
    %v3643 = vadd.f32 0.0, %v3642
    %v3644 = vpop.f32.mrf.mxu0
    %v3645 = vpop.f32.mrf.mxu0
    %v3646 = vadd.f32 0.0, %v3645
    %v3647 = vpop.f32.mrf.mxu0
    %3648 = vmatprep.mubr.bf16.mxu0 %v3365
    %3649 = vmatmul.mubr.bf16.gmra.mxu0 %v3364
    %v3650 = vpop.f32.mrf.mxu0
    %v3651 = vadd.f32 0.0, %v3650
    %v3652 = vpop.f32.mrf.mxu0
    %v3653 = vpop.f32.mrf.mxu0
    %v3654 = vadd.f32 0.0, %v3653
    %v3655 = vpop.f32.mrf.mxu0
    %3656 = vmatprep.mubr.bf16.mxu0 %v3367
    %3657 = vmatmul.mubr.bf16.gmra.mxu0 %v3366
    %v3658 = vpop.f32.mrf.mxu0
    %v3659 = vadd.f32 0.0, %v3658
    %v3660 = vpop.f32.mrf.mxu0
    %v3661 = vpop.f32.mrf.mxu0
    %v3662 = vadd.f32 0.0, %v3661
    %v3663 = vpop.f32.mrf.mxu0
    %3664 = vmatprep.mubr.bf16.mxu0 %v3369
    %3665 = vmatmul.mubr.bf16.gmra.mxu0 %v3368
    %v3666 = vpop.f32.mrf.mxu0
    %v3667 = vadd.f32 0.0, %v3666
    %v3668 = vpop.f32.mrf.mxu0
    %v3669 = vpop.f32.mrf.mxu0
    %v3670 = vadd.f32 0.0, %v3669
    %v3671 = vpop.f32.mrf.mxu0
    %3672 = vmatprep.mubr.bf16.mxu0 %v3371
    %3673 = vmatmul.mubr.bf16.gmra.mxu0 %v3370
    %v3674 = vpop.f32.mrf.mxu0
    %v3675 = vadd.f32 0.0, %v3674
    %v3676 = vpop.f32.mrf.mxu0
    %v3677 = vpop.f32.mrf.mxu0
    %v3678 = vadd.f32 0.0, %v3677
    %v3679 = vpop.f32.mrf.mxu0
    %3680 = vmatprep.mubr.bf16.mxu0 %v3373
    %3681 = vmatmul.mubr.bf16.gmra.mxu0 %v3372
    %v3682 = vpop.f32.mrf.mxu0
    %v3683 = vadd.f32 0.0, %v3682
    %v3684 = vpop.f32.mrf.mxu0
    %v3685 = vpop.f32.mrf.mxu0
    %v3686 = vadd.f32 0.0, %v3685
    %v3687 = vpop.f32.mrf.mxu0
    %3688 = vmatprep.mubr.bf16.mxu0 %v3375
    %3689 = vmatmul.mubr.bf16.gmra.mxu0 %v3374
    %v3690 = vpop.f32.mrf.mxu0
    %v3691 = vadd.f32 0.0, %v3690
    %v3692 = vpop.f32.mrf.mxu0
    %v3693 = vpop.f32.mrf.mxu0
    %v3694 = vadd.f32 0.0, %v3693
    %v3695 = vpop.f32.mrf.mxu0
    %3696 = vmatprep.mubr.bf16.mxu0 %v3377
    %3697 = vmatmul.mubr.bf16.gmra.mxu0 %v3376
    %v3698 = vpop.f32.mrf.mxu0
    %v3699 = vadd.f32 0.0, %v3698
    %v3700 = vpop.f32.mrf.mxu0
    %v3701 = vpop.f32.mrf.mxu0
    %v3702 = vadd.f32 0.0, %v3701
    %v3703 = vpop.f32.mrf.mxu0
    %3704 = vmatprep.mubr.bf16.mxu0 %v3379
    %3705 = vmatmul.mubr.bf16.gmra.mxu0 %v3378
    %v3706 = vpop.f32.mrf.mxu0
    %v3707 = vadd.f32 0.0, %v3706
    %v3708 = vpop.f32.mrf.mxu0
    %v3709 = vpop.f32.mrf.mxu0
    %v3710 = vadd.f32 0.0, %v3709
    %v3711 = vpop.f32.mrf.mxu0
    %3712 = vmatprep.mubr.bf16.mxu0 %v3381
    %3713 = vmatmul.mubr.bf16.gmra.mxu0 %v3380
    %v3714 = vpop.f32.mrf.mxu0
    %v3715 = vadd.f32 0.0, %v3714
    %v3716 = vpop.f32.mrf.mxu0
    %v3717 = vpop.f32.mrf.mxu0
    %v3718 = vadd.f32 0.0, %v3717
    %v3719 = vpop.f32.mrf.mxu0
    %3720 = vmatprep.mubr.bf16.mxu0 %v3383
    %3721 = vmatmul.mubr.bf16.gmra.mxu0 %v3382
    %v3722 = vpop.f32.mrf.mxu0
    %v3723 = vadd.f32 0.0, %v3722
    %v3724 = vpop.f32.mrf.mxu0
    %v3725 = vpop.f32.mrf.mxu0
    %v3726 = vadd.f32 0.0, %v3725
    %v3727 = vpop.f32.mrf.mxu0
    %3728 = vmatprep.mubr.bf16.mxu0 %v3385
    %3729 = vmatmul.mubr.bf16.gmra.mxu0 %v3384
    %v3730 = vpop.f32.mrf.mxu0
    %v3731 = vadd.f32 0.0, %v3730
    %v3732 = vpop.f32.mrf.mxu0
    %v3733 = vpop.f32.mrf.mxu0
    %v3734 = vadd.f32 0.0, %v3733
    %v3735 = vpop.f32.mrf.mxu0
    %3736 = vmatprep.mubr.bf16.mxu0 %v3387
    %3737 = vmatmul.mubr.bf16.gmra.mxu0 %v3386
    %v3738 = vpop.f32.mrf.mxu0
    %v3739 = vadd.f32 0.0, %v3738
    %v3740 = vpop.f32.mrf.mxu0
    %v3741 = vpop.f32.mrf.mxu0
    %v3742 = vadd.f32 0.0, %v3741
    %v3743 = vpop.f32.mrf.mxu0
    %3744 = vmatprep.mubr.bf16.mxu0 %v3389
    %3745 = vmatmul.mubr.bf16.gmra.mxu0 %v3388
    %v3746 = vpop.f32.mrf.mxu0
    %v3747 = vadd.f32 0.0, %v3746
    %v3748 = vpop.f32.mrf.mxu0
    %v3749 = vpop.f32.mrf.mxu0
    %v3750 = vadd.f32 0.0, %v3749
    %v3751 = vpop.f32.mrf.mxu0
    %3752 = vmatprep.mubr.bf16.mxu0 %v3391
    %3753 = vmatmul.mubr.bf16.gmra.mxu0 %v3390
    %v3754 = vpop.f32.mrf.mxu0
    %v3755 = vadd.f32 0.0, %v3754
    %v3756 = vpop.f32.mrf.mxu0
    %v3757 = vpop.f32.mrf.mxu0
    %v3758 = vadd.f32 0.0, %v3757
    %v3759 = vpop.f32.mrf.mxu0
    %3760 = vmatprep.mubr.bf16.mxu0 %v3393
    %3761 = vmatmul.mubr.bf16.gmra.mxu0 %v3392
    %v3762 = vpop.f32.mrf.mxu0
    %v3763 = vadd.f32 0.0, %v3762
    %v3764 = vpop.f32.mrf.mxu0
    %v3765 = vpop.f32.mrf.mxu0
    %v3766 = vadd.f32 0.0, %v3765
    %v3767 = vpop.f32.mrf.mxu0
    %3768 = vmatprep.mubr.bf16.mxu0 %v3395
    %3769 = vmatmul.mubr.bf16.gmra.mxu0 %v3394
    %v3770 = vpop.f32.mrf.mxu0
    %v3771 = vadd.f32 0.0, %v3770
    %v3772 = vpop.f32.mrf.mxu0
    %v3773 = vpop.f32.mrf.mxu0
    %v3774 = vadd.f32 0.0, %v3773
    %v3775 = vpop.f32.mrf.mxu0
    %3776 = vmatprep.mubr.bf16.mxu0 %v3397
    %3777 = vmatmul.mubr.bf16.gmra.mxu0 %v3396
    %v3778 = vpop.f32.mrf.mxu0
    %v3779 = vadd.f32 0.0, %v3778
    %v3780 = vpop.f32.mrf.mxu0
    %v3781 = vpop.f32.mrf.mxu0
    %v3782 = vadd.f32 0.0, %v3781
    %v3783 = vpop.f32.mrf.mxu0
    %3784 = vmatprep.mubr.bf16.mxu0 %v3399
    %3785 = vmatmul.mubr.bf16.gmra.mxu0 %v3398
    %v3786 = vpop.f32.mrf.mxu0
    %v3787 = vadd.f32 0.0, %v3786
    %v3788 = vpop.f32.mrf.mxu0
    %v3789 = vpop.f32.mrf.mxu0
    %v3790 = vadd.f32 0.0, %v3789
    %v3791 = vpop.f32.mrf.mxu0
    %3792 = vmatprep.mubr.bf16.mxu0 %v3401
    %3793 = vmatmul.mubr.bf16.gmra.mxu0 %v3400
    %v3794 = vpop.f32.mrf.mxu0
    %v3795 = vadd.f32 0.0, %v3794
    %v3796 = vpop.f32.mrf.mxu0
    %v3797 = vpop.f32.mrf.mxu0
    %v3798 = vadd.f32 0.0, %v3797
    %v3799 = vpop.f32.mrf.mxu0
    %3800 = vmatprep.mubr.bf16.mxu0 %v3403
    %3801 = vmatmul.mubr.bf16.gmra.mxu0 %v3402
    %v3802 = vpop.f32.mrf.mxu0
    %v3803 = vadd.f32 0.0, %v3802
    %v3804 = vpop.f32.mrf.mxu0
    %v3805 = vpop.f32.mrf.mxu0
    %v3806 = vadd.f32 0.0, %v3805
    %v3807 = vpop.f32.mrf.mxu0
    %3808 = vmatprep.mubr.bf16.mxu0 %v3405
    %3809 = vmatmul.mubr.bf16.gmra.mxu0 %v3404
    %v3810 = vpop.f32.mrf.mxu0
    %v3811 = vadd.f32 0.0, %v3810
    %v3812 = vpop.f32.mrf.mxu0
    %v3813 = vpop.f32.mrf.mxu0
    %v3814 = vadd.f32 0.0, %v3813
    %v3815 = vpop.f32.mrf.mxu0
    %3816 = vmatprep.mubr.bf16.mxu0 %v3407
    %3817 = vmatmul.mubr.bf16.gmra.mxu0 %v3406
    %v3818 = vpop.f32.mrf.mxu0
    %v3819 = vadd.f32 0.0, %v3818
    %v3820 = vpop.f32.mrf.mxu0
    %v3821 = vpop.f32.mrf.mxu0
    %v3822 = vadd.f32 0.0, %v3821
    %v3823 = vpop.f32.mrf.mxu0
    %3824 = vdwg.mxu0
    %v3825 = vadd.f32 %v3280, %v3571
    %v3826 = vadd.f32 %v3281, %v3574
    %v3827 = vadd.f32 %v3282, %v3579
    %v3828 = vadd.f32 %v3283, %v3582
    %v3829 = vadd.f32 %v3284, %v3587
    %v3830 = vadd.f32 %v3285, %v3590
    %v3831 = vadd.f32 %v3286, %v3595
    %v3832 = vadd.f32 %v3287, %v3598
    %v3833 = vadd.f32 %v3288, %v3603
    %v3834 = vadd.f32 %v3289, %v3606
    %v3835 = vadd.f32 %v3290, %v3611
    %v3836 = vadd.f32 %v3291, %v3614
    %v3837 = vadd.f32 %v3292, %v3619
    %v3838 = vadd.f32 %v3293, %v3622
    %v3839 = vadd.f32 %v3294, %v3627
    %v3840 = vadd.f32 %v3295, %v3630
    %v3841 = vadd.f32 %v3296, %v3635
    %v3842 = vadd.f32 %v3297, %v3638
    %v3843 = vadd.f32 %v3298, %v3643
    %v3844 = vadd.f32 %v3299, %v3646
    %v3845 = vadd.f32 %v3300, %v3651
    %v3846 = vadd.f32 %v3301, %v3654
    %v3847 = vadd.f32 %v3302, %v3659
    %v3848 = vadd.f32 %v3303, %v3662
    %v3849 = vadd.f32 %v3304, %v3667
    %v3850 = vadd.f32 %v3305, %v3670
    %v3851 = vadd.f32 %v3306, %v3675
    %v3852 = vadd.f32 %v3307, %v3678
    %v3853 = vadd.f32 %v3308, %v3683
    %v3854 = vadd.f32 %v3309, %v3686
    %v3855 = vadd.f32 %v3310, %v3691
    %v3856 = vadd.f32 %v3311, %v3694
    %v3857 = vadd.f32 %v3312, %v3699
    %v3858 = vadd.f32 %v3313, %v3702
    %v3859 = vadd.f32 %v3314, %v3707
    %v3860 = vadd.f32 %v3315, %v3710
    %v3861 = vadd.f32 %v3316, %v3715
    %v3862 = vadd.f32 %v3317, %v3718
    %v3863 = vadd.f32 %v3318, %v3723
    %v3864 = vadd.f32 %v3319, %v3726
    %v3865 = vadd.f32 %v3320, %v3731
    %v3866 = vadd.f32 %v3321, %v3734
    %v3867 = vadd.f32 %v3322, %v3739
    %v3868 = vadd.f32 %v3323, %v3742
    %v3869 = vadd.f32 %v3324, %v3747
    %v3870 = vadd.f32 %v3325, %v3750
    %v3871 = vadd.f32 %v3326, %v3755
    %v3872 = vadd.f32 %v3327, %v3758
    %v3873 = vadd.f32 %v3328, %v3763
    %v3874 = vadd.f32 %v3329, %v3766
    %v3875 = vadd.f32 %v3330, %v3771
    %v3876 = vadd.f32 %v3331, %v3774
    %v3877 = vadd.f32 %v3332, %v3779
    %v3878 = vadd.f32 %v3333, %v3782
    %v3879 = vadd.f32 %v3334, %v3787
    %v3880 = vadd.f32 %v3335, %v3790
    %v3881 = vadd.f32 %v3336, %v3795
    %v3882 = vadd.f32 %v3337, %v3798
    %v3883 = vadd.f32 %v3338, %v3803
    %v3884 = vadd.f32 %v3339, %v3806
    %v3885 = vadd.f32 %v3340, %v3811
    %v3886 = vadd.f32 %v3341, %v3814
    %v3887 = vadd.f32 %v3342, %v3819
    %v3888 = vadd.f32 %v3343, %v3822
    %3889 = vst [vmem:[#allocation3] sm:$0xff] %v3825
    %3890 = vst [vmem:[#allocation3 + $0x8] sm:$0xff] %v3826
    %3891 = vst [vmem:[#allocation3 + $0x10] sm:$0xff] %v3827
    %3892 = vst [vmem:[#allocation3 + $0x18] sm:$0xff] %v3828
    %3893 = vst [vmem:[#allocation3 + $0x20] sm:$0xff] %v3829
    %3894 = vst [vmem:[#allocation3 + $0x28] sm:$0xff] %v3830
    %3895 = vst [vmem:[#allocation3 + $0x30] sm:$0xff] %v3831
    %3896 = vst [vmem:[#allocation3 + $0x38] sm:$0xff] %v3832
    %3897 = vst [vmem:[#allocation3 + $0x40] sm:$0xff] %v3833
    %3898 = vst [vmem:[#allocation3 + $0x48] sm:$0xff] %v3834
    %3899 = vst [vmem:[#allocation3 + $0x50] sm:$0xff] %v3835
    %3900 = vst [vmem:[#allocation3 + $0x58] sm:$0xff] %v3836
    %3901 = vst [vmem:[#allocation3 + $0x60] sm:$0xff] %v3837
    %3902 = vst [vmem:[#allocation3 + $0x68] sm:$0xff] %v3838
    %3903 = vst [vmem:[#allocation3 + $0x70] sm:$0xff] %v3839
    %3904 = vst [vmem:[#allocation3 + $0x78] sm:$0xff] %v3840
    %3905 = vst [vmem:[#allocation3 + $0x80] sm:$0xff] %v3841
    %3906 = vst [vmem:[#allocation3 + $0x88] sm:$0xff] %v3842
    %3907 = vst [vmem:[#allocation3 + $0x90] sm:$0xff] %v3843
    %3908 = vst [vmem:[#allocation3 + $0x98] sm:$0xff] %v3844
    %3909 = vst [vmem:[#allocation3 + $0xa0] sm:$0xff] %v3845
    %3910 = vst [vmem:[#allocation3 + $0xa8] sm:$0xff] %v3846
    %3911 = vst [vmem:[#allocation3 + $0xb0] sm:$0xff] %v3847
    %3912 = vst [vmem:[#allocation3 + $0xb8] sm:$0xff] %v3848
    %3913 = vst [vmem:[#allocation3 + $0xc0] sm:$0xff] %v3849
    %3914 = vst [vmem:[#allocation3 + $0xc8] sm:$0xff] %v3850
    %3915 = vst [vmem:[#allocation3 + $0xd0] sm:$0xff] %v3851
    %3916 = vst [vmem:[#allocation3 + $0xd8] sm:$0xff] %v3852
    %3917 = vst [vmem:[#allocation3 + $0xe0] sm:$0xff] %v3853
    %3918 = vst [vmem:[#allocation3 + $0xe8] sm:$0xff] %v3854
    %3919 = vst [vmem:[#allocation3 + $0xf0] sm:$0xff] %v3855
    %3920 = vst [vmem:[#allocation3 + $0xf8] sm:$0xff] %v3856
    %3921 = vst [vmem:[#allocation3 + $0x100] sm:$0xff] %v3857
    %3922 = vst [vmem:[#allocation3 + $0x108] sm:$0xff] %v3858
    %3923 = vst [vmem:[#allocation3 + $0x110] sm:$0xff] %v3859
    %3924 = vst [vmem:[#allocation3 + $0x118] sm:$0xff] %v3860
    %3925 = vst [vmem:[#allocation3 + $0x120] sm:$0xff] %v3861
    %3926 = vst [vmem:[#allocation3 + $0x128] sm:$0xff] %v3862
    %3927 = vst [vmem:[#allocation3 + $0x130] sm:$0xff] %v3863
    %3928 = vst [vmem:[#allocation3 + $0x138] sm:$0xff] %v3864
    %3929 = vst [vmem:[#allocation3 + $0x140] sm:$0xff] %v3865
    %3930 = vst [vmem:[#allocation3 + $0x148] sm:$0xff] %v3866
    %3931 = vst [vmem:[#allocation3 + $0x150] sm:$0xff] %v3867
    %3932 = vst [vmem:[#allocation3 + $0x158] sm:$0xff] %v3868
    %3933 = vst [vmem:[#allocation3 + $0x160] sm:$0xff] %v3869
    %3934 = vst [vmem:[#allocation3 + $0x168] sm:$0xff] %v3870
    %3935 = vst [vmem:[#allocation3 + $0x170] sm:$0xff] %v3871
    %3936 = vst [vmem:[#allocation3 + $0x178] sm:$0xff] %v3872
    %3937 = vst [vmem:[#allocation3 + $0x180] sm:$0xff] %v3873
    %3938 = vst [vmem:[#allocation3 + $0x188] sm:$0xff] %v3874
    %3939 = vst [vmem:[#allocation3 + $0x190] sm:$0xff] %v3875
    %3940 = vst [vmem:[#allocation3 + $0x198] sm:$0xff] %v3876
    %3941 = vst [vmem:[#allocation3 + $0x1a0] sm:$0xff] %v3877
    %3942 = vst [vmem:[#allocation3 + $0x1a8] sm:$0xff] %v3878
    %3943 = vst [vmem:[#allocation3 + $0x1b0] sm:$0xff] %v3879
    %3944 = vst [vmem:[#allocation3 + $0x1b8] sm:$0xff] %v3880
    %3945 = vst [vmem:[#allocation3 + $0x1c0] sm:$0xff] %v3881
    %3946 = vst [vmem:[#allocation3 + $0x1c8] sm:$0xff] %v3882
    %3947 = vst [vmem:[#allocation3 + $0x1d0] sm:$0xff] %v3883
    %3948 = vst [vmem:[#allocation3 + $0x1d8] sm:$0xff] %v3884
    %3949 = vst [vmem:[#allocation3 + $0x1e0] sm:$0xff] %v3885
    %3950 = vst [vmem:[#allocation3 + $0x1e8] sm:$0xff] %v3886
    %3951 = vst [vmem:[#allocation3 + $0x1f0] sm:$0xff] %v3887
    %3952 = vst [vmem:[#allocation3 + $0x1f8] sm:$0xff] %v3888
    // Predicated region
    $region38: #{tpu_custom_call.1} parent=1 // pred_check
      %p3953 = pneg %p63
    $region39: #{tpu_custom_call.1} parent=1 // pred_check_branch
      %3955 = sbr.rel (%p3953) target = $region41
    $region40: #{tpu_custom_call.1} parent=1 // pred_region
      %v3956 = vld [vmem:[#allocation3] sm:$0xff]
      %v3957 = vld [vmem:[#allocation3 + $0x8] sm:$0xff]
      %v3958 = vld [vmem:[#allocation3 + $0x10] sm:$0xff]
      %v3959 = vld [vmem:[#allocation3 + $0x18] sm:$0xff]
      %v3960 = vld [vmem:[#allocation3 + $0x20] sm:$0xff]
      %v3961 = vld [vmem:[#allocation3 + $0x28] sm:$0xff]
      %v3962 = vld [vmem:[#allocation3 + $0x30] sm:$0xff]
      %v3963 = vld [vmem:[#allocation3 + $0x38] sm:$0xff]
      %v3964 = vld [vmem:[#allocation3 + $0x40] sm:$0xff]
      %v3965 = vld [vmem:[#allocation3 + $0x48] sm:$0xff]
      %v3966 = vld [vmem:[#allocation3 + $0x50] sm:$0xff]
      %v3967 = vld [vmem:[#allocation3 + $0x58] sm:$0xff]
      %v3968 = vld [vmem:[#allocation3 + $0x60] sm:$0xff]
      %v3969 = vld [vmem:[#allocation3 + $0x68] sm:$0xff]
      %v3970 = vld [vmem:[#allocation3 + $0x70] sm:$0xff]
      %v3971 = vld [vmem:[#allocation3 + $0x78] sm:$0xff]
      %v3972 = vld [vmem:[#allocation3 + $0x80] sm:$0xff]
      %v3973 = vld [vmem:[#allocation3 + $0x88] sm:$0xff]
      %v3974 = vld [vmem:[#allocation3 + $0x90] sm:$0xff]
      %v3975 = vld [vmem:[#allocation3 + $0x98] sm:$0xff]
      %v3976 = vld [vmem:[#allocation3 + $0xa0] sm:$0xff]
      %v3977 = vld [vmem:[#allocation3 + $0xa8] sm:$0xff]
      %v3978 = vld [vmem:[#allocation3 + $0xb0] sm:$0xff]
      %v3979 = vld [vmem:[#allocation3 + $0xb8] sm:$0xff]
      %v3980 = vld [vmem:[#allocation3 + $0xc0] sm:$0xff]
      %v3981 = vld [vmem:[#allocation3 + $0xc8] sm:$0xff]
      %v3982 = vld [vmem:[#allocation3 + $0xd0] sm:$0xff]
      %v3983 = vld [vmem:[#allocation3 + $0xd8] sm:$0xff]
      %v3984 = vld [vmem:[#allocation3 + $0xe0] sm:$0xff]
      %v3985 = vld [vmem:[#allocation3 + $0xe8] sm:$0xff]
      %v3986 = vld [vmem:[#allocation3 + $0xf0] sm:$0xff]
      %v3987 = vld [vmem:[#allocation3 + $0xf8] sm:$0xff]
      %v3988 = vld [vmem:[#allocation3 + $0x100] sm:$0xff]
      %v3989 = vld [vmem:[#allocation3 + $0x108] sm:$0xff]
      %v3990 = vld [vmem:[#allocation3 + $0x110] sm:$0xff]
      %v3991 = vld [vmem:[#allocation3 + $0x118] sm:$0xff]
      %v3992 = vld [vmem:[#allocation3 + $0x120] sm:$0xff]
      %v3993 = vld [vmem:[#allocation3 + $0x128] sm:$0xff]
      %v3994 = vld [vmem:[#allocation3 + $0x130] sm:$0xff]
      %v3995 = vld [vmem:[#allocation3 + $0x138] sm:$0xff]
      %v3996 = vld [vmem:[#allocation3 + $0x140] sm:$0xff]
      %v3997 = vld [vmem:[#allocation3 + $0x148] sm:$0xff]
      %v3998 = vld [vmem:[#allocation3 + $0x150] sm:$0xff]
      %v3999 = vld [vmem:[#allocation3 + $0x158] sm:$0xff]
      %v4000 = vld [vmem:[#allocation3 + $0x160] sm:$0xff]
      %v4001 = vld [vmem:[#allocation3 + $0x168] sm:$0xff]
      %v4002 = vld [vmem:[#allocation3 + $0x170] sm:$0xff]
      %v4003 = vld [vmem:[#allocation3 + $0x178] sm:$0xff]
      %v4004 = vld [vmem:[#allocation3 + $0x180] sm:$0xff]
      %v4005 = vld [vmem:[#allocation3 + $0x188] sm:$0xff]
      %v4006 = vld [vmem:[#allocation3 + $0x190] sm:$0xff]
      %v4007 = vld [vmem:[#allocation3 + $0x198] sm:$0xff]
      %v4008 = vld [vmem:[#allocation3 + $0x1a0] sm:$0xff]
      %v4009 = vld [vmem:[#allocation3 + $0x1a8] sm:$0xff]
      %v4010 = vld [vmem:[#allocation3 + $0x1b0] sm:$0xff]
      %v4011 = vld [vmem:[#allocation3 + $0x1b8] sm:$0xff]
      %v4012 = vld [vmem:[#allocation3 + $0x1c0] sm:$0xff]
      %v4013 = vld [vmem:[#allocation3 + $0x1c8] sm:$0xff]
      %v4014 = vld [vmem:[#allocation3 + $0x1d0] sm:$0xff]
      %v4015 = vld [vmem:[#allocation3 + $0x1d8] sm:$0xff]
      %v4016 = vld [vmem:[#allocation3 + $0x1e0] sm:$0xff]
      %v4017 = vld [vmem:[#allocation3 + $0x1e8] sm:$0xff]
      %v4018 = vld [vmem:[#allocation3 + $0x1f0] sm:$0xff]
      %v4019 = vld [vmem:[#allocation3 + $0x1f8] sm:$0xff]
      %v4020 = vld [vmem:[%s4] sm:$0x1]
      %v4022 = vlaneseq
      %v4023 = vshrl.u32 %v4022, 7
      %v4024 = vsub.s32 0, %v4023
      %v4025 = vrot.slane %v4020, %v4024
      %v4027 = vadd.f32 %v3956, %v4025
      %v4028 = vadd.f32 %v3957, %v4025
      %v4029 = vadd.f32 %v3958, %v4025
      %v4030 = vadd.f32 %v3959, %v4025
      %v4031 = vadd.f32 %v3960, %v4025
      %v4032 = vadd.f32 %v3961, %v4025
      %v4033 = vadd.f32 %v3962, %v4025
      %v4034 = vadd.f32 %v3963, %v4025
      %v4035 = vadd.f32 %v3964, %v4025
      %v4036 = vadd.f32 %v3965, %v4025
      %v4037 = vadd.f32 %v3966, %v4025
      %v4038 = vadd.f32 %v3967, %v4025
      %v4039 = vadd.f32 %v3968, %v4025
      %v4040 = vadd.f32 %v3969, %v4025
      %v4041 = vadd.f32 %v3970, %v4025
      %v4042 = vadd.f32 %v3971, %v4025
      %v4043 = vadd.f32 %v3972, %v4025
      %v4044 = vadd.f32 %v3973, %v4025
      %v4045 = vadd.f32 %v3974, %v4025
      %v4046 = vadd.f32 %v3975, %v4025
      %v4047 = vadd.f32 %v3976, %v4025
      %v4048 = vadd.f32 %v3977, %v4025
      %v4049 = vadd.f32 %v3978, %v4025
      %v4050 = vadd.f32 %v3979, %v4025
      %v4051 = vadd.f32 %v3980, %v4025
      %v4052 = vadd.f32 %v3981, %v4025
      %v4053 = vadd.f32 %v3982, %v4025
      %v4054 = vadd.f32 %v3983, %v4025
      %v4055 = vadd.f32 %v3984, %v4025
      %v4056 = vadd.f32 %v3985, %v4025
      %v4057 = vadd.f32 %v3986, %v4025
      %v4058 = vadd.f32 %v3987, %v4025
      %v4059 = vadd.f32 %v3988, %v4025
      %v4060 = vadd.f32 %v3989, %v4025
      %v4061 = vadd.f32 %v3990, %v4025
      %v4062 = vadd.f32 %v3991, %v4025
      %v4063 = vadd.f32 %v3992, %v4025
      %v4064 = vadd.f32 %v3993, %v4025
      %v4065 = vadd.f32 %v3994, %v4025
      %v4066 = vadd.f32 %v3995, %v4025
      %v4067 = vadd.f32 %v3996, %v4025
      %v4068 = vadd.f32 %v3997, %v4025
      %v4069 = vadd.f32 %v3998, %v4025
      %v4070 = vadd.f32 %v3999, %v4025
      %v4071 = vadd.f32 %v4000, %v4025
      %v4072 = vadd.f32 %v4001, %v4025
      %v4073 = vadd.f32 %v4002, %v4025
      %v4074 = vadd.f32 %v4003, %v4025
      %v4075 = vadd.f32 %v4004, %v4025
      %v4076 = vadd.f32 %v4005, %v4025
      %v4077 = vadd.f32 %v4006, %v4025
      %v4078 = vadd.f32 %v4007, %v4025
      %v4079 = vadd.f32 %v4008, %v4025
      %v4080 = vadd.f32 %v4009, %v4025
      %v4081 = vadd.f32 %v4010, %v4025
      %v4082 = vadd.f32 %v4011, %v4025
      %v4083 = vadd.f32 %v4012, %v4025
      %v4084 = vadd.f32 %v4013, %v4025
      %v4085 = vadd.f32 %v4014, %v4025
      %v4086 = vadd.f32 %v4015, %v4025
      %v4087 = vadd.f32 %v4016, %v4025
      %v4088 = vadd.f32 %v4017, %v4025
      %v4089 = vadd.f32 %v4018, %v4025
      %v4090 = vadd.f32 %v4019, %v4025
      %v4091 = vld [vmem:[#allocation4] sm:$0xff]
      %v4092 = vld [vmem:[#allocation4 + $0x8] sm:$0xff]
      %v4093 = vld [vmem:[#allocation4 + $0x10] sm:$0xff]
      %v4094 = vld [vmem:[#allocation4 + $0x18] sm:$0xff]
      %v4095 = vld [vmem:[#allocation4 + $0x20] sm:$0xff]
      %v4096 = vld [vmem:[#allocation4 + $0x28] sm:$0xff]
      %v4097 = vld [vmem:[#allocation4 + $0x30] sm:$0xff]
      %v4098 = vld [vmem:[#allocation4 + $0x38] sm:$0xff]
      %v4099 = vld [vmem:[#allocation4 + $0x40] sm:$0xff]
      %v4100 = vld [vmem:[#allocation4 + $0x48] sm:$0xff]
      %v4101 = vld [vmem:[#allocation4 + $0x50] sm:$0xff]
      %v4102 = vld [vmem:[#allocation4 + $0x58] sm:$0xff]
      %v4103 = vld [vmem:[#allocation4 + $0x60] sm:$0xff]
      %v4104 = vld [vmem:[#allocation4 + $0x68] sm:$0xff]
      %v4105 = vld [vmem:[#allocation4 + $0x70] sm:$0xff]
      %v4106 = vld [vmem:[#allocation4 + $0x78] sm:$0xff]
      %v4107 = vld [vmem:[#allocation4 + $0x80] sm:$0xff]
      %v4108 = vld [vmem:[#allocation4 + $0x88] sm:$0xff]
      %v4109 = vld [vmem:[#allocation4 + $0x90] sm:$0xff]
      %v4110 = vld [vmem:[#allocation4 + $0x98] sm:$0xff]
      %v4111 = vld [vmem:[#allocation4 + $0xa0] sm:$0xff]
      %v4112 = vld [vmem:[#allocation4 + $0xa8] sm:$0xff]
      %v4113 = vld [vmem:[#allocation4 + $0xb0] sm:$0xff]
      %v4114 = vld [vmem:[#allocation4 + $0xb8] sm:$0xff]
      %v4115 = vld [vmem:[#allocation4 + $0xc0] sm:$0xff]
      %v4116 = vld [vmem:[#allocation4 + $0xc8] sm:$0xff]
      %v4117 = vld [vmem:[#allocation4 + $0xd0] sm:$0xff]
      %v4118 = vld [vmem:[#allocation4 + $0xd8] sm:$0xff]
      %v4119 = vld [vmem:[#allocation4 + $0xe0] sm:$0xff]
      %v4120 = vld [vmem:[#allocation4 + $0xe8] sm:$0xff]
      %v4121 = vld [vmem:[#allocation4 + $0xf0] sm:$0xff]
      %v4122 = vld [vmem:[#allocation4 + $0xf8] sm:$0xff]
      %v4123 = vld [vmem:[#allocation4 + $0x100] sm:$0xff]
      %v4124 = vld [vmem:[#allocation4 + $0x108] sm:$0xff]
      %v4125 = vld [vmem:[#allocation4 + $0x110] sm:$0xff]
      %v4126 = vld [vmem:[#allocation4 + $0x118] sm:$0xff]
      %v4127 = vld [vmem:[#allocation4 + $0x120] sm:$0xff]
      %v4128 = vld [vmem:[#allocation4 + $0x128] sm:$0xff]
      %v4129 = vld [vmem:[#allocation4 + $0x130] sm:$0xff]
      %v4130 = vld [vmem:[#allocation4 + $0x138] sm:$0xff]
      %v4131 = vld [vmem:[#allocation4 + $0x140] sm:$0xff]
      %v4132 = vld [vmem:[#allocation4 + $0x148] sm:$0xff]
      %v4133 = vld [vmem:[#allocation4 + $0x150] sm:$0xff]
      %v4134 = vld [vmem:[#allocation4 + $0x158] sm:$0xff]
      %v4135 = vld [vmem:[#allocation4 + $0x160] sm:$0xff]
      %v4136 = vld [vmem:[#allocation4 + $0x168] sm:$0xff]
      %v4137 = vld [vmem:[#allocation4 + $0x170] sm:$0xff]
      %v4138 = vld [vmem:[#allocation4 + $0x178] sm:$0xff]
      %v4139 = vld [vmem:[#allocation4 + $0x180] sm:$0xff]
      %v4140 = vld [vmem:[#allocation4 + $0x188] sm:$0xff]
      %v4141 = vld [vmem:[#allocation4 + $0x190] sm:$0xff]
      %v4142 = vld [vmem:[#allocation4 + $0x198] sm:$0xff]
      %v4143 = vld [vmem:[#allocation4 + $0x1a0] sm:$0xff]
      %v4144 = vld [vmem:[#allocation4 + $0x1a8] sm:$0xff]
      %v4145 = vld [vmem:[#allocation4 + $0x1b0] sm:$0xff]
      %v4146 = vld [vmem:[#allocation4 + $0x1b8] sm:$0xff]
      %v4147 = vld [vmem:[#allocation4 + $0x1c0] sm:$0xff]
      %v4148 = vld [vmem:[#allocation4 + $0x1c8] sm:$0xff]
      %v4149 = vld [vmem:[#allocation4 + $0x1d0] sm:$0xff]
      %v4150 = vld [vmem:[#allocation4 + $0x1d8] sm:$0xff]
      %v4151 = vld [vmem:[#allocation4 + $0x1e0] sm:$0xff]
      %v4152 = vld [vmem:[#allocation4 + $0x1e8] sm:$0xff]
      %v4153 = vld [vmem:[#allocation4 + $0x1f0] sm:$0xff]
      %v4154 = vld [vmem:[#allocation4 + $0x1f8] sm:$0xff]
      %v4155 = vadd.f32 %v4027, %v4091
      %v4156 = vadd.f32 %v4028, %v4092
      %v4157 = vadd.f32 %v4029, %v4093
      %v4158 = vadd.f32 %v4030, %v4094
      %v4159 = vadd.f32 %v4031, %v4095
      %v4160 = vadd.f32 %v4032, %v4096
      %v4161 = vadd.f32 %v4033, %v4097
      %v4162 = vadd.f32 %v4034, %v4098
      %v4163 = vadd.f32 %v4035, %v4099
      %v4164 = vadd.f32 %v4036, %v4100
      %v4165 = vadd.f32 %v4037, %v4101
      %v4166 = vadd.f32 %v4038, %v4102
      %v4167 = vadd.f32 %v4039, %v4103
      %v4168 = vadd.f32 %v4040, %v4104
      %v4169 = vadd.f32 %v4041, %v4105
      %v4170 = vadd.f32 %v4042, %v4106
      %v4171 = vadd.f32 %v4043, %v4107
      %v4172 = vadd.f32 %v4044, %v4108
      %v4173 = vadd.f32 %v4045, %v4109
      %v4174 = vadd.f32 %v4046, %v4110
      %v4175 = vadd.f32 %v4047, %v4111
      %v4176 = vadd.f32 %v4048, %v4112
      %v4177 = vadd.f32 %v4049, %v4113
      %v4178 = vadd.f32 %v4050, %v4114
      %v4179 = vadd.f32 %v4051, %v4115
      %v4180 = vadd.f32 %v4052, %v4116
      %v4181 = vadd.f32 %v4053, %v4117
      %v4182 = vadd.f32 %v4054, %v4118
      %v4183 = vadd.f32 %v4055, %v4119
      %v4184 = vadd.f32 %v4056, %v4120
      %v4185 = vadd.f32 %v4057, %v4121
      %v4186 = vadd.f32 %v4058, %v4122
      %v4187 = vadd.f32 %v4059, %v4123
      %v4188 = vadd.f32 %v4060, %v4124
      %v4189 = vadd.f32 %v4061, %v4125
      %v4190 = vadd.f32 %v4062, %v4126
      %v4191 = vadd.f32 %v4063, %v4127
      %v4192 = vadd.f32 %v4064, %v4128
      %v4193 = vadd.f32 %v4065, %v4129
      %v4194 = vadd.f32 %v4066, %v4130
      %v4195 = vadd.f32 %v4067, %v4131
      %v4196 = vadd.f32 %v4068, %v4132
      %v4197 = vadd.f32 %v4069, %v4133
      %v4198 = vadd.f32 %v4070, %v4134
      %v4199 = vadd.f32 %v4071, %v4135
      %v4200 = vadd.f32 %v4072, %v4136
      %v4201 = vadd.f32 %v4073, %v4137
      %v4202 = vadd.f32 %v4074, %v4138
      %v4203 = vadd.f32 %v4075, %v4139
      %v4204 = vadd.f32 %v4076, %v4140
      %v4205 = vadd.f32 %v4077, %v4141
      %v4206 = vadd.f32 %v4078, %v4142
      %v4207 = vadd.f32 %v4079, %v4143
      %v4208 = vadd.f32 %v4080, %v4144
      %v4209 = vadd.f32 %v4081, %v4145
      %v4210 = vadd.f32 %v4082, %v4146
      %v4211 = vadd.f32 %v4083, %v4147
      %v4212 = vadd.f32 %v4084, %v4148
      %v4213 = vadd.f32 %v4085, %v4149
      %v4214 = vadd.f32 %v4086, %v4150
      %v4215 = vadd.f32 %v4087, %v4151
      %v4216 = vadd.f32 %v4088, %v4152
      %v4217 = vadd.f32 %v4089, %v4153
      %v4218 = vadd.f32 %v4090, %v4154
      %4219 = vst [vmem:[#allocation10] sm:$0xff] %v4155
      %4220 = vst [vmem:[#allocation10 + $0x8] sm:$0xff] %v4156
      %4221 = vst [vmem:[#allocation10 + $0x10] sm:$0xff] %v4157
      %4222 = vst [vmem:[#allocation10 + $0x18] sm:$0xff] %v4158
      %4223 = vst [vmem:[#allocation10 + $0x20] sm:$0xff] %v4159
      %4224 = vst [vmem:[#allocation10 + $0x28] sm:$0xff] %v4160
      %4225 = vst [vmem:[#allocation10 + $0x30] sm:$0xff] %v4161
      %4226 = vst [vmem:[#allocation10 + $0x38] sm:$0xff] %v4162
      %4227 = vst [vmem:[#allocation10 + $0x40] sm:$0xff] %v4163
      %4228 = vst [vmem:[#allocation10 + $0x48] sm:$0xff] %v4164
      %4229 = vst [vmem:[#allocation10 + $0x50] sm:$0xff] %v4165
      %4230 = vst [vmem:[#allocation10 + $0x58] sm:$0xff] %v4166
      %4231 = vst [vmem:[#allocation10 + $0x60] sm:$0xff] %v4167
      %4232 = vst [vmem:[#allocation10 + $0x68] sm:$0xff] %v4168
      %4233 = vst [vmem:[#allocation10 + $0x70] sm:$0xff] %v4169
      %4234 = vst [vmem:[#allocation10 + $0x78] sm:$0xff] %v4170
      %4235 = vst [vmem:[#allocation10 + $0x80] sm:$0xff] %v4171
      %4236 = vst [vmem:[#allocation10 + $0x88] sm:$0xff] %v4172
      %4237 = vst [vmem:[#allocation10 + $0x90] sm:$0xff] %v4173
      %4238 = vst [vmem:[#allocation10 + $0x98] sm:$0xff] %v4174
      %4239 = vst [vmem:[#allocation10 + $0xa0] sm:$0xff] %v4175
      %4240 = vst [vmem:[#allocation10 + $0xa8] sm:$0xff] %v4176
      %4241 = vst [vmem:[#allocation10 + $0xb0] sm:$0xff] %v4177
      %4242 = vst [vmem:[#allocation10 + $0xb8] sm:$0xff] %v4178
      %4243 = vst [vmem:[#allocation10 + $0xc0] sm:$0xff] %v4179
      %4244 = vst [vmem:[#allocation10 + $0xc8] sm:$0xff] %v4180
      %4245 = vst [vmem:[#allocation10 + $0xd0] sm:$0xff] %v4181
      %4246 = vst [vmem:[#allocation10 + $0xd8] sm:$0xff] %v4182
      %4247 = vst [vmem:[#allocation10 + $0xe0] sm:$0xff] %v4183
      %4248 = vst [vmem:[#allocation10 + $0xe8] sm:$0xff] %v4184
      %4249 = vst [vmem:[#allocation10 + $0xf0] sm:$0xff] %v4185
      %4250 = vst [vmem:[#allocation10 + $0xf8] sm:$0xff] %v4186
      %4251 = vst [vmem:[#allocation10 + $0x100] sm:$0xff] %v4187
      %4252 = vst [vmem:[#allocation10 + $0x108] sm:$0xff] %v4188
      %4253 = vst [vmem:[#allocation10 + $0x110] sm:$0xff] %v4189
      %4254 = vst [vmem:[#allocation10 + $0x118] sm:$0xff] %v4190
      %4255 = vst [vmem:[#allocation10 + $0x120] sm:$0xff] %v4191
      %4256 = vst [vmem:[#allocation10 + $0x128] sm:$0xff] %v4192
      %4257 = vst [vmem:[#allocation10 + $0x130] sm:$0xff] %v4193
      %4258 = vst [vmem:[#allocation10 + $0x138] sm:$0xff] %v4194
      %4259 = vst [vmem:[#allocation10 + $0x140] sm:$0xff] %v4195
      %4260 = vst [vmem:[#allocation10 + $0x148] sm:$0xff] %v4196
      %4261 = vst [vmem:[#allocation10 + $0x150] sm:$0xff] %v4197
      %4262 = vst [vmem:[#allocation10 + $0x158] sm:$0xff] %v4198
      %4263 = vst [vmem:[#allocation10 + $0x160] sm:$0xff] %v4199
      %4264 = vst [vmem:[#allocation10 + $0x168] sm:$0xff] %v4200
      %4265 = vst [vmem:[#allocation10 + $0x170] sm:$0xff] %v4201
      %4266 = vst [vmem:[#allocation10 + $0x178] sm:$0xff] %v4202
      %4267 = vst [vmem:[#allocation10 + $0x180] sm:$0xff] %v4203
      %4268 = vst [vmem:[#allocation10 + $0x188] sm:$0xff] %v4204
      %4269 = vst [vmem:[#allocation10 + $0x190] sm:$0xff] %v4205
      %4270 = vst [vmem:[#allocation10 + $0x198] sm:$0xff] %v4206
      %4271 = vst [vmem:[#allocation10 + $0x1a0] sm:$0xff] %v4207
      %4272 = vst [vmem:[#allocation10 + $0x1a8] sm:$0xff] %v4208
      %4273 = vst [vmem:[#allocation10 + $0x1b0] sm:$0xff] %v4209
      %4274 = vst [vmem:[#allocation10 + $0x1b8] sm:$0xff] %v4210
      %4275 = vst [vmem:[#allocation10 + $0x1c0] sm:$0xff] %v4211
      %4276 = vst [vmem:[#allocation10 + $0x1c8] sm:$0xff] %v4212
      %4277 = vst [vmem:[#allocation10 + $0x1d0] sm:$0xff] %v4213
      %4278 = vst [vmem:[#allocation10 + $0x1d8] sm:$0xff] %v4214
      %4279 = vst [vmem:[#allocation10 + $0x1e0] sm:$0xff] %v4215
      %4280 = vst [vmem:[#allocation10 + $0x1e8] sm:$0xff] %v4216
      %4281 = vst [vmem:[#allocation10 + $0x1f0] sm:$0xff] %v4217
      %4282 = vst [vmem:[#allocation10 + $0x1f8] sm:$0xff] %v4218
    $region41: #{tpu_custom_call.1} parent=1 // pred_fallthru
      _
    // Predicated region
    $region42: #{tpu_custom_call.1} parent=1 // pred_check
      _
    $region43: #{tpu_custom_call.1} parent=1 // pred_check_branch
      %4284 = sbr.rel (0) target = $region45
    $region44: #{tpu_custom_call.1} parent=1 // pred_region
      %s4286 = ssub.s32 8192, 8192
      %4287 = vsyncadd [#allocation6], %s4286
      %s4288 = sshll.u32 [#allocation10], 4
      %s4289 = int_to_ptr.vmem [resolvable:$true] %s4288
      %4294 = dma.vmem_to_hbm [thread:$0]  %s4289, 8192, %s5, [#allocation6], 128, 128, 8
    $region45: #{tpu_custom_call.1} parent=1 // pred_fallthru
      _
    // Predicated region
    $region46: #{tpu_custom_call.1} parent=1 // pred_check
      _
    $region47: #{tpu_custom_call.1} parent=1 // pred_check_branch
      %4296 = sbr.rel (0) target = $region49
    $region48: #{tpu_custom_call.1} parent=1 // pred_region
      %4297 = dma.done [#allocation6], 8192
    $region49: #{tpu_custom_call.1} parent=1 // pred_fallthru
      _
    %4298 = vsyncpa [#allocation5], 1
    %4299 = vsyncpa [#allocation8], 1
    %4300 = vsyncpa [#allocation6], 1

</llo_original>
